<compile_context>
chip_gen: v7x
topology: tpu7x:2x2x1
jax: 0.10.0
libtpu: 0.0.40
codegen_flags: <defaults>
</compile_context>

<pallas_src>
import jax
import jax.numpy as jnp
from jax.experimental import pallas as pl
from jax.experimental.pallas import tpu as pltpu

_BRANCHES = ("ar", "ai", "sr", "si")   # aud_real, aud_imag, sei_real, sei_imag


# ----------------------------- in-kernel helpers -----------------------------

def _dot(x, w_bf16):
    # bf16 x bf16 -> f32 accumulation: the MXU fast path on v5e/v6e/v7x.
    return jnp.dot(x.astype(jnp.bfloat16), w_bf16,
                   preferred_element_type=jnp.float32)


def _batchnorm(x, gamma, beta, eps=1e-5):
    # nn.BatchNorm1d in training mode: batch mean, biased batch variance,
    # folded into a single scale/shift per element (short VPU chain).
    mu = jnp.mean(x, axis=0, keepdims=True)
    var = jnp.mean(jnp.square(x - mu), axis=0, keepdims=True)
    scale = gamma * jax.lax.rsqrt(var + eps)
    shift = beta - mu * scale
    return x * scale + shift


def _make_kernel(weight_idx, blob_layout, n_weights, *, label_len, nhid):
    def kernel(*refs):
        x_ref, y_ref, eps_ref, blob_ref = refs[:4]
        w_refs = refs[4:4 + n_weights]
        recon_ref = refs[4 + n_weights]
        ml_ref = refs[5 + n_weights]

        def Wr(name):                       # bf16 weight ref (VMEM-resident)
            return w_refs[weight_idx[name]]

        def S(name):                        # [1, n] f32 slice of the packed blob
            off, size = blob_layout[name]
            return blob_ref[:, off:off + size]

        relu = lambda v: jnp.maximum(v, 0.0)
        sigmoid = jax.nn.sigmoid

        y = y_ref[...]                      # [B, label_len]
        eps = eps_ref[...]                  # [B, nhid]

        # ---- label embedding: Linear(label_len, ncond) ----
        w64 = Wr("wide64_w")                # rows [:label_len]=emb, [label_len:]=enc
        y_emb = _dot(y, w64[:label_len]) + S("emb_b")                # [B, ncond]

        # ---- 4 encoder branches:
        #      Linear(L,256) -> ReLU -> Linear(256,128) -> BN -> ReLU ----
        h = None
        for c, p in enumerate(_BRANCHES):
            xc = x_ref[c]                                            # [B, L]
            t = relu(_dot(xc, Wr("br_l0_w")[c]) + S(p + "_l0_b"))
            t = _dot(t, Wr("br_l1_w")[c]) + S(p + "_l1_b")
            t = relu(_batchnorm(t, S(p + "_bn1_g"), S(p + "_bn1_b")))
            h = t if h is None else h + t
        h = h * 0.25                        # stack-on-new-axis + mean over 4 branches

        # ---- shared encode: Linear(128,64) -> BN -> ReLU ----
        h = relu(_batchnorm(_dot(h, w64[label_len:]) + S("enc_b"),
                            S("enc_bn_g"), S("enc_bn_b")))           # [B, 64]

        # ---- fused calc_mean / calc_logvar heads on cat([h, y_emb]) ----
        # lanes [0:64] = mean path, lanes [64:128] = logvar path; BatchNorm is
        # per-column, so fusing along the lane axis is exact.
        wh = Wr("head_l0_w")                # rows [:64]=h part, [64:]=y_emb part
        t = _dot(h, wh[:64]) + _dot(y_emb, wh[64:]) + S("head_l0_b")  # [B, 128]
        t = sigmoid(_batchnorm(t, S("head_bn0_g"), S("head_bn0_b")))
        ml = _dot(t, Wr("head_l1_w")[...]) + S("head_l1_b")           # [B, 2*nhid]
        mean = ml[:, :nhid]
        logvar = ml[:, nhid:]

        # ---- reparameterization, exactly as model_1d.py: sigma = 0.5*exp(logvar)
        z = mean + eps * (0.5 * jnp.exp(logvar))                      # [B, nhid]

        # ---- decoder MLP 1 on cat([z, y_emb]):
        #      3 x (Linear -> BN -> Sigmoid), (nhid+ncond)->128->256->512 ----
        wd0 = Wr("dec1_l0_w")               # rows [:nhid]=z part, [nhid:]=y part
        d = _dot(z, wd0[:nhid]) + _dot(y_emb, wd0[nhid:]) + S("dec1_l0_b")
        d = sigmoid(_batchnorm(d, S("dec1_bn0_g"), S("dec1_bn0_b")))
        d = _dot(d, Wr("dec1_l1_w")[...]) + S("dec1_l1_b")
        d = sigmoid(_batchnorm(d, S("dec1_bn1_g"), S("dec1_bn1_b")))
        wt = Wr("dec_tail_w")               # rows [:256]=dec1_l2, [256:]=dec2_l0
        d = _dot(d, wt[:256]) + S("dec1_l2_b")
        d = sigmoid(_batchnorm(d, S("dec1_bn2_g"), S("dec1_bn2_b")))

        # ---- decoder MLP 2: Linear(512,512)->BN->Sigmoid -> Linear(512,4L) ----
        d = _dot(d, wt[256:]) + S("dec2_l0_b")
        d = sigmoid(_batchnorm(d, S("dec2_bn0_g"), S("dec2_bn0_b")))
        d = _dot(d, Wr("dec2_l1_w")[...]) + S("dec2_l1_b")

        recon_ref[...] = relu(d)            # trailing nn.ReLU of the decoder
        ml_ref[...] = ml                    # mean || logvar, split in wrapper

    return kernel


# -------------------------- parameter initialization --------------------------

def _init_raw_params(key, signal_len, label_len, nhid, ncond):
    """Raw float32 parameters, same shapes/init ranges as the PyTorch module.
    Linear weights stored transposed as [in, out] for direct x @ W."""
    raw = {}
    counter = [0]

    def linear_p(name, fan_in, fan_out):
        counter[0] += 1
        kw = jax.random.fold_in(key, 2 * counter[0])
        kb = jax.random.fold_in(key, 2 * counter[0] + 1)
        bound = 1.0 / (fan_in ** 0.5)       # PyTorch nn.Linear default init
        raw[name + "_w"] = jax.random.uniform(kw, (fan_in, fan_out),
                                              jnp.float32, -bound, bound)
        raw[name + "_b"] = jax.random.uniform(kb, (fan_out,),
                                              jnp.float32, -bound, bound)

    def bn_p(name, dim):
        raw[name + "_g"] = jnp.ones((dim,), jnp.float32)    # fresh BatchNorm1d
        raw[name + "_b"] = jnp.zeros((dim,), jnp.float32)

    linear_p("emb", label_len, ncond)                       # label_embedding
    for p in _BRANCHES:                                     # 4 encoder branches
        linear_p(p + "_l0", signal_len, 256)
        linear_p(p + "_l1", 256, 128)
        bn_p(p + "_bn1", 128)
    linear_p("enc", 128, 64)                                # shared encode
    bn_p("enc_bn", 64)
    for p in ("mean", "lv"):                                # calc_mean / calc_logvar
        linear_p(p + "_l0", 64 + ncond, 64)
        bn_p(p + "_bn0", 64)
        linear_p(p + "_l1", 64, nhid)
    dec1_dims = [nhid + ncond, 128, 256, 512]               # decoder MLP 1
    for i in range(3):
        linear_p(f"dec1_l{i}", dec1_dims[i], dec1_dims[i + 1])
        bn_p(f"dec1_bn{i}", dec1_dims[i + 1])
    linear_p("dec2_l0", 512, 512)                           # decoder MLP 2
    bn_p("dec2_bn0", 512)
    linear_p("dec2_l1", 512, 4 * signal_len)
    return raw


def _pack_params(raw, *, nhid, ncond):
    """Pack raw params:
       * big weights -> bf16, consolidated into 9 arrays (heads fused,
         64-lane and 512-lane weights row-concatenated),
       * tiny bias/BN vectors -> one lane-dense [1, TOTAL] f32 blob."""
    # Fused mean/logvar head: concat l0 along out-lanes, block-diagonal l1.
    head_l0_w = jnp.concatenate([raw["mean_l0_w"], raw["lv_l0_w"]], axis=1)
    head_l1_w = jnp.zeros((128, 2 * nhid), jnp.float32)
    head_l1_w = head_l1_w.at[:64, :nhid].set(raw["mean_l1_w"])
    head_l1_w = head_l1_w.at[64:, nhid:].set(raw["lv_l1_w"])

    weights = [
        # label embedding + shared encode share 64 output lanes -> one slab
        ("wide64_w", jnp.concatenate([raw["emb_w"], raw["enc_w"]], axis=0)),
        ("br_l0_w", jnp.stack([raw[p + "_l0_w"] for p in _BRANCHES])),  # (4,L,256)
        ("br_l1_w", jnp.stack([raw[p + "_l1_w"] for p in _BRANCHES])),  # (4,256,128)
        ("head_l0_w", head_l0_w),                                       # (64+ncond,128)
        ("head_l1_w", head_l1_w),                                       # (128,2*nhid)
        ("dec1_l0_w", raw["dec1_l0_w"]),                                # (nhid+ncond,128)
        ("dec1_l1_w", raw["dec1_l1_w"]),                                # (128,256)
        # dec1_l2 and dec2_l0 share 512 output lanes -> one slab
        ("dec_tail_w", jnp.concatenate([raw["dec1_l2_w"], raw["dec2_l0_w"]],
                                       axis=0)),                        # (768,512)
        ("dec2_l1_w", raw["dec2_l1_w"]),                                # (512,4L)
    ]
    weight_idx = {n: i for i, (n, _) in enumerate(weights)}
    weight_arrays = [a.astype(jnp.bfloat16) for _, a in weights]
    # TODO(synk): int8 (per-out-channel scaled) storage of the large weights
    # would further halve HBM weight traffic on v5e; not applied (v7x MXU has
    # no int path and the grid already amortizes the weight fetch).

    entries = [("emb_b", raw["emb_b"])]
    for p in _BRANCHES:
        entries += [(p + "_l0_b", raw[p + "_l0_b"]),
                    (p + "_l1_b", raw[p + "_l1_b"]),
                    (p + "_bn1_g", raw[p + "_bn1_g"]),
                    (p + "_bn1_b", raw[p + "_bn1_b"])]
    entries += [("enc_b", raw["enc_b"]),
                ("enc_bn_g", raw["enc_bn_g"]),
                ("enc_bn_b", raw["enc_bn_b"]),
                ("head_l0_b", jnp.concatenate([raw["mean_l0_b"], raw["lv_l0_b"]])),
                ("head_bn0_g", jnp.concatenate([raw["mean_bn0_g"], raw["lv_bn0_g"]])),
                ("head_bn0_b", jnp.concatenate([raw["mean_bn0_b"], raw["lv_bn0_b"]])),
                ("head_l1_b", jnp.concatenate([raw["mean_l1_b"], raw["lv_l1_b"]]))]
    for i in range(3):
        entries += [(f"dec1_l{i}_b", raw[f"dec1_l{i}_b"]),
                    (f"dec1_bn{i}_g", raw[f"dec1_bn{i}_g"]),
                    (f"dec1_bn{i}_b", raw[f"dec1_bn{i}_b"])]
    entries += [("dec2_l0_b", raw["dec2_l0_b"]),
                ("dec2_bn0_g", raw["dec2_bn0_g"]),
                ("dec2_bn0_b", raw["dec2_bn0_b"]),
                ("dec2_l1_b", raw["dec2_l1_b"])]

    blob_layout = {}
    chunks = []
    off = 0
    for name, arr in entries:               # every entry at a 128-aligned lane
        n = arr.shape[0]
        pad = (-n) % 128
        blob_layout[name] = (off, n)
        chunks.append(jnp.pad(arr.astype(jnp.float32), (0, pad)))
        off += n + pad
    blob = jnp.concatenate(chunks).reshape(1, off)

    return weight_idx, weight_arrays, blob, blob_layout


# --------------------------------- wrapper ------------------------------------

def make_cvae_forward(weight_idx, blob_layout, n_weights, *, signal_len,
                      label_len, nhid, ncond, batch_block=8):
    """Returns a jitted forward(x, y, eps, blob, *weights).

    x: [B_total, 4, signal_len], B_total a multiple of batch_block.
    Each batch_block group is one independent BatchNorm group (identical to a
    torch forward call at batch=batch_block); the grid iterates over groups so
    weights are fetched from HBM once and reused for every group."""
    L = signal_len
    kernel = _make_kernel(weight_idx, blob_layout, n_weights,
                          label_len=label_len, nhid=nhid)

    def _const_map(ndim):
        return lambda g, _n=ndim: (0,) * _n   # weight stays VMEM-resident

    def forward(x, y, eps, blob, *weight_arrays):
        B_total = x.shape[0]
        assert B_total % batch_block == 0
        num_groups = B_total // batch_block

        # [B,4,L] -> [4,B,L]; fused into the jitted program (no extra dispatch),
        # and per-branch reads inside the kernel become contiguous slices.
        x_t = jnp.transpose(x, (1, 0, 2))

        in_specs = [
            pl.BlockSpec((4, batch_block, L), lambda g: (0, g, 0)),
            pl.BlockSpec((batch_block, label_len), lambda g: (g, 0)),
            pl.BlockSpec((batch_block, nhid), lambda g: (g, 0)),
            pl.BlockSpec(blob.shape, _const_map(2)),
        ] + [pl.BlockSpec(w.shape, _const_map(w.ndim)) for w in weight_arrays]

        out_specs = (
            pl.BlockSpec((batch_block, 4 * L), lambda g: (g, 0)),
            pl.BlockSpec((batch_block, 2 * nhid), lambda g: (g, 0)),
        )

        recon_flat, ml = pl.pallas_call(
            kernel,
            grid=(num_groups,),
            out_shape=(
                jax.ShapeDtypeStruct((B_total, 4 * L), jnp.float32),
                jax.ShapeDtypeStruct((B_total, 2 * nhid), jnp.float32),
            ),
            in_specs=in_specs,
            out_specs=out_specs,
            compiler_params=pltpu.CompilerParams(
                dimension_semantics=("parallel",),   # v7x: groups split over TCs
                vmem_limit_bytes=16 * 1024 * 1024),
        )(x_t, y, eps, blob, *weight_arrays)

        recon = recon_flat.reshape(B_total, 4, L)   # .view(-1, 4, signal_len)
        return recon, ml[:, :nhid], ml[:, nhid:]

    return jax.jit(forward)


# ---------------------------------- main --------------------------------------

if __name__ == "__main__":
    signal_len = 128
    label_len = 8
    nhid = 16
    ncond = 64
    batch_block = 8      # BatchNorm group size (== torch forward at batch=8)
    num_groups = 4       # independent groups amortizing one weight fetch
    B_total = batch_block * num_groups

    key = jax.random.PRNGKey(0)
    kx, ky, keps, kp = jax.random.split(key, 4)
    x = jax.random.normal(kx, (B_total, 4, signal_len), jnp.float32)
    y = jax.random.normal(ky, (B_total, label_len), jnp.float32)
    eps = jax.random.normal(keps, (B_total, nhid), jnp.float32)

    raw = _init_raw_params(kp, signal_len, label_len, nhid, ncond)
    weight_idx, weight_arrays, blob, blob_layout = _pack_params(
        raw, nhid=nhid, ncond=ncond)

    forward = make_cvae_forward(weight_idx, blob_layout, len(weight_arrays),
                                signal_len=signal_len, label_len=label_len,
                                nhid=nhid, ncond=ncond, batch_block=batch_block)

    recon, mean, logvar = forward(x, y, eps, blob, *weight_arrays)
    jax.block_until_ready((recon, mean, logvar))

    assert recon.shape == (B_total, 4, signal_len)
    assert mean.shape == (B_total, nhid)
    assert logvar.shape == (B_total, nhid)
    assert bool(jnp.all(jnp.isfinite(recon)))
    assert bool(jnp.all(jnp.isfinite(mean)))
    assert bool(jnp.all(jnp.isfinite(logvar)))
    assert bool(jnp.all(recon >= 0.0))   # final ReLU

    print("KERNEL_OK")
</pallas_src>

<mosaic_0001>
module attributes {stable_mosaic.version = 11 : i64} {
  func.func @kernel(%arg0: i32, %arg1: memref<4x8x128xf32, #tpu.memory_space<vmem>>, %arg2: memref<8x8xf32, #tpu.memory_space<vmem>>, %arg3: memref<8x16xf32, #tpu.memory_space<vmem>>, %arg4: memref<1x8320xf32, #tpu.memory_space<vmem>>, %arg5: memref<136x64xbf16, #tpu.memory_space<vmem>>, %arg6: memref<4x128x256xbf16, #tpu.memory_space<vmem>>, %arg7: memref<4x256x128xbf16, #tpu.memory_space<vmem>>, %arg8: memref<128x128xbf16, #tpu.memory_space<vmem>>, %arg9: memref<128x32xbf16, #tpu.memory_space<vmem>>, %arg10: memref<80x128xbf16, #tpu.memory_space<vmem>>, %arg11: memref<128x256xbf16, #tpu.memory_space<vmem>>, %arg12: memref<768x512xbf16, #tpu.memory_space<vmem>>, %arg13: memref<512x512xbf16, #tpu.memory_space<vmem>>, %arg14: memref<8x512xf32, #tpu.memory_space<vmem>>, %arg15: memref<8x32xf32, #tpu.memory_space<vmem>>) attributes {dimension_semantics = [#tpu.dimension_semantics<parallel>], iteration_bounds = array<i64: 4>, scalar_prefetch = 0 : i64, scratch_operands = 0 : i64, tpu.core_type = #tpu.core_type<tc>, window_params = [{transform_indices = @transform_0, window_bounds = array<i64: 4, 8, 128>}, {transform_indices = @transform_1, window_bounds = array<i64: 8, 8>}, {transform_indices = @transform_2, window_bounds = array<i64: 8, 16>}, {pipeline_mode = #tpu.pipeline_mode<synchronous>, transform_indices = @transform_3, window_bounds = array<i64: 1, 8320>}, {pipeline_mode = #tpu.pipeline_mode<synchronous>, transform_indices = @transform_4, window_bounds = array<i64: 136, 64>}, {pipeline_mode = #tpu.pipeline_mode<synchronous>, transform_indices = @transform_5, window_bounds = array<i64: 4, 128, 256>}, {pipeline_mode = #tpu.pipeline_mode<synchronous>, transform_indices = @transform_6, window_bounds = array<i64: 4, 256, 128>}, {pipeline_mode = #tpu.pipeline_mode<synchronous>, transform_indices = @transform_7, window_bounds = array<i64: 128, 128>}, {pipeline_mode = #tpu.pipeline_mode<synchronous>, transform_indices = @transform_8, window_bounds = array<i64: 128, 32>}, {pipeline_mode = #tpu.pipeline_mode<synchronous>, transform_indices = @transform_9, window_bounds = array<i64: 80, 128>}, {pipeline_mode = #tpu.pipeline_mode<synchronous>, transform_indices = @transform_10, window_bounds = array<i64: 128, 256>}, {pipeline_mode = #tpu.pipeline_mode<synchronous>, transform_indices = @transform_11, window_bounds = array<i64: 768, 512>}, {pipeline_mode = #tpu.pipeline_mode<synchronous>, transform_indices = @transform_12, window_bounds = array<i64: 512, 512>}, {transform_indices = @transform_13, window_bounds = array<i64: 8, 512>}, {transform_indices = @transform_14, window_bounds = array<i64: 8, 32>}]} {
    %c0 = arith.constant 0 : index
    %c0_0 = arith.constant 0 : index
    %0 = vector.load %arg2[%c0, %c0_0] : memref<8x8xf32, #tpu.memory_space<vmem>>, vector<8x8xf32>
    %c0_1 = arith.constant 0 : index
    %c0_2 = arith.constant 0 : index
    %1 = vector.load %arg3[%c0_1, %c0_2] : memref<8x16xf32, #tpu.memory_space<vmem>>, vector<8x16xf32>
    %c0_3 = arith.constant 0 : index
    %c0_4 = arith.constant 0 : index
    %2 = vector.load %arg5[%c0_3, %c0_4] : memref<136x64xbf16, #tpu.memory_space<vmem>>, vector<8x64xbf16>
    %3 = arith.truncf %0 : vector<8x8xf32> to vector<8x8xbf16>
    %cst = arith.constant dense<0.000000e+00> : vector<8x64xf32>
    %4 = tpu.matmul %3, %2, %cst {dimension_numbers = #tpu.dot_dimension_numbers<[1], [0], [0], [1], [0, 0, 1, 1], [], []>} : vector<8x8xbf16>, vector<8x64xbf16>, vector<8x64xf32> -> vector<8x64xf32>
    %c0_5 = arith.constant 0 : index
    %c0_6 = arith.constant 0 : index
    %5 = vector.load %arg4[%c0_5, %c0_6] : memref<1x8320xf32, #tpu.memory_space<vmem>>, vector<1x64xf32>
    %6 = vector.broadcast %5 : vector<1x64xf32> to vector<8x64xf32>
    %7 = arith.addf %4, %6 : vector<8x64xf32>
    %c0_7 = arith.constant 0 : index
    %c0_8 = arith.constant 0 : index
    %c0_9 = arith.constant 0 : index
    %8 = vector.load %arg1[%c0_7, %c0_8, %c0_9] : memref<4x8x128xf32, #tpu.memory_space<vmem>>, vector<1x8x128xf32>
    %9 = vector.shape_cast %8 : vector<1x8x128xf32> to vector<8x128xf32>
    %c0_10 = arith.constant 0 : index
    %c0_11 = arith.constant 0 : index
    %c0_12 = arith.constant 0 : index
    %10 = vector.load %arg6[%c0_10, %c0_11, %c0_12] : memref<4x128x256xbf16, #tpu.memory_space<vmem>>, vector<1x128x256xbf16>
    %11 = vector.shape_cast %10 : vector<1x128x256xbf16> to vector<128x256xbf16>
    %12 = arith.truncf %9 : vector<8x128xf32> to vector<8x128xbf16>
    %cst_13 = arith.constant dense<0.000000e+00> : vector<8x256xf32>
    %13 = tpu.matmul %12, %11, %cst_13 {dimension_numbers = #tpu.dot_dimension_numbers<[1], [0], [0], [1], [0, 0, 1, 1], [], []>} : vector<8x128xbf16>, vector<128x256xbf16>, vector<8x256xf32> -> vector<8x256xf32>
    %c0_14 = arith.constant 0 : index
    %c128 = arith.constant 128 : index
    %14 = vector.load %arg4[%c0_14, %c128] : memref<1x8320xf32, #tpu.memory_space<vmem>>, vector<1x256xf32>
    %15 = vector.broadcast %14 : vector<1x256xf32> to vector<8x256xf32>
    %16 = arith.addf %13, %15 : vector<8x256xf32>
    %cst_15 = arith.constant 0.000000e+00 : f32
    %17 = vector.broadcast %cst_15 : f32 to vector<8x256xf32>
    %18 = arith.maximumf %16, %17 : vector<8x256xf32>
    %c0_16 = arith.constant 0 : index
    %c0_17 = arith.constant 0 : index
    %c0_18 = arith.constant 0 : index
    %19 = vector.load %arg7[%c0_16, %c0_17, %c0_18] : memref<4x256x128xbf16, #tpu.memory_space<vmem>>, vector<1x256x128xbf16>
    %20 = vector.shape_cast %19 : vector<1x256x128xbf16> to vector<256x128xbf16>
    %21 = arith.truncf %18 : vector<8x256xf32> to vector<8x256xbf16>
    %cst_19 = arith.constant dense<0.000000e+00> : vector<8x128xf32>
    %22 = tpu.matmul %21, %20, %cst_19 {dimension_numbers = #tpu.dot_dimension_numbers<[1], [0], [0], [1], [0, 0, 1, 1], [], []>} : vector<8x256xbf16>, vector<256x128xbf16>, vector<8x128xf32> -> vector<8x128xf32>
    %c0_20 = arith.constant 0 : index
    %c384 = arith.constant 384 : index
    %23 = vector.load %arg4[%c0_20, %c384] : memref<1x8320xf32, #tpu.memory_space<vmem>>, vector<1x128xf32>
    %24 = vector.broadcast %23 : vector<1x128xf32> to vector<8x128xf32>
    %25 = arith.addf %22, %24 : vector<8x128xf32>
    %c0_21 = arith.constant 0 : index
    %c512 = arith.constant 512 : index
    %26 = vector.load %arg4[%c0_21, %c512] : memref<1x8320xf32, #tpu.memory_space<vmem>>, vector<1x128xf32>
    %c0_22 = arith.constant 0 : index
    %c640 = arith.constant 640 : index
    %27 = vector.load %arg4[%c0_22, %c640] : memref<1x8320xf32, #tpu.memory_space<vmem>>, vector<1x128xf32>
    %cst_23 = arith.constant dense<0.000000e+00> : vector<128xf32>
    %28 = vector.multi_reduction <add>, %25, %cst_23 [0] : vector<8x128xf32> to vector<128xf32>
    %29 = vector.shape_cast %28 : vector<128xf32> to vector<1x128xf32>
    %cst_24 = arith.constant 8.000000e+00 : f32
    %30 = vector.broadcast %cst_24 : f32 to vector<1x128xf32>
    %31 = arith.divf %29, %30 : vector<1x128xf32>
    %32 = vector.broadcast %31 : vector<1x128xf32> to vector<8x128xf32>
    %33 = arith.subf %25, %32 : vector<8x128xf32>
    %34 = arith.mulf %33, %33 : vector<8x128xf32>
    %cst_25 = arith.constant dense<0.000000e+00> : vector<128xf32>
    %35 = vector.multi_reduction <add>, %34, %cst_25 [0] : vector<8x128xf32> to vector<128xf32>
    %36 = vector.shape_cast %35 : vector<128xf32> to vector<1x128xf32>
    %cst_26 = arith.constant 8.000000e+00 : f32
    %37 = vector.broadcast %cst_26 : f32 to vector<1x128xf32>
    %38 = arith.divf %36, %37 : vector<1x128xf32>
    %cst_27 = arith.constant 9.99999974E-6 : f32
    %39 = vector.broadcast %cst_27 : f32 to vector<1x128xf32>
    %40 = arith.addf %38, %39 : vector<1x128xf32>
    %41 = math.rsqrt %40 : vector<1x128xf32>
    %42 = arith.mulf %26, %41 : vector<1x128xf32>
    %43 = arith.mulf %31, %42 : vector<1x128xf32>
    %44 = arith.subf %27, %43 : vector<1x128xf32>
    %45 = vector.broadcast %42 : vector<1x128xf32> to vector<8x128xf32>
    %46 = arith.mulf %25, %45 : vector<8x128xf32>
    %47 = vector.broadcast %44 : vector<1x128xf32> to vector<8x128xf32>
    %48 = arith.addf %46, %47 : vector<8x128xf32>
    %cst_28 = arith.constant 0.000000e+00 : f32
    %49 = vector.broadcast %cst_28 : f32 to vector<8x128xf32>
    %50 = arith.maximumf %48, %49 : vector<8x128xf32>
    %c1 = arith.constant 1 : index
    %c0_29 = arith.constant 0 : index
    %c0_30 = arith.constant 0 : index
    %51 = vector.load %arg1[%c1, %c0_29, %c0_30] : memref<4x8x128xf32, #tpu.memory_space<vmem>>, vector<1x8x128xf32>
    %52 = vector.shape_cast %51 : vector<1x8x128xf32> to vector<8x128xf32>
    %c1_31 = arith.constant 1 : index
    %c0_32 = arith.constant 0 : index
    %c0_33 = arith.constant 0 : index
    %53 = vector.load %arg6[%c1_31, %c0_32, %c0_33] : memref<4x128x256xbf16, #tpu.memory_space<vmem>>, vector<1x128x256xbf16>
    %54 = vector.shape_cast %53 : vector<1x128x256xbf16> to vector<128x256xbf16>
    %55 = arith.truncf %52 : vector<8x128xf32> to vector<8x128xbf16>
    %cst_34 = arith.constant dense<0.000000e+00> : vector<8x256xf32>
    %56 = tpu.matmul %55, %54, %cst_34 {dimension_numbers = #tpu.dot_dimension_numbers<[1], [0], [0], [1], [0, 0, 1, 1], [], []>} : vector<8x128xbf16>, vector<128x256xbf16>, vector<8x256xf32> -> vector<8x256xf32>
    %c0_35 = arith.constant 0 : index
    %c768 = arith.constant 768 : index
    %57 = vector.load %arg4[%c0_35, %c768] : memref<1x8320xf32, #tpu.memory_space<vmem>>, vector<1x256xf32>
    %58 = vector.broadcast %57 : vector<1x256xf32> to vector<8x256xf32>
    %59 = arith.addf %56, %58 : vector<8x256xf32>
    %cst_36 = arith.constant 0.000000e+00 : f32
    %60 = vector.broadcast %cst_36 : f32 to vector<8x256xf32>
    %61 = arith.maximumf %59, %60 : vector<8x256xf32>
    %c1_37 = arith.constant 1 : index
    %c0_38 = arith.constant 0 : index
    %c0_39 = arith.constant 0 : index
    %62 = vector.load %arg7[%c1_37, %c0_38, %c0_39] : memref<4x256x128xbf16, #tpu.memory_space<vmem>>, vector<1x256x128xbf16>
    %63 = vector.shape_cast %62 : vector<1x256x128xbf16> to vector<256x128xbf16>
    %64 = arith.truncf %61 : vector<8x256xf32> to vector<8x256xbf16>
    %cst_40 = arith.constant dense<0.000000e+00> : vector<8x128xf32>
    %65 = tpu.matmul %64, %63, %cst_40 {dimension_numbers = #tpu.dot_dimension_numbers<[1], [0], [0], [1], [0, 0, 1, 1], [], []>} : vector<8x256xbf16>, vector<256x128xbf16>, vector<8x128xf32> -> vector<8x128xf32>
    %c0_41 = arith.constant 0 : index
    %c1024 = arith.constant 1024 : index
    %66 = vector.load %arg4[%c0_41, %c1024] : memref<1x8320xf32, #tpu.memory_space<vmem>>, vector<1x128xf32>
    %67 = vector.broadcast %66 : vector<1x128xf32> to vector<8x128xf32>
    %68 = arith.addf %65, %67 : vector<8x128xf32>
    %c0_42 = arith.constant 0 : index
    %c1152 = arith.constant 1152 : index
    %69 = vector.load %arg4[%c0_42, %c1152] : memref<1x8320xf32, #tpu.memory_space<vmem>>, vector<1x128xf32>
    %c0_43 = arith.constant 0 : index
    %c1280 = arith.constant 1280 : index
    %70 = vector.load %arg4[%c0_43, %c1280] : memref<1x8320xf32, #tpu.memory_space<vmem>>, vector<1x128xf32>
    %cst_44 = arith.constant dense<0.000000e+00> : vector<128xf32>
    %71 = vector.multi_reduction <add>, %68, %cst_44 [0] : vector<8x128xf32> to vector<128xf32>
    %72 = vector.shape_cast %71 : vector<128xf32> to vector<1x128xf32>
    %cst_45 = arith.constant 8.000000e+00 : f32
    %73 = vector.broadcast %cst_45 : f32 to vector<1x128xf32>
    %74 = arith.divf %72, %73 : vector<1x128xf32>
    %75 = vector.broadcast %74 : vector<1x128xf32> to vector<8x128xf32>
    %76 = arith.subf %68, %75 : vector<8x128xf32>
    %77 = arith.mulf %76, %76 : vector<8x128xf32>
    %cst_46 = arith.constant dense<0.000000e+00> : vector<128xf32>
    %78 = vector.multi_reduction <add>, %77, %cst_46 [0] : vector<8x128xf32> to vector<128xf32>
    %79 = vector.shape_cast %78 : vector<128xf32> to vector<1x128xf32>
    %cst_47 = arith.constant 8.000000e+00 : f32
    %80 = vector.broadcast %cst_47 : f32 to vector<1x128xf32>
    %81 = arith.divf %79, %80 : vector<1x128xf32>
    %cst_48 = arith.constant 9.99999974E-6 : f32
    %82 = vector.broadcast %cst_48 : f32 to vector<1x128xf32>
    %83 = arith.addf %81, %82 : vector<1x128xf32>
    %84 = math.rsqrt %83 : vector<1x128xf32>
    %85 = arith.mulf %69, %84 : vector<1x128xf32>
    %86 = arith.mulf %74, %85 : vector<1x128xf32>
    %87 = arith.subf %70, %86 : vector<1x128xf32>
    %88 = vector.broadcast %85 : vector<1x128xf32> to vector<8x128xf32>
    %89 = arith.mulf %68, %88 : vector<8x128xf32>
    %90 = vector.broadcast %87 : vector<1x128xf32> to vector<8x128xf32>
    %91 = arith.addf %89, %90 : vector<8x128xf32>
    %cst_49 = arith.constant 0.000000e+00 : f32
    %92 = vector.broadcast %cst_49 : f32 to vector<8x128xf32>
    %93 = arith.maximumf %91, %92 : vector<8x128xf32>
    %94 = arith.addf %50, %93 : vector<8x128xf32>
    %c2 = arith.constant 2 : index
    %c0_50 = arith.constant 0 : index
    %c0_51 = arith.constant 0 : index
    %95 = vector.load %arg1[%c2, %c0_50, %c0_51] : memref<4x8x128xf32, #tpu.memory_space<vmem>>, vector<1x8x128xf32>
    %96 = vector.shape_cast %95 : vector<1x8x128xf32> to vector<8x128xf32>
    %c2_52 = arith.constant 2 : index
    %c0_53 = arith.constant 0 : index
    %c0_54 = arith.constant 0 : index
    %97 = vector.load %arg6[%c2_52, %c0_53, %c0_54] : memref<4x128x256xbf16, #tpu.memory_space<vmem>>, vector<1x128x256xbf16>
    %98 = vector.shape_cast %97 : vector<1x128x256xbf16> to vector<128x256xbf16>
    %99 = arith.truncf %96 : vector<8x128xf32> to vector<8x128xbf16>
    %cst_55 = arith.constant dense<0.000000e+00> : vector<8x256xf32>
    %100 = tpu.matmul %99, %98, %cst_55 {dimension_numbers = #tpu.dot_dimension_numbers<[1], [0], [0], [1], [0, 0, 1, 1], [], []>} : vector<8x128xbf16>, vector<128x256xbf16>, vector<8x256xf32> -> vector<8x256xf32>
    %c0_56 = arith.constant 0 : index
    %c1408 = arith.constant 1408 : index
    %101 = vector.load %arg4[%c0_56, %c1408] : memref<1x8320xf32, #tpu.memory_space<vmem>>, vector<1x256xf32>
    %102 = vector.broadcast %101 : vector<1x256xf32> to vector<8x256xf32>
    %103 = arith.addf %100, %102 : vector<8x256xf32>
    %cst_57 = arith.constant 0.000000e+00 : f32
    %104 = vector.broadcast %cst_57 : f32 to vector<8x256xf32>
    %105 = arith.maximumf %103, %104 : vector<8x256xf32>
    %c2_58 = arith.constant 2 : index
    %c0_59 = arith.constant 0 : index
    %c0_60 = arith.constant 0 : index
    %106 = vector.load %arg7[%c2_58, %c0_59, %c0_60] : memref<4x256x128xbf16, #tpu.memory_space<vmem>>, vector<1x256x128xbf16>
    %107 = vector.shape_cast %106 : vector<1x256x128xbf16> to vector<256x128xbf16>
    %108 = arith.truncf %105 : vector<8x256xf32> to vector<8x256xbf16>
    %cst_61 = arith.constant dense<0.000000e+00> : vector<8x128xf32>
    %109 = tpu.matmul %108, %107, %cst_61 {dimension_numbers = #tpu.dot_dimension_numbers<[1], [0], [0], [1], [0, 0, 1, 1], [], []>} : vector<8x256xbf16>, vector<256x128xbf16>, vector<8x128xf32> -> vector<8x128xf32>
    %c0_62 = arith.constant 0 : index
    %c1664 = arith.constant 1664 : index
    %110 = vector.load %arg4[%c0_62, %c1664] : memref<1x8320xf32, #tpu.memory_space<vmem>>, vector<1x128xf32>
    %111 = vector.broadcast %110 : vector<1x128xf32> to vector<8x128xf32>
    %112 = arith.addf %109, %111 : vector<8x128xf32>
    %c0_63 = arith.constant 0 : index
    %c1792 = arith.constant 1792 : index
    %113 = vector.load %arg4[%c0_63, %c1792] : memref<1x8320xf32, #tpu.memory_space<vmem>>, vector<1x128xf32>
    %c0_64 = arith.constant 0 : index
    %c1920 = arith.constant 1920 : index
    %114 = vector.load %arg4[%c0_64, %c1920] : memref<1x8320xf32, #tpu.memory_space<vmem>>, vector<1x128xf32>
    %cst_65 = arith.constant dense<0.000000e+00> : vector<128xf32>
    %115 = vector.multi_reduction <add>, %112, %cst_65 [0] : vector<8x128xf32> to vector<128xf32>
    %116 = vector.shape_cast %115 : vector<128xf32> to vector<1x128xf32>
    %cst_66 = arith.constant 8.000000e+00 : f32
    %117 = vector.broadcast %cst_66 : f32 to vector<1x128xf32>
    %118 = arith.divf %116, %117 : vector<1x128xf32>
    %119 = vector.broadcast %118 : vector<1x128xf32> to vector<8x128xf32>
    %120 = arith.subf %112, %119 : vector<8x128xf32>
    %121 = arith.mulf %120, %120 : vector<8x128xf32>
    %cst_67 = arith.constant dense<0.000000e+00> : vector<128xf32>
    %122 = vector.multi_reduction <add>, %121, %cst_67 [0] : vector<8x128xf32> to vector<128xf32>
    %123 = vector.shape_cast %122 : vector<128xf32> to vector<1x128xf32>
    %cst_68 = arith.constant 8.000000e+00 : f32
    %124 = vector.broadcast %cst_68 : f32 to vector<1x128xf32>
    %125 = arith.divf %123, %124 : vector<1x128xf32>
    %cst_69 = arith.constant 9.99999974E-6 : f32
    %126 = vector.broadcast %cst_69 : f32 to vector<1x128xf32>
    %127 = arith.addf %125, %126 : vector<1x128xf32>
    %128 = math.rsqrt %127 : vector<1x128xf32>
    %129 = arith.mulf %113, %128 : vector<1x128xf32>
    %130 = arith.mulf %118, %129 : vector<1x128xf32>
    %131 = arith.subf %114, %130 : vector<1x128xf32>
    %132 = vector.broadcast %129 : vector<1x128xf32> to vector<8x128xf32>
    %133 = arith.mulf %112, %132 : vector<8x128xf32>
    %134 = vector.broadcast %131 : vector<1x128xf32> to vector<8x128xf32>
    %135 = arith.addf %133, %134 : vector<8x128xf32>
    %cst_70 = arith.constant 0.000000e+00 : f32
    %136 = vector.broadcast %cst_70 : f32 to vector<8x128xf32>
    %137 = arith.maximumf %135, %136 : vector<8x128xf32>
    %138 = arith.addf %94, %137 : vector<8x128xf32>
    %c3 = arith.constant 3 : index
    %c0_71 = arith.constant 0 : index
    %c0_72 = arith.constant 0 : index
    %139 = vector.load %arg1[%c3, %c0_71, %c0_72] : memref<4x8x128xf32, #tpu.memory_space<vmem>>, vector<1x8x128xf32>
    %140 = vector.shape_cast %139 : vector<1x8x128xf32> to vector<8x128xf32>
    %c3_73 = arith.constant 3 : index
    %c0_74 = arith.constant 0 : index
    %c0_75 = arith.constant 0 : index
    %141 = vector.load %arg6[%c3_73, %c0_74, %c0_75] : memref<4x128x256xbf16, #tpu.memory_space<vmem>>, vector<1x128x256xbf16>
    %142 = vector.shape_cast %141 : vector<1x128x256xbf16> to vector<128x256xbf16>
    %143 = arith.truncf %140 : vector<8x128xf32> to vector<8x128xbf16>
    %cst_76 = arith.constant dense<0.000000e+00> : vector<8x256xf32>
    %144 = tpu.matmul %143, %142, %cst_76 {dimension_numbers = #tpu.dot_dimension_numbers<[1], [0], [0], [1], [0, 0, 1, 1], [], []>} : vector<8x128xbf16>, vector<128x256xbf16>, vector<8x256xf32> -> vector<8x256xf32>
    %c0_77 = arith.constant 0 : index
    %c2048 = arith.constant 2048 : index
    %145 = vector.load %arg4[%c0_77, %c2048] : memref<1x8320xf32, #tpu.memory_space<vmem>>, vector<1x256xf32>
    %146 = vector.broadcast %145 : vector<1x256xf32> to vector<8x256xf32>
    %147 = arith.addf %144, %146 : vector<8x256xf32>
    %cst_78 = arith.constant 0.000000e+00 : f32
    %148 = vector.broadcast %cst_78 : f32 to vector<8x256xf32>
    %149 = arith.maximumf %147, %148 : vector<8x256xf32>
    %c3_79 = arith.constant 3 : index
    %c0_80 = arith.constant 0 : index
    %c0_81 = arith.constant 0 : index
    %150 = vector.load %arg7[%c3_79, %c0_80, %c0_81] : memref<4x256x128xbf16, #tpu.memory_space<vmem>>, vector<1x256x128xbf16>
    %151 = vector.shape_cast %150 : vector<1x256x128xbf16> to vector<256x128xbf16>
    %152 = arith.truncf %149 : vector<8x256xf32> to vector<8x256xbf16>
    %cst_82 = arith.constant dense<0.000000e+00> : vector<8x128xf32>
    %153 = tpu.matmul %152, %151, %cst_82 {dimension_numbers = #tpu.dot_dimension_numbers<[1], [0], [0], [1], [0, 0, 1, 1], [], []>} : vector<8x256xbf16>, vector<256x128xbf16>, vector<8x128xf32> -> vector<8x128xf32>
    %c0_83 = arith.constant 0 : index
    %c2304 = arith.constant 2304 : index
    %154 = vector.load %arg4[%c0_83, %c2304] : memref<1x8320xf32, #tpu.memory_space<vmem>>, vector<1x128xf32>
    %155 = vector.broadcast %154 : vector<1x128xf32> to vector<8x128xf32>
    %156 = arith.addf %153, %155 : vector<8x128xf32>
    %c0_84 = arith.constant 0 : index
    %c2432 = arith.constant 2432 : index
    %157 = vector.load %arg4[%c0_84, %c2432] : memref<1x8320xf32, #tpu.memory_space<vmem>>, vector<1x128xf32>
    %c0_85 = arith.constant 0 : index
    %c2560 = arith.constant 2560 : index
    %158 = vector.load %arg4[%c0_85, %c2560] : memref<1x8320xf32, #tpu.memory_space<vmem>>, vector<1x128xf32>
    %cst_86 = arith.constant dense<0.000000e+00> : vector<128xf32>
    %159 = vector.multi_reduction <add>, %156, %cst_86 [0] : vector<8x128xf32> to vector<128xf32>
    %160 = vector.shape_cast %159 : vector<128xf32> to vector<1x128xf32>
    %cst_87 = arith.constant 8.000000e+00 : f32
    %161 = vector.broadcast %cst_87 : f32 to vector<1x128xf32>
    %162 = arith.divf %160, %161 : vector<1x128xf32>
    %163 = vector.broadcast %162 : vector<1x128xf32> to vector<8x128xf32>
    %164 = arith.subf %156, %163 : vector<8x128xf32>
    %165 = arith.mulf %164, %164 : vector<8x128xf32>
    %cst_88 = arith.constant dense<0.000000e+00> : vector<128xf32>
    %166 = vector.multi_reduction <add>, %165, %cst_88 [0] : vector<8x128xf32> to vector<128xf32>
    %167 = vector.shape_cast %166 : vector<128xf32> to vector<1x128xf32>
    %cst_89 = arith.constant 8.000000e+00 : f32
    %168 = vector.broadcast %cst_89 : f32 to vector<1x128xf32>
    %169 = arith.divf %167, %168 : vector<1x128xf32>
    %cst_90 = arith.constant 9.99999974E-6 : f32
    %170 = vector.broadcast %cst_90 : f32 to vector<1x128xf32>
    %171 = arith.addf %169, %170 : vector<1x128xf32>
    %172 = math.rsqrt %171 : vector<1x128xf32>
    %173 = arith.mulf %157, %172 : vector<1x128xf32>
    %174 = arith.mulf %162, %173 : vector<1x128xf32>
    %175 = arith.subf %158, %174 : vector<1x128xf32>
    %176 = vector.broadcast %173 : vector<1x128xf32> to vector<8x128xf32>
    %177 = arith.mulf %156, %176 : vector<8x128xf32>
    %178 = vector.broadcast %175 : vector<1x128xf32> to vector<8x128xf32>
    %179 = arith.addf %177, %178 : vector<8x128xf32>
    %cst_91 = arith.constant 0.000000e+00 : f32
    %180 = vector.broadcast %cst_91 : f32 to vector<8x128xf32>
    %181 = arith.maximumf %179, %180 : vector<8x128xf32>
    %182 = arith.addf %138, %181 : vector<8x128xf32>
    %cst_92 = arith.constant 2.500000e-01 : f32
    %183 = vector.broadcast %cst_92 : f32 to vector<8x128xf32>
    %184 = arith.mulf %182, %183 : vector<8x128xf32>
    %c8 = arith.constant 8 : index
    %c0_93 = arith.constant 0 : index
    %185 = vector.load %arg5[%c8, %c0_93] : memref<136x64xbf16, #tpu.memory_space<vmem>>, vector<128x64xbf16>
    %186 = arith.truncf %184 : vector<8x128xf32> to vector<8x128xbf16>
    %cst_94 = arith.constant dense<0.000000e+00> : vector<8x64xf32>
    %187 = tpu.matmul %186, %185, %cst_94 {dimension_numbers = #tpu.dot_dimension_numbers<[1], [0], [0], [1], [0, 0, 1, 1], [], []>} : vector<8x128xbf16>, vector<128x64xbf16>, vector<8x64xf32> -> vector<8x64xf32>
    %c0_95 = arith.constant 0 : index
    %c2688 = arith.constant 2688 : index
    %188 = vector.load %arg4[%c0_95, %c2688] : memref<1x8320xf32, #tpu.memory_space<vmem>>, vector<1x64xf32>
    %189 = vector.broadcast %188 : vector<1x64xf32> to vector<8x64xf32>
    %190 = arith.addf %187, %189 : vector<8x64xf32>
    %c0_96 = arith.constant 0 : index
    %c2816 = arith.constant 2816 : index
    %191 = vector.load %arg4[%c0_96, %c2816] : memref<1x8320xf32, #tpu.memory_space<vmem>>, vector<1x64xf32>
    %c0_97 = arith.constant 0 : index
    %c2944 = arith.constant 2944 : index
    %192 = vector.load %arg4[%c0_97, %c2944] : memref<1x8320xf32, #tpu.memory_space<vmem>>, vector<1x64xf32>
    %cst_98 = arith.constant dense<0.000000e+00> : vector<64xf32>
    %193 = vector.multi_reduction <add>, %190, %cst_98 [0] : vector<8x64xf32> to vector<64xf32>
    %194 = vector.shape_cast %193 : vector<64xf32> to vector<1x64xf32>
    %cst_99 = arith.constant 8.000000e+00 : f32
    %195 = vector.broadcast %cst_99 : f32 to vector<1x64xf32>
    %196 = arith.divf %194, %195 : vector<1x64xf32>
    %197 = vector.broadcast %196 : vector<1x64xf32> to vector<8x64xf32>
    %198 = arith.subf %190, %197 : vector<8x64xf32>
    %199 = arith.mulf %198, %198 : vector<8x64xf32>
    %cst_100 = arith.constant dense<0.000000e+00> : vector<64xf32>
    %200 = vector.multi_reduction <add>, %199, %cst_100 [0] : vector<8x64xf32> to vector<64xf32>
    %201 = vector.shape_cast %200 : vector<64xf32> to vector<1x64xf32>
    %cst_101 = arith.constant 8.000000e+00 : f32
    %202 = vector.broadcast %cst_101 : f32 to vector<1x64xf32>
    %203 = arith.divf %201, %202 : vector<1x64xf32>
    %cst_102 = arith.constant 9.99999974E-6 : f32
    %204 = vector.broadcast %cst_102 : f32 to vector<1x64xf32>
    %205 = arith.addf %203, %204 : vector<1x64xf32>
    %206 = math.rsqrt %205 : vector<1x64xf32>
    %207 = arith.mulf %191, %206 : vector<1x64xf32>
    %208 = arith.mulf %196, %207 : vector<1x64xf32>
    %209 = arith.subf %192, %208 : vector<1x64xf32>
    %210 = vector.broadcast %207 : vector<1x64xf32> to vector<8x64xf32>
    %211 = arith.mulf %190, %210 : vector<8x64xf32>
    %212 = vector.broadcast %209 : vector<1x64xf32> to vector<8x64xf32>
    %213 = arith.addf %211, %212 : vector<8x64xf32>
    %cst_103 = arith.constant 0.000000e+00 : f32
    %214 = vector.broadcast %cst_103 : f32 to vector<8x64xf32>
    %215 = arith.maximumf %213, %214 : vector<8x64xf32>
    %c0_104 = arith.constant 0 : index
    %c0_105 = arith.constant 0 : index
    %216 = vector.load %arg8[%c0_104, %c0_105] : memref<128x128xbf16, #tpu.memory_space<vmem>>, vector<64x128xbf16>
    %217 = arith.truncf %215 : vector<8x64xf32> to vector<8x64xbf16>
    %cst_106 = arith.constant dense<0.000000e+00> : vector<8x128xf32>
    %218 = tpu.matmul %217, %216, %cst_106 {dimension_numbers = #tpu.dot_dimension_numbers<[1], [0], [0], [1], [0, 0, 1, 1], [], []>} : vector<8x64xbf16>, vector<64x128xbf16>, vector<8x128xf32> -> vector<8x128xf32>
    %c64 = arith.constant 64 : index
    %c0_107 = arith.constant 0 : index
    %219 = vector.load %arg8[%c64, %c0_107] : memref<128x128xbf16, #tpu.memory_space<vmem>>, vector<64x128xbf16>
    %220 = arith.truncf %7 : vector<8x64xf32> to vector<8x64xbf16>
    %cst_108 = arith.constant dense<0.000000e+00> : vector<8x128xf32>
    %221 = tpu.matmul %220, %219, %cst_108 {dimension_numbers = #tpu.dot_dimension_numbers<[1], [0], [0], [1], [0, 0, 1, 1], [], []>} : vector<8x64xbf16>, vector<64x128xbf16>, vector<8x128xf32> -> vector<8x128xf32>
    %222 = arith.addf %218, %221 : vector<8x128xf32>
    %c0_109 = arith.constant 0 : index
    %c3072 = arith.constant 3072 : index
    %223 = vector.load %arg4[%c0_109, %c3072] : memref<1x8320xf32, #tpu.memory_space<vmem>>, vector<1x128xf32>
    %224 = vector.broadcast %223 : vector<1x128xf32> to vector<8x128xf32>
    %225 = arith.addf %222, %224 : vector<8x128xf32>
    %c0_110 = arith.constant 0 : index
    %c3200 = arith.constant 3200 : index
    %226 = vector.load %arg4[%c0_110, %c3200] : memref<1x8320xf32, #tpu.memory_space<vmem>>, vector<1x128xf32>
    %c0_111 = arith.constant 0 : index
    %c3328 = arith.constant 3328 : index
    %227 = vector.load %arg4[%c0_111, %c3328] : memref<1x8320xf32, #tpu.memory_space<vmem>>, vector<1x128xf32>
    %cst_112 = arith.constant dense<0.000000e+00> : vector<128xf32>
    %228 = vector.multi_reduction <add>, %225, %cst_112 [0] : vector<8x128xf32> to vector<128xf32>
    %229 = vector.shape_cast %228 : vector<128xf32> to vector<1x128xf32>
    %cst_113 = arith.constant 8.000000e+00 : f32
    %230 = vector.broadcast %cst_113 : f32 to vector<1x128xf32>
    %231 = arith.divf %229, %230 : vector<1x128xf32>
    %232 = vector.broadcast %231 : vector<1x128xf32> to vector<8x128xf32>
    %233 = arith.subf %225, %232 : vector<8x128xf32>
    %234 = arith.mulf %233, %233 : vector<8x128xf32>
    %cst_114 = arith.constant dense<0.000000e+00> : vector<128xf32>
    %235 = vector.multi_reduction <add>, %234, %cst_114 [0] : vector<8x128xf32> to vector<128xf32>
    %236 = vector.shape_cast %235 : vector<128xf32> to vector<1x128xf32>
    %cst_115 = arith.constant 8.000000e+00 : f32
    %237 = vector.broadcast %cst_115 : f32 to vector<1x128xf32>
    %238 = arith.divf %236, %237 : vector<1x128xf32>
    %cst_116 = arith.constant 9.99999974E-6 : f32
    %239 = vector.broadcast %cst_116 : f32 to vector<1x128xf32>
    %240 = arith.addf %238, %239 : vector<1x128xf32>
    %241 = math.rsqrt %240 : vector<1x128xf32>
    %242 = arith.mulf %226, %241 : vector<1x128xf32>
    %243 = arith.mulf %231, %242 : vector<1x128xf32>
    %244 = arith.subf %227, %243 : vector<1x128xf32>
    %245 = vector.broadcast %242 : vector<1x128xf32> to vector<8x128xf32>
    %246 = arith.mulf %225, %245 : vector<8x128xf32>
    %247 = vector.broadcast %244 : vector<1x128xf32> to vector<8x128xf32>
    %248 = arith.addf %246, %247 : vector<8x128xf32>
    %249 = arith.negf %248 : vector<8x128xf32>
    %250 = math.exp %249 : vector<8x128xf32>
    %cst_117 = arith.constant 1.000000e+00 : f32
    %251 = vector.broadcast %cst_117 : f32 to vector<8x128xf32>
    %252 = arith.addf %251, %250 : vector<8x128xf32>
    %253 = arith.divf %251, %252 : vector<8x128xf32>
    %c0_118 = arith.constant 0 : index
    %c0_119 = arith.constant 0 : index
    %254 = vector.load %arg9[%c0_118, %c0_119] : memref<128x32xbf16, #tpu.memory_space<vmem>>, vector<128x32xbf16>
    %255 = arith.truncf %253 : vector<8x128xf32> to vector<8x128xbf16>
    %cst_120 = arith.constant dense<0.000000e+00> : vector<8x32xf32>
    %256 = tpu.matmul %255, %254, %cst_120 {dimension_numbers = #tpu.dot_dimension_numbers<[1], [0], [0], [1], [0, 0, 1, 1], [], []>} : vector<8x128xbf16>, vector<128x32xbf16>, vector<8x32xf32> -> vector<8x32xf32>
    %c0_121 = arith.constant 0 : index
    %c3456 = arith.constant 3456 : index
    %257 = vector.load %arg4[%c0_121, %c3456] : memref<1x8320xf32, #tpu.memory_space<vmem>>, vector<1x32xf32>
    %258 = vector.broadcast %257 : vector<1x32xf32> to vector<8x32xf32>
    %259 = arith.addf %256, %258 : vector<8x32xf32>
    %260 = vector.extract_strided_slice %259 {offsets = [0, 0], sizes = [8, 16], strides = [1, 1]} : vector<8x32xf32> to vector<8x16xf32>
    %261 = vector.extract_strided_slice %259 {offsets = [0, 16], sizes = [8, 16], strides = [1, 1]} : vector<8x32xf32> to vector<8x16xf32>
    %262 = math.exp %261 : vector<8x16xf32>
    %cst_122 = arith.constant 5.000000e-01 : f32
    %263 = vector.broadcast %cst_122 : f32 to vector<8x16xf32>
    %264 = arith.mulf %263, %262 : vector<8x16xf32>
    %265 = arith.mulf %1, %264 : vector<8x16xf32>
    %266 = arith.addf %260, %265 : vector<8x16xf32>
    %c0_123 = arith.constant 0 : index
    %c0_124 = arith.constant 0 : index
    %267 = vector.load %arg10[%c0_123, %c0_124] : memref<80x128xbf16, #tpu.memory_space<vmem>>, vector<16x128xbf16>
    %268 = arith.truncf %266 : vector<8x16xf32> to vector<8x16xbf16>
    %cst_125 = arith.constant dense<0.000000e+00> : vector<8x128xf32>
    %269 = tpu.matmul %268, %267, %cst_125 {dimension_numbers = #tpu.dot_dimension_numbers<[1], [0], [0], [1], [0, 0, 1, 1], [], []>} : vector<8x16xbf16>, vector<16x128xbf16>, vector<8x128xf32> -> vector<8x128xf32>
    %c16 = arith.constant 16 : index
    %c0_126 = arith.constant 0 : index
    %270 = vector.load %arg10[%c16, %c0_126] : memref<80x128xbf16, #tpu.memory_space<vmem>>, vector<64x128xbf16>
    %271 = arith.truncf %7 : vector<8x64xf32> to vector<8x64xbf16>
    %cst_127 = arith.constant dense<0.000000e+00> : vector<8x128xf32>
    %272 = tpu.matmul %271, %270, %cst_127 {dimension_numbers = #tpu.dot_dimension_numbers<[1], [0], [0], [1], [0, 0, 1, 1], [], []>} : vector<8x64xbf16>, vector<64x128xbf16>, vector<8x128xf32> -> vector<8x128xf32>
    %273 = arith.addf %269, %272 : vector<8x128xf32>
    %c0_128 = arith.constant 0 : index
    %c3584 = arith.constant 3584 : index
    %274 = vector.load %arg4[%c0_128, %c3584] : memref<1x8320xf32, #tpu.memory_space<vmem>>, vector<1x128xf32>
    %275 = vector.broadcast %274 : vector<1x128xf32> to vector<8x128xf32>
    %276 = arith.addf %273, %275 : vector<8x128xf32>
    %c0_129 = arith.constant 0 : index
    %c3712 = arith.constant 3712 : index
    %277 = vector.load %arg4[%c0_129, %c3712] : memref<1x8320xf32, #tpu.memory_space<vmem>>, vector<1x128xf32>
    %c0_130 = arith.constant 0 : index
    %c3840 = arith.constant 3840 : index
    %278 = vector.load %arg4[%c0_130, %c3840] : memref<1x8320xf32, #tpu.memory_space<vmem>>, vector<1x128xf32>
    %cst_131 = arith.constant dense<0.000000e+00> : vector<128xf32>
    %279 = vector.multi_reduction <add>, %276, %cst_131 [0] : vector<8x128xf32> to vector<128xf32>
    %280 = vector.shape_cast %279 : vector<128xf32> to vector<1x128xf32>
    %cst_132 = arith.constant 8.000000e+00 : f32
    %281 = vector.broadcast %cst_132 : f32 to vector<1x128xf32>
    %282 = arith.divf %280, %281 : vector<1x128xf32>
    %283 = vector.broadcast %282 : vector<1x128xf32> to vector<8x128xf32>
    %284 = arith.subf %276, %283 : vector<8x128xf32>
    %285 = arith.mulf %284, %284 : vector<8x128xf32>
    %cst_133 = arith.constant dense<0.000000e+00> : vector<128xf32>
    %286 = vector.multi_reduction <add>, %285, %cst_133 [0] : vector<8x128xf32> to vector<128xf32>
    %287 = vector.shape_cast %286 : vector<128xf32> to vector<1x128xf32>
    %cst_134 = arith.constant 8.000000e+00 : f32
    %288 = vector.broadcast %cst_134 : f32 to vector<1x128xf32>
    %289 = arith.divf %287, %288 : vector<1x128xf32>
    %cst_135 = arith.constant 9.99999974E-6 : f32
    %290 = vector.broadcast %cst_135 : f32 to vector<1x128xf32>
    %291 = arith.addf %289, %290 : vector<1x128xf32>
    %292 = math.rsqrt %291 : vector<1x128xf32>
    %293 = arith.mulf %277, %292 : vector<1x128xf32>
    %294 = arith.mulf %282, %293 : vector<1x128xf32>
    %295 = arith.subf %278, %294 : vector<1x128xf32>
    %296 = vector.broadcast %293 : vector<1x128xf32> to vector<8x128xf32>
    %297 = arith.mulf %276, %296 : vector<8x128xf32>
    %298 = vector.broadcast %295 : vector<1x128xf32> to vector<8x128xf32>
    %299 = arith.addf %297, %298 : vector<8x128xf32>
    %300 = arith.negf %299 : vector<8x128xf32>
    %301 = math.exp %300 : vector<8x128xf32>
    %cst_136 = arith.constant 1.000000e+00 : f32
    %302 = vector.broadcast %cst_136 : f32 to vector<8x128xf32>
    %303 = arith.addf %302, %301 : vector<8x128xf32>
    %304 = arith.divf %302, %303 : vector<8x128xf32>
    %c0_137 = arith.constant 0 : index
    %c0_138 = arith.constant 0 : index
    %305 = vector.load %arg11[%c0_137, %c0_138] : memref<128x256xbf16, #tpu.memory_space<vmem>>, vector<128x256xbf16>
    %306 = arith.truncf %304 : vector<8x128xf32> to vector<8x128xbf16>
    %cst_139 = arith.constant dense<0.000000e+00> : vector<8x256xf32>
    %307 = tpu.matmul %306, %305, %cst_139 {dimension_numbers = #tpu.dot_dimension_numbers<[1], [0], [0], [1], [0, 0, 1, 1], [], []>} : vector<8x128xbf16>, vector<128x256xbf16>, vector<8x256xf32> -> vector<8x256xf32>
    %c0_140 = arith.constant 0 : index
    %c3968 = arith.constant 3968 : index
    %308 = vector.load %arg4[%c0_140, %c3968] : memref<1x8320xf32, #tpu.memory_space<vmem>>, vector<1x256xf32>
    %309 = vector.broadcast %308 : vector<1x256xf32> to vector<8x256xf32>
    %310 = arith.addf %307, %309 : vector<8x256xf32>
    %c0_141 = arith.constant 0 : index
    %c4224 = arith.constant 4224 : index
    %311 = vector.load %arg4[%c0_141, %c4224] : memref<1x8320xf32, #tpu.memory_space<vmem>>, vector<1x256xf32>
    %c0_142 = arith.constant 0 : index
    %c4480 = arith.constant 4480 : index
    %312 = vector.load %arg4[%c0_142, %c4480] : memref<1x8320xf32, #tpu.memory_space<vmem>>, vector<1x256xf32>
    %cst_143 = arith.constant dense<0.000000e+00> : vector<256xf32>
    %313 = vector.multi_reduction <add>, %310, %cst_143 [0] : vector<8x256xf32> to vector<256xf32>
    %314 = vector.shape_cast %313 : vector<256xf32> to vector<1x256xf32>
    %cst_144 = arith.constant 8.000000e+00 : f32
    %315 = vector.broadcast %cst_144 : f32 to vector<1x256xf32>
    %316 = arith.divf %314, %315 : vector<1x256xf32>
    %317 = vector.broadcast %316 : vector<1x256xf32> to vector<8x256xf32>
    %318 = arith.subf %310, %317 : vector<8x256xf32>
    %319 = arith.mulf %318, %318 : vector<8x256xf32>
    %cst_145 = arith.constant dense<0.000000e+00> : vector<256xf32>
    %320 = vector.multi_reduction <add>, %319, %cst_145 [0] : vector<8x256xf32> to vector<256xf32>
    %321 = vector.shape_cast %320 : vector<256xf32> to vector<1x256xf32>
    %cst_146 = arith.constant 8.000000e+00 : f32
    %322 = vector.broadcast %cst_146 : f32 to vector<1x256xf32>
    %323 = arith.divf %321, %322 : vector<1x256xf32>
    %cst_147 = arith.constant 9.99999974E-6 : f32
    %324 = vector.broadcast %cst_147 : f32 to vector<1x256xf32>
    %325 = arith.addf %323, %324 : vector<1x256xf32>
    %326 = math.rsqrt %325 : vector<1x256xf32>
    %327 = arith.mulf %311, %326 : vector<1x256xf32>
    %328 = arith.mulf %316, %327 : vector<1x256xf32>
    %329 = arith.subf %312, %328 : vector<1x256xf32>
    %330 = vector.broadcast %327 : vector<1x256xf32> to vector<8x256xf32>
    %331 = arith.mulf %310, %330 : vector<8x256xf32>
    %332 = vector.broadcast %329 : vector<1x256xf32> to vector<8x256xf32>
    %333 = arith.addf %331, %332 : vector<8x256xf32>
    %334 = arith.negf %333 : vector<8x256xf32>
    %335 = math.exp %334 : vector<8x256xf32>
    %cst_148 = arith.constant 1.000000e+00 : f32
    %336 = vector.broadcast %cst_148 : f32 to vector<8x256xf32>
    %337 = arith.addf %336, %335 : vector<8x256xf32>
    %338 = arith.divf %336, %337 : vector<8x256xf32>
    %c0_149 = arith.constant 0 : index
    %c0_150 = arith.constant 0 : index
    %339 = vector.load %arg12[%c0_149, %c0_150] : memref<768x512xbf16, #tpu.memory_space<vmem>>, vector<256x512xbf16>
    %340 = arith.truncf %338 : vector<8x256xf32> to vector<8x256xbf16>
    %cst_151 = arith.constant dense<0.000000e+00> : vector<8x512xf32>
    %341 = tpu.matmul %340, %339, %cst_151 {dimension_numbers = #tpu.dot_dimension_numbers<[1], [0], [0], [1], [0, 0, 1, 1], [], []>} : vector<8x256xbf16>, vector<256x512xbf16>, vector<8x512xf32> -> vector<8x512xf32>
    %c0_152 = arith.constant 0 : index
    %c4736 = arith.constant 4736 : index
    %342 = vector.load %arg4[%c0_152, %c4736] : memref<1x8320xf32, #tpu.memory_space<vmem>>, vector<1x512xf32>
    %343 = vector.broadcast %342 : vector<1x512xf32> to vector<8x512xf32>
    %344 = arith.addf %341, %343 : vector<8x512xf32>
    %c0_153 = arith.constant 0 : index
    %c5248 = arith.constant 5248 : index
    %345 = vector.load %arg4[%c0_153, %c5248] : memref<1x8320xf32, #tpu.memory_space<vmem>>, vector<1x512xf32>
    %c0_154 = arith.constant 0 : index
    %c5760 = arith.constant 5760 : index
    %346 = vector.load %arg4[%c0_154, %c5760] : memref<1x8320xf32, #tpu.memory_space<vmem>>, vector<1x512xf32>
    %cst_155 = arith.constant dense<0.000000e+00> : vector<512xf32>
    %347 = vector.multi_reduction <add>, %344, %cst_155 [0] : vector<8x512xf32> to vector<512xf32>
    %348 = vector.shape_cast %347 : vector<512xf32> to vector<1x512xf32>
    %cst_156 = arith.constant 8.000000e+00 : f32
    %349 = vector.broadcast %cst_156 : f32 to vector<1x512xf32>
    %350 = arith.divf %348, %349 : vector<1x512xf32>
    %351 = vector.broadcast %350 : vector<1x512xf32> to vector<8x512xf32>
    %352 = arith.subf %344, %351 : vector<8x512xf32>
    %353 = arith.mulf %352, %352 : vector<8x512xf32>
    %cst_157 = arith.constant dense<0.000000e+00> : vector<512xf32>
    %354 = vector.multi_reduction <add>, %353, %cst_157 [0] : vector<8x512xf32> to vector<512xf32>
    %355 = vector.shape_cast %354 : vector<512xf32> to vector<1x512xf32>
    %cst_158 = arith.constant 8.000000e+00 : f32
    %356 = vector.broadcast %cst_158 : f32 to vector<1x512xf32>
    %357 = arith.divf %355, %356 : vector<1x512xf32>
    %cst_159 = arith.constant 9.99999974E-6 : f32
    %358 = vector.broadcast %cst_159 : f32 to vector<1x512xf32>
    %359 = arith.addf %357, %358 : vector<1x512xf32>
    %360 = math.rsqrt %359 : vector<1x512xf32>
    %361 = arith.mulf %345, %360 : vector<1x512xf32>
    %362 = arith.mulf %350, %361 : vector<1x512xf32>
    %363 = arith.subf %346, %362 : vector<1x512xf32>
    %364 = vector.broadcast %361 : vector<1x512xf32> to vector<8x512xf32>
    %365 = arith.mulf %344, %364 : vector<8x512xf32>
    %366 = vector.broadcast %363 : vector<1x512xf32> to vector<8x512xf32>
    %367 = arith.addf %365, %366 : vector<8x512xf32>
    %368 = arith.negf %367 : vector<8x512xf32>
    %369 = math.exp %368 : vector<8x512xf32>
    %cst_160 = arith.constant 1.000000e+00 : f32
    %370 = vector.broadcast %cst_160 : f32 to vector<8x512xf32>
    %371 = arith.addf %370, %369 : vector<8x512xf32>
    %372 = arith.divf %370, %371 : vector<8x512xf32>
    %c256 = arith.constant 256 : index
    %c0_161 = arith.constant 0 : index
    %373 = vector.load %arg12[%c256, %c0_161] : memref<768x512xbf16, #tpu.memory_space<vmem>>, vector<512x512xbf16>
    %374 = arith.truncf %372 : vector<8x512xf32> to vector<8x512xbf16>
    %cst_162 = arith.constant dense<0.000000e+00> : vector<8x512xf32>
    %375 = tpu.matmul %374, %373, %cst_162 {dimension_numbers = #tpu.dot_dimension_numbers<[1], [0], [0], [1], [0, 0, 1, 1], [], []>} : vector<8x512xbf16>, vector<512x512xbf16>, vector<8x512xf32> -> vector<8x512xf32>
    %c0_163 = arith.constant 0 : index
    %c6272 = arith.constant 6272 : index
    %376 = vector.load %arg4[%c0_163, %c6272] : memref<1x8320xf32, #tpu.memory_space<vmem>>, vector<1x512xf32>
    %377 = vector.broadcast %376 : vector<1x512xf32> to vector<8x512xf32>
    %378 = arith.addf %375, %377 : vector<8x512xf32>
    %c0_164 = arith.constant 0 : index
    %c6784 = arith.constant 6784 : index
    %379 = vector.load %arg4[%c0_164, %c6784] : memref<1x8320xf32, #tpu.memory_space<vmem>>, vector<1x512xf32>
    %c0_165 = arith.constant 0 : index
    %c7296 = arith.constant 7296 : index
    %380 = vector.load %arg4[%c0_165, %c7296] : memref<1x8320xf32, #tpu.memory_space<vmem>>, vector<1x512xf32>
    %cst_166 = arith.constant dense<0.000000e+00> : vector<512xf32>
    %381 = vector.multi_reduction <add>, %378, %cst_166 [0] : vector<8x512xf32> to vector<512xf32>
    %382 = vector.shape_cast %381 : vector<512xf32> to vector<1x512xf32>
    %cst_167 = arith.constant 8.000000e+00 : f32
    %383 = vector.broadcast %cst_167 : f32 to vector<1x512xf32>
    %384 = arith.divf %382, %383 : vector<1x512xf32>
    %385 = vector.broadcast %384 : vector<1x512xf32> to vector<8x512xf32>
    %386 = arith.subf %378, %385 : vector<8x512xf32>
    %387 = arith.mulf %386, %386 : vector<8x512xf32>
    %cst_168 = arith.constant dense<0.000000e+00> : vector<512xf32>
    %388 = vector.multi_reduction <add>, %387, %cst_168 [0] : vector<8x512xf32> to vector<512xf32>
    %389 = vector.shape_cast %388 : vector<512xf32> to vector<1x512xf32>
    %cst_169 = arith.constant 8.000000e+00 : f32
    %390 = vector.broadcast %cst_169 : f32 to vector<1x512xf32>
    %391 = arith.divf %389, %390 : vector<1x512xf32>
    %cst_170 = arith.constant 9.99999974E-6 : f32
    %392 = vector.broadcast %cst_170 : f32 to vector<1x512xf32>
    %393 = arith.addf %391, %392 : vector<1x512xf32>
    %394 = math.rsqrt %393 : vector<1x512xf32>
    %395 = arith.mulf %379, %394 : vector<1x512xf32>
    %396 = arith.mulf %384, %395 : vector<1x512xf32>
    %397 = arith.subf %380, %396 : vector<1x512xf32>
    %398 = vector.broadcast %395 : vector<1x512xf32> to vector<8x512xf32>
    %399 = arith.mulf %378, %398 : vector<8x512xf32>
    %400 = vector.broadcast %397 : vector<1x512xf32> to vector<8x512xf32>
    %401 = arith.addf %399, %400 : vector<8x512xf32>
    %402 = arith.negf %401 : vector<8x512xf32>
    %403 = math.exp %402 : vector<8x512xf32>
    %cst_171 = arith.constant 1.000000e+00 : f32
    %404 = vector.broadcast %cst_171 : f32 to vector<8x512xf32>
    %405 = arith.addf %404, %403 : vector<8x512xf32>
    %406 = arith.divf %404, %405 : vector<8x512xf32>
    %c0_172 = arith.constant 0 : index
    %c0_173 = arith.constant 0 : index
    %407 = vector.load %arg13[%c0_172, %c0_173] : memref<512x512xbf16, #tpu.memory_space<vmem>>, vector<512x512xbf16>
    %408 = arith.truncf %406 : vector<8x512xf32> to vector<8x512xbf16>
    %cst_174 = arith.constant dense<0.000000e+00> : vector<8x512xf32>
    %409 = tpu.matmul %408, %407, %cst_174 {dimension_numbers = #tpu.dot_dimension_numbers<[1], [0], [0], [1], [0, 0, 1, 1], [], []>} : vector<8x512xbf16>, vector<512x512xbf16>, vector<8x512xf32> -> vector<8x512xf32>
    %c0_175 = arith.constant 0 : index
    %c7808 = arith.constant 7808 : index
    %410 = vector.load %arg4[%c0_175, %c7808] : memref<1x8320xf32, #tpu.memory_space<vmem>>, vector<1x512xf32>
    %411 = vector.broadcast %410 : vector<1x512xf32> to vector<8x512xf32>
    %412 = arith.addf %409, %411 : vector<8x512xf32>
    %cst_176 = arith.constant 0.000000e+00 : f32
    %413 = vector.broadcast %cst_176 : f32 to vector<8x512xf32>
    %414 = arith.maximumf %412, %413 : vector<8x512xf32>
    %c0_177 = arith.constant 0 : index
    %c0_178 = arith.constant 0 : index
    %415 = vector.load %arg14[%c0_177, %c0_178] : memref<8x512xf32, #tpu.memory_space<vmem>>, vector<8x512xf32>
    tpu.vector_store %arg14[%c0_177, %c0_178], %414 {strides = array<i32>} : memref<8x512xf32, #tpu.memory_space<vmem>>, vector<8x512xf32>,
    %c0_179 = arith.constant 0 : index
    %c0_180 = arith.constant 0 : index
    %416 = vector.load %arg15[%c0_179, %c0_180] : memref<8x32xf32, #tpu.memory_space<vmem>>, vector<8x32xf32>
    tpu.vector_store %arg15[%c0_179, %c0_180], %259 {strides = array<i32>} : memref<8x32xf32, #tpu.memory_space<vmem>>, vector<8x32xf32>,
    return
  }
  func.func @transform_0(%arg0: i32) -> (i32, i32, i32) {
    %c0_i32 = arith.constant 0 : i32
    %c0_i32_0 = arith.constant 0 : i32
    %c0_i32_1 = arith.constant 0 : i32
    return %c0_i32, %arg0, %c0_i32_0 : i32, i32, i32
  }
  func.func @transform_1(%arg0: i32) -> (i32, i32) {
    %c0_i32 = arith.constant 0 : i32
    %c0_i32_0 = arith.constant 0 : i32
    return %arg0, %c0_i32 : i32, i32
  }
  func.func @transform_2(%arg0: i32) -> (i32, i32) {
    %c0_i32 = arith.constant 0 : i32
    %c0_i32_0 = arith.constant 0 : i32
    return %arg0, %c0_i32 : i32, i32
  }
  func.func @transform_3(%arg0: i32) -> (i32, i32) {
    %c0_i32 = arith.constant 0 : i32
    %c0_i32_0 = arith.constant 0 : i32
    %c0_i32_1 = arith.constant 0 : i32
    return %c0_i32, %c0_i32_0 : i32, i32
  }
  func.func @transform_4(%arg0: i32) -> (i32, i32) {
    %c0_i32 = arith.constant 0 : i32
    %c0_i32_0 = arith.constant 0 : i32
    %c0_i32_1 = arith.constant 0 : i32
    return %c0_i32, %c0_i32_0 : i32, i32
  }
  func.func @transform_5(%arg0: i32) -> (i32, i32, i32) {
    %c0_i32 = arith.constant 0 : i32
    %c0_i32_0 = arith.constant 0 : i32
    %c0_i32_1 = arith.constant 0 : i32
    %c0_i32_2 = arith.constant 0 : i32
    return %c0_i32, %c0_i32_0, %c0_i32_1 : i32, i32, i32
  }
  func.func @transform_6(%arg0: i32) -> (i32, i32, i32) {
    %c0_i32 = arith.constant 0 : i32
    %c0_i32_0 = arith.constant 0 : i32
    %c0_i32_1 = arith.constant 0 : i32
    %c0_i32_2 = arith.constant 0 : i32
    return %c0_i32, %c0_i32_0, %c0_i32_1 : i32, i32, i32
  }
  func.func @transform_7(%arg0: i32) -> (i32, i32) {
    %c0_i32 = arith.constant 0 : i32
    %c0_i32_0 = arith.constant 0 : i32
    %c0_i32_1 = arith.constant 0 : i32
    return %c0_i32, %c0_i32_0 : i32, i32
  }
  func.func @transform_8(%arg0: i32) -> (i32, i32) {
    %c0_i32 = arith.constant 0 : i32
    %c0_i32_0 = arith.constant 0 : i32
    %c0_i32_1 = arith.constant 0 : i32
    return %c0_i32, %c0_i32_0 : i32, i32
  }
  func.func @transform_9(%arg0: i32) -> (i32, i32) {
    %c0_i32 = arith.constant 0 : i32
    %c0_i32_0 = arith.constant 0 : i32
    %c0_i32_1 = arith.constant 0 : i32
    return %c0_i32, %c0_i32_0 : i32, i32
  }
  func.func @transform_10(%arg0: i32) -> (i32, i32) {
    %c0_i32 = arith.constant 0 : i32
    %c0_i32_0 = arith.constant 0 : i32
    %c0_i32_1 = arith.constant 0 : i32
    return %c0_i32, %c0_i32_0 : i32, i32
  }
  func.func @transform_11(%arg0: i32) -> (i32, i32) {
    %c0_i32 = arith.constant 0 : i32
    %c0_i32_0 = arith.constant 0 : i32
    %c0_i32_1 = arith.constant 0 : i32
    return %c0_i32, %c0_i32_0 : i32, i32
  }
  func.func @transform_12(%arg0: i32) -> (i32, i32) {
    %c0_i32 = arith.constant 0 : i32
    %c0_i32_0 = arith.constant 0 : i32
    %c0_i32_1 = arith.constant 0 : i32
    return %c0_i32, %c0_i32_0 : i32, i32
  }
  func.func @transform_13(%arg0: i32) -> (i32, i32) {
    %c0_i32 = arith.constant 0 : i32
    %c0_i32_0 = arith.constant 0 : i32
    return %arg0, %c0_i32 : i32, i32
  }
  func.func @transform_14(%arg0: i32) -> (i32, i32) {
    %c0_i32 = arith.constant 0 : i32
    %c0_i32_0 = arith.constant 0 : i32
    return %arg0, %c0_i32 : i32, i32
  }
}

</mosaic_0001>

<llo_original>
// kernel: forward.1
$region0: #{forward.1}
  #allocation0 [shape = 'u32[]', space=smem, size = 0x4, offset = 0x4, fixed_abs, tag = 'smem constant byte address 0x4 - core index']
  #allocation1 [shape = 'u32[144,128]{1,0:T(1,128)}', space=vmem, size = 0x12000, scoped, tag = 'internal scratch']
  %s0 = inlined_call_operand.vmem [shape: f32[4,32,128], index: 0, kind: input, shape index: {}]
  %s1 = inlined_call_operand.vmem [shape: f32[32,8], index: 1, kind: input, shape index: {}]
  %s2 = inlined_call_operand.vmem [shape: f32[32,16], index: 2, kind: input, shape index: {}]
  %s3 = inlined_call_operand.hbm [shape: f32[1,8320], index: 3, kind: input, shape index: {}]
  %s4 = inlined_call_operand.vmem [shape: bf16[136,64], index: 4, kind: input, shape index: {}]
  %s5 = inlined_call_operand.vmem [shape: bf16[4,128,256], index: 5, kind: input, shape index: {}]
  %s6 = inlined_call_operand.hbm [shape: bf16[4,256,128], index: 6, kind: input, shape index: {}]
  %s7 = inlined_call_operand.vmem [shape: bf16[128,128], index: 7, kind: input, shape index: {}]
  %s8 = inlined_call_operand.vmem [shape: bf16[128,32], index: 8, kind: input, shape index: {}]
  %s9 = inlined_call_operand.hbm [shape: bf16[80,128], index: 9, kind: input, shape index: {}]
  %s10 = inlined_call_operand.hbm [shape: bf16[128,256], index: 10, kind: input, shape index: {}]
  %s11 = inlined_call_operand.hbm [shape: bf16[768,512], index: 11, kind: input, shape index: {}]
  %s12 = inlined_call_operand.hbm [shape: bf16[512,512], index: 12, kind: input, shape index: {}]
  %s13 = inlined_call_operand.vmem [shape: f32[32,512], index: 13, kind: output, shape index: {0}]
  %s14 = inlined_call_operand.vmem [shape: f32[32,32], index: 14, kind: output, shape index: {1}]
  %15 = xla_tuple %s13, %s14
  %s16 = sld [smem:[#allocation0]]
  $region155: #{forward.1} parent=0
    _
  %s18 = ssub.s32 1, %s16
  %s19 = scalar_select 0, %s18, %s16
  $region1: #{forward.1} parent=0
    #allocation2 [shape = 'u8[32768]{0}', space=vmem, size = 0x8000, scoped, tag = 'input window, operand 0']
    #allocation3 [shape = 'u8[33280]{0}', space=vmem, size = 0x8400, scoped, tag = 'input window, operand 3, single buffered']
    #allocation4 [shape = 's32[2]{0}', space=sflag, size = 0x8, scoped, tag = 'scoped memory for forward.1']
    #allocation5 [shape = 'u8[262144]{0}', space=vmem, size = 0x40000, scoped, tag = 'input window, operand 6, single buffered']
    #allocation6 [shape = 's32[1]{0}', space=sflag, size = 0x4, scoped, tag = 'scoped memory for forward.1']
    #allocation7 [shape = 'u8[20480]{0}', space=vmem, size = 0x5000, scoped, tag = 'input window, operand 9, single buffered']
    #allocation8 [shape = 'u8[65536]{0}', space=vmem, size = 0x10000, scoped, tag = 'input window, operand 10, single buffered']
    #allocation9 [shape = 's32[1]{0}', space=sflag, size = 0x4, scoped, tag = 'scoped memory for forward.1']
    #allocation10 [shape = 'u8[786432]{0}', space=vmem, size = 0xc0000, scoped, tag = 'input window, operand 11, single buffered']
    #allocation11 [shape = 'u8[524288]{0}', space=vmem, size = 0x80000, scoped, tag = 'input window, operand 12, single buffered']
    #allocation12 [shape = 's32[1]{0}', space=sflag, size = 0x4, scoped, tag = 'scoped memory for forward.1']
    %20 = vsyncpa [#allocation4], 0
    %21 = vsyncpa [#allocation6], 0
    %22 = vsyncpa [#allocation9], 0
    %23 = vsyncpa [#allocation12], 0
    loop: start=0, step=1, limit=6
    $region2: #{forward.1} parent=1 // loop_pre_header
      _
    $region3: #{forward.1} parent=1 // loop_header
      %s25 = sphi 0, %s29
      %p26 = scmp.ge.s32.totalorder %s25, 6
      %s35 = sphi 0, %s37
      %s38 = sphi 0, %s35
      %s39 = sphi 0, %s38
      %s55 = sphi 0, %s39
      %s61 = sphi 0, %s63
      %s64 = sphi 0, %s61
      %s65 = sphi 0, %s64
      %s81 = sphi 0, %s65
      %s87 = sphi 0, %s89
      %s90 = sphi 0, %s87
      %s91 = sphi 0, %s90
      %s107 = sphi 0, %s91
      %s111 = sphi 0, %s111
      %s113 = sphi 0, %s111
      %s114 = sphi 0, %s113
      %s128 = sphi 0, %s114
      %s132 = sphi 0, %s132
      %s134 = sphi 0, %s132
      %s135 = sphi 0, %s134
      %s149 = sphi 0, %s135
      %s153 = sphi 0, %s153
      %s155 = sphi 0, %s153
      %s156 = sphi 0, %s155
      %s170 = sphi 0, %s156
      %s174 = sphi 0, %s174
      %s176 = sphi 0, %s174
      %s177 = sphi 0, %s176
      %s191 = sphi 0, %s177
      %s195 = sphi 0, %s195
      %s197 = sphi 0, %s195
      %s198 = sphi 0, %s197
      %s212 = sphi 0, %s198
      %s216 = sphi 0, %s216
      %s218 = sphi 0, %s216
      %s219 = sphi 0, %s218
      %s233 = sphi 0, %s219
      %s237 = sphi 0, %s237
      %s239 = sphi 0, %s237
      %s240 = sphi 0, %s239
      %s254 = sphi 0, %s240
      %s258 = sphi 0, %s258
      %s260 = sphi 0, %s258
      %s261 = sphi 0, %s260
      %s275 = sphi 0, %s261
      %s279 = sphi 0, %s279
      %s281 = sphi 0, %s279
      %s282 = sphi 0, %s281
      %s296 = sphi 0, %s282
      %s300 = sphi 0, %s300
      %s302 = sphi 0, %s300
      %s303 = sphi 0, %s302
      %s317 = sphi 0, %s303
      %s323 = sphi 0, %s325
      %s326 = sphi 0, %s323
      %s327 = sphi 0, %s326
      %s343 = sphi 0, %s327
      %s349 = sphi 0, %s351
      %s352 = sphi 0, %s349
      %s353 = sphi 0, %s352
      %s369 = sphi 0, %s353
    $region4: #{forward.1} parent=1 // loop_header_branch
      %28 = sbr.rel (%p26) target = $region8
    $region5: #{forward.1} parent=1 // loop_body
      %s30 = ssub.s32 %s25, 1
      %s31 = ssub.s32 %s25, 2
      %s32 = sadd.s32 %s25, 1
      %s33 = ssub.s32 %s25, %s32
      %p34 = scmp.eq.s32.totalorder %s33, 0
      %s36 = sadd.s32 %s35, 1
      %s37 = scalar_select %p34, %s35, %s36
      %p40 = pneg %p34
      %p41 = scmp.eq.s32.totalorder %s25, 3
      %p42 = por %p40, %p41
      %p43 = scmp.ne.s32.totalorder %s35, %s38
      %p44 = scmp.eq.s32.totalorder %s25, 0
      %p45 = por %p43, %p44
      %p46 = scmp.ne.s32.totalorder %s35, %s38
      %p47 = scmp.eq.s32.totalorder %s30, 3
      %p48 = por %p46, %p47
      %p49 = scmp.ne.s32.totalorder %s38, %s39
      %p50 = scmp.eq.s32.totalorder %s30, 0
      %p51 = por %p49, %p50
      %p52 = scmp.ne.s32.totalorder %s38, %s39
      %p53 = scmp.eq.s32.totalorder %s31, 3
      %p54 = por %p52, %p53
      %p56 = scmp.ne.s32.totalorder %s39, %s55
      %p57 = scmp.eq.s32.totalorder %s31, 0
      %p58 = por %p56, %p57
      %s59 = ssub.s32 %s25, %s32
      %p60 = scmp.eq.s32.totalorder %s59, 0
      %s62 = sadd.s32 %s61, 1
      %s63 = scalar_select %p60, %s61, %s62
      %p66 = pneg %p60
      %p67 = scmp.eq.s32.totalorder %s25, 3
      %p68 = por %p66, %p67
      %p69 = scmp.ne.s32.totalorder %s61, %s64
      %p70 = scmp.eq.s32.totalorder %s25, 0
      %p71 = por %p69, %p70
      %p72 = scmp.ne.s32.totalorder %s61, %s64
      %p73 = scmp.eq.s32.totalorder %s30, 3
      %p74 = por %p72, %p73
      %p75 = scmp.ne.s32.totalorder %s64, %s65
      %p76 = scmp.eq.s32.totalorder %s30, 0
      %p77 = por %p75, %p76
      %p78 = scmp.ne.s32.totalorder %s64, %s65
      %p79 = scmp.eq.s32.totalorder %s31, 3
      %p80 = por %p78, %p79
      %p82 = scmp.ne.s32.totalorder %s65, %s81
      %p83 = scmp.eq.s32.totalorder %s31, 0
      %p84 = por %p82, %p83
      %s85 = ssub.s32 %s25, %s32
      %p86 = scmp.eq.s32.totalorder %s85, 0
      %s88 = sadd.s32 %s87, 1
      %s89 = scalar_select %p86, %s87, %s88
      %p92 = pneg %p86
      %p93 = scmp.eq.s32.totalorder %s25, 3
      %p94 = por %p92, %p93
      %p95 = scmp.ne.s32.totalorder %s87, %s90
      %p96 = scmp.eq.s32.totalorder %s25, 0
      %p97 = por %p95, %p96
      %p98 = scmp.ne.s32.totalorder %s87, %s90
      %p99 = scmp.eq.s32.totalorder %s30, 3
      %p100 = por %p98, %p99
      %p101 = scmp.ne.s32.totalorder %s90, %s91
      %p102 = scmp.eq.s32.totalorder %s30, 0
      %p103 = por %p101, %p102
      %p104 = scmp.ne.s32.totalorder %s90, %s91
      %p105 = scmp.eq.s32.totalorder %s31, 3
      %p106 = por %p104, %p105
      %p108 = scmp.ne.s32.totalorder %s91, %s107
      %p109 = scmp.eq.s32.totalorder %s31, 0
      %p110 = por %p108, %p109
      %s112 = sadd.s32 %s111, 1
      %p115 = scmp.eq.s32.totalorder %s25, 3
      %p116 = scmp.ne.s32.totalorder %s111, %s113
      %p117 = scmp.eq.s32.totalorder %s25, 0
      %p118 = por %p116, %p117
      %p119 = scmp.ne.s32.totalorder %s111, %s113
      %p120 = scmp.eq.s32.totalorder %s30, 3
      %p121 = por %p119, %p120
      %p122 = scmp.ne.s32.totalorder %s113, %s114
      %p123 = scmp.eq.s32.totalorder %s30, 0
      %p124 = por %p122, %p123
      %p125 = scmp.ne.s32.totalorder %s113, %s114
      %p126 = scmp.eq.s32.totalorder %s31, 3
      %p127 = por %p125, %p126
      %p129 = scmp.ne.s32.totalorder %s114, %s128
      %p130 = scmp.eq.s32.totalorder %s31, 0
      %p131 = por %p129, %p130
      %s133 = sadd.s32 %s132, 1
      %p136 = scmp.eq.s32.totalorder %s25, 3
      %p137 = scmp.ne.s32.totalorder %s132, %s134
      %p138 = scmp.eq.s32.totalorder %s25, 0
      %p139 = por %p137, %p138
      %p140 = scmp.ne.s32.totalorder %s132, %s134
      %p141 = scmp.eq.s32.totalorder %s30, 3
      %p142 = por %p140, %p141
      %p143 = scmp.ne.s32.totalorder %s134, %s135
      %p144 = scmp.eq.s32.totalorder %s30, 0
      %p145 = por %p143, %p144
      %p146 = scmp.ne.s32.totalorder %s134, %s135
      %p147 = scmp.eq.s32.totalorder %s31, 3
      %p148 = por %p146, %p147
      %p150 = scmp.ne.s32.totalorder %s135, %s149
      %p151 = scmp.eq.s32.totalorder %s31, 0
      %p152 = por %p150, %p151
      %s154 = sadd.s32 %s153, 1
      %p157 = scmp.eq.s32.totalorder %s25, 3
      %p158 = scmp.ne.s32.totalorder %s153, %s155
      %p159 = scmp.eq.s32.totalorder %s25, 0
      %p160 = por %p158, %p159
      %p161 = scmp.ne.s32.totalorder %s153, %s155
      %p162 = scmp.eq.s32.totalorder %s30, 3
      %p163 = por %p161, %p162
      %p164 = scmp.ne.s32.totalorder %s155, %s156
      %p165 = scmp.eq.s32.totalorder %s30, 0
      %p166 = por %p164, %p165
      %p167 = scmp.ne.s32.totalorder %s155, %s156
      %p168 = scmp.eq.s32.totalorder %s31, 3
      %p169 = por %p167, %p168
      %p171 = scmp.ne.s32.totalorder %s156, %s170
      %p172 = scmp.eq.s32.totalorder %s31, 0
      %p173 = por %p171, %p172
      %s175 = sadd.s32 %s174, 1
      %p178 = scmp.eq.s32.totalorder %s25, 3
      %p179 = scmp.ne.s32.totalorder %s174, %s176
      %p180 = scmp.eq.s32.totalorder %s25, 0
      %p181 = por %p179, %p180
      %p182 = scmp.ne.s32.totalorder %s174, %s176
      %p183 = scmp.eq.s32.totalorder %s30, 3
      %p184 = por %p182, %p183
      %p185 = scmp.ne.s32.totalorder %s176, %s177
      %p186 = scmp.eq.s32.totalorder %s30, 0
      %p187 = por %p185, %p186
      %p188 = scmp.ne.s32.totalorder %s176, %s177
      %p189 = scmp.eq.s32.totalorder %s31, 3
      %p190 = por %p188, %p189
      %p192 = scmp.ne.s32.totalorder %s177, %s191
      %p193 = scmp.eq.s32.totalorder %s31, 0
      %p194 = por %p192, %p193
      %s196 = sadd.s32 %s195, 1
      %p199 = scmp.eq.s32.totalorder %s25, 3
      %p200 = scmp.ne.s32.totalorder %s195, %s197
      %p201 = scmp.eq.s32.totalorder %s25, 0
      %p202 = por %p200, %p201
      %p203 = scmp.ne.s32.totalorder %s195, %s197
      %p204 = scmp.eq.s32.totalorder %s30, 3
      %p205 = por %p203, %p204
      %p206 = scmp.ne.s32.totalorder %s197, %s198
      %p207 = scmp.eq.s32.totalorder %s30, 0
      %p208 = por %p206, %p207
      %p209 = scmp.ne.s32.totalorder %s197, %s198
      %p210 = scmp.eq.s32.totalorder %s31, 3
      %p211 = por %p209, %p210
      %p213 = scmp.ne.s32.totalorder %s198, %s212
      %p214 = scmp.eq.s32.totalorder %s31, 0
      %p215 = por %p213, %p214
      %s217 = sadd.s32 %s216, 1
      %p220 = scmp.eq.s32.totalorder %s25, 3
      %p221 = scmp.ne.s32.totalorder %s216, %s218
      %p222 = scmp.eq.s32.totalorder %s25, 0
      %p223 = por %p221, %p222
      %p224 = scmp.ne.s32.totalorder %s216, %s218
      %p225 = scmp.eq.s32.totalorder %s30, 3
      %p226 = por %p224, %p225
      %p227 = scmp.ne.s32.totalorder %s218, %s219
      %p228 = scmp.eq.s32.totalorder %s30, 0
      %p229 = por %p227, %p228
      %p230 = scmp.ne.s32.totalorder %s218, %s219
      %p231 = scmp.eq.s32.totalorder %s31, 3
      %p232 = por %p230, %p231
      %p234 = scmp.ne.s32.totalorder %s219, %s233
      %p235 = scmp.eq.s32.totalorder %s31, 0
      %p236 = por %p234, %p235
      %s238 = sadd.s32 %s237, 1
      %p241 = scmp.eq.s32.totalorder %s25, 3
      %p242 = scmp.ne.s32.totalorder %s237, %s239
      %p243 = scmp.eq.s32.totalorder %s25, 0
      %p244 = por %p242, %p243
      %p245 = scmp.ne.s32.totalorder %s237, %s239
      %p246 = scmp.eq.s32.totalorder %s30, 3
      %p247 = por %p245, %p246
      %p248 = scmp.ne.s32.totalorder %s239, %s240
      %p249 = scmp.eq.s32.totalorder %s30, 0
      %p250 = por %p248, %p249
      %p251 = scmp.ne.s32.totalorder %s239, %s240
      %p252 = scmp.eq.s32.totalorder %s31, 3
      %p253 = por %p251, %p252
      %p255 = scmp.ne.s32.totalorder %s240, %s254
      %p256 = scmp.eq.s32.totalorder %s31, 0
      %p257 = por %p255, %p256
      %s259 = sadd.s32 %s258, 1
      %p262 = scmp.eq.s32.totalorder %s25, 3
      %p263 = scmp.ne.s32.totalorder %s258, %s260
      %p264 = scmp.eq.s32.totalorder %s25, 0
      %p265 = por %p263, %p264
      %p266 = scmp.ne.s32.totalorder %s258, %s260
      %p267 = scmp.eq.s32.totalorder %s30, 3
      %p268 = por %p266, %p267
      %p269 = scmp.ne.s32.totalorder %s260, %s261
      %p270 = scmp.eq.s32.totalorder %s30, 0
      %p271 = por %p269, %p270
      %p272 = scmp.ne.s32.totalorder %s260, %s261
      %p273 = scmp.eq.s32.totalorder %s31, 3
      %p274 = por %p272, %p273
      %p276 = scmp.ne.s32.totalorder %s261, %s275
      %p277 = scmp.eq.s32.totalorder %s31, 0
      %p278 = por %p276, %p277
      %s280 = sadd.s32 %s279, 1
      %p283 = scmp.eq.s32.totalorder %s25, 3
      %p284 = scmp.ne.s32.totalorder %s279, %s281
      %p285 = scmp.eq.s32.totalorder %s25, 0
      %p286 = por %p284, %p285
      %p287 = scmp.ne.s32.totalorder %s279, %s281
      %p288 = scmp.eq.s32.totalorder %s30, 3
      %p289 = por %p287, %p288
      %p290 = scmp.ne.s32.totalorder %s281, %s282
      %p291 = scmp.eq.s32.totalorder %s30, 0
      %p292 = por %p290, %p291
      %p293 = scmp.ne.s32.totalorder %s281, %s282
      %p294 = scmp.eq.s32.totalorder %s31, 3
      %p295 = por %p293, %p294
      %p297 = scmp.ne.s32.totalorder %s282, %s296
      %p298 = scmp.eq.s32.totalorder %s31, 0
      %p299 = por %p297, %p298
      %s301 = sadd.s32 %s300, 1
      %p304 = scmp.eq.s32.totalorder %s25, 3
      %p305 = scmp.ne.s32.totalorder %s300, %s302
      %p306 = scmp.eq.s32.totalorder %s25, 0
      %p307 = por %p305, %p306
      %p308 = scmp.ne.s32.totalorder %s300, %s302
      %p309 = scmp.eq.s32.totalorder %s30, 3
      %p310 = por %p308, %p309
      %p311 = scmp.ne.s32.totalorder %s302, %s303
      %p312 = scmp.eq.s32.totalorder %s30, 0
      %p313 = por %p311, %p312
      %p314 = scmp.ne.s32.totalorder %s302, %s303
      %p315 = scmp.eq.s32.totalorder %s31, 3
      %p316 = por %p314, %p315
      %p318 = scmp.ne.s32.totalorder %s303, %s317
      %p319 = scmp.eq.s32.totalorder %s31, 0
      %p320 = por %p318, %p319
      %s321 = ssub.s32 %s25, %s32
      %p322 = scmp.eq.s32.totalorder %s321, 0
      %s324 = sadd.s32 %s323, 1
      %s325 = scalar_select %p322, %s323, %s324
      %p328 = pneg %p322
      %p329 = scmp.eq.s32.totalorder %s25, 3
      %p330 = por %p328, %p329
      %p331 = scmp.ne.s32.totalorder %s323, %s326
      %p332 = scmp.eq.s32.totalorder %s25, 0
      %p333 = por %p331, %p332
      %p334 = scmp.ne.s32.totalorder %s323, %s326
      %p335 = scmp.eq.s32.totalorder %s30, 3
      %p336 = por %p334, %p335
      %p337 = scmp.ne.s32.totalorder %s326, %s327
      %p338 = scmp.eq.s32.totalorder %s30, 0
      %p339 = por %p337, %p338
      %p340 = scmp.ne.s32.totalorder %s326, %s327
      %p341 = scmp.eq.s32.totalorder %s31, 3
      %p342 = por %p340, %p341
      %p344 = scmp.ne.s32.totalorder %s327, %s343
      %p345 = scmp.eq.s32.totalorder %s31, 0
      %p346 = por %p344, %p345
      %s347 = ssub.s32 %s25, %s32
      %p348 = scmp.eq.s32.totalorder %s347, 0
      %s350 = sadd.s32 %s349, 1
      %s351 = scalar_select %p348, %s349, %s350
      %p354 = pneg %p348
      %p355 = scmp.eq.s32.totalorder %s25, 3
      %p356 = por %p354, %p355
      %p357 = scmp.ne.s32.totalorder %s349, %s352
      %p358 = scmp.eq.s32.totalorder %s25, 0
      %p359 = por %p357, %p358
      %p360 = scmp.ne.s32.totalorder %s349, %s352
      %p361 = scmp.eq.s32.totalorder %s30, 3
      %p362 = por %p360, %p361
      %p363 = scmp.ne.s32.totalorder %s352, %s353
      %p364 = scmp.eq.s32.totalorder %s30, 0
      %p365 = por %p363, %p364
      %p366 = scmp.ne.s32.totalorder %s352, %s353
      %p367 = scmp.eq.s32.totalorder %s31, 3
      %p368 = por %p366, %p367
      %p370 = scmp.ne.s32.totalorder %s353, %s369
      %p371 = scmp.eq.s32.totalorder %s31, 0
      %p372 = por %p370, %p371
      %p373 = scmp.le.s32.totalorder 1, %s25
      %p374 = scmp.lt.s32.totalorder %s25, 5
      %p375 = pnand %p373, %p374
      %p376 = pneg %p375
      // Predicated region
      $region9: #{forward.1} parent=5 // pred_check
        _
      $region10: #{forward.1} parent=5 // pred_check_branch
        %378 = sbr.rel (%p375) target = $region12
      $region11: #{forward.1} parent=5 // pred_region
        %s379 = ssub.s32 %s25, 1
        // Predicated region
        $region13: #{forward.1} parent=11 // pred_check
          %p380 = pneg %p124
        $region14: #{forward.1} parent=11 // pred_check_branch
          %382 = sbr.rel (%p380) target = $region16
        $region15: #{forward.1} parent=11 // pred_region
          %s384 = ssub.s32 1040, 1040
          %385 = vsyncadd [#allocation4], %s384
          %s387 = sshll.u32 [#allocation3], 4
          %s388 = int_to_ptr.vmem [resolvable:$true] %s387
          %390 = dma.hbm_to_vmem [thread:$0]  %s3, 1040, %s388, [#allocation4]
        $region16: #{forward.1} parent=11 // pred_fallthru
          _
        // Predicated region
        $region17: #{forward.1} parent=11 // pred_check
          %p391 = pneg %p145
        $region18: #{forward.1} parent=11 // pred_check_branch
          %393 = sbr.rel (%p391) target = $region20
        $region19: #{forward.1} parent=11 // pred_region
          _
        $region20: #{forward.1} parent=11 // pred_fallthru
          _
        // Predicated region
        $region21: #{forward.1} parent=11 // pred_check
          %p394 = pneg %p166
        $region22: #{forward.1} parent=11 // pred_check_branch
          %396 = sbr.rel (%p394) target = $region24
        $region23: #{forward.1} parent=11 // pred_region
          _
        $region24: #{forward.1} parent=11 // pred_fallthru
          _
        // Predicated region
        $region25: #{forward.1} parent=11 // pred_check
          %p397 = pneg %p187
        $region26: #{forward.1} parent=11 // pred_check_branch
          %399 = sbr.rel (%p397) target = $region28
        $region27: #{forward.1} parent=11 // pred_region
          %s401 = ssub.s32 8192, 8192
          %402 = vsyncadd [#allocation6], %s401
          %s403 = sshll.u32 [#allocation5], 4
          %s404 = int_to_ptr.vmem [resolvable:$true] %s403
          %409 = dma.hbm_to_vmem [thread:$0]  %s6, 8192, %s404, [#allocation6], 64, 64, 4
        $region28: #{forward.1} parent=11 // pred_fallthru
          _
        // Predicated region
        $region29: #{forward.1} parent=11 // pred_check
          %p410 = pneg %p208
        $region30: #{forward.1} parent=11 // pred_check_branch
          %412 = sbr.rel (%p410) target = $region32
        $region31: #{forward.1} parent=11 // pred_region
          _
        $region32: #{forward.1} parent=11 // pred_fallthru
          _
        // Predicated region
        $region33: #{forward.1} parent=11 // pred_check
          %p413 = pneg %p229
        $region34: #{forward.1} parent=11 // pred_check_branch
          %415 = sbr.rel (%p413) target = $region36
        $region35: #{forward.1} parent=11 // pred_region
          _
        $region36: #{forward.1} parent=11 // pred_fallthru
          _
        // Predicated region
        $region37: #{forward.1} parent=11 // pred_check
          %p416 = pneg %p250
        $region38: #{forward.1} parent=11 // pred_check_branch
          %418 = sbr.rel (%p416) target = $region40
        $region39: #{forward.1} parent=11 // pred_region
          %s420 = ssub.s32 640, 640
          %421 = vsyncadd [#allocation6], %s420
          %s422 = sshll.u32 [#allocation7], 4
          %s423 = int_to_ptr.vmem [resolvable:$true] %s422
          %428 = dma.hbm_to_vmem [thread:$0]  %s9, 640, %s423, [#allocation6], 64, 64, 4
        $region40: #{forward.1} parent=11 // pred_fallthru
          _
        // Predicated region
        $region41: #{forward.1} parent=11 // pred_check
          %p429 = pneg %p271
        $region42: #{forward.1} parent=11 // pred_check_branch
          %431 = sbr.rel (%p429) target = $region44
        $region43: #{forward.1} parent=11 // pred_region
          %s433 = ssub.s32 2048, 2048
          %434 = vsyncadd [#allocation9], %s433
          %s435 = sshll.u32 [#allocation8], 4
          %s436 = int_to_ptr.vmem [resolvable:$true] %s435
          %441 = dma.hbm_to_vmem [thread:$0]  %s10, 2048, %s436, [#allocation9], 128, 128, 8
        $region44: #{forward.1} parent=11 // pred_fallthru
          _
        // Predicated region
        $region45: #{forward.1} parent=11 // pred_check
          %p442 = pneg %p292
        $region46: #{forward.1} parent=11 // pred_check_branch
          %444 = sbr.rel (%p442) target = $region48
        $region47: #{forward.1} parent=11 // pred_region
          %s446 = ssub.s32 24576, 24576
          %447 = vsyncadd [#allocation9], %s446
          %s448 = sshll.u32 [#allocation10], 4
          %s449 = int_to_ptr.vmem [resolvable:$true] %s448
          %454 = dma.hbm_to_vmem [thread:$0]  %s11, 24576, %s449, [#allocation9], 256, 256, 16
        $region48: #{forward.1} parent=11 // pred_fallthru
          _
        // Predicated region
        $region49: #{forward.1} parent=11 // pred_check
          %p455 = pneg %p313
        $region50: #{forward.1} parent=11 // pred_check_branch
          %457 = sbr.rel (%p455) target = $region52
        $region51: #{forward.1} parent=11 // pred_region
          %s459 = ssub.s32 16384, 16384
          %460 = vsyncadd [#allocation12], %s459
          %s461 = sshll.u32 [#allocation11], 4
          %s462 = int_to_ptr.vmem [resolvable:$true] %s461
          %467 = dma.hbm_to_vmem [thread:$0]  %s12, 16384, %s462, [#allocation12], 256, 256, 16
        $region52: #{forward.1} parent=11 // pred_fallthru
          _
      $region12: #{forward.1} parent=5 // pred_fallthru
        _
      %p468 = scmp.lt.s32.totalorder %s25, 4
      // Predicated region
      $region53: #{forward.1} parent=5 // pred_check
        %p469 = pneg %p468
      $region54: #{forward.1} parent=5 // pred_check_branch
        %471 = sbr.rel (%p469) target = $region56
      $region55: #{forward.1} parent=5 // pred_region
        // Predicated region
        $region57: #{forward.1} parent=55 // pred_check
          %p472 = pneg %p45
        $region58: #{forward.1} parent=55 // pred_check_branch
          %474 = sbr.rel (%p472) target = $region60
        $region59: #{forward.1} parent=55 // pred_region
          %s475 = sand.u32 %s35, 1
          %s476 = sand.u32 %s35, 1
          %s477 = smul.addr %s476, 32
          %s478 = scalar_lea.vmem [#allocation2], %s477
          %s479 = smul.addr %s25, 8
          %s480 = scalar_lea.vmem %s0, %s479
          // Predicated region
          $region61: #{forward.1} parent=59 // pred_check
            _
          $region62: #{forward.1} parent=59 // pred_check_branch
            %482 = sbr.rel (0) target = $region64
          $region63: #{forward.1} parent=59 // pred_region
            // Predicated region
            $region65: #{forward.1} parent=63 // pred_check
              _
            $region66: #{forward.1} parent=63 // pred_check_branch
              %484 = sbr.rel (0) target = $region68
            $region67: #{forward.1} parent=63 // pred_region
              // Predicated region
              $region80: #{forward.1} parent=67 // pred_check
                _
              $region81: #{forward.1} parent=67 // pred_check_branch
                %505 = sbr.rel (0) target = $region83
              $region82: #{forward.1} parent=67 // pred_region
                loop: start=0, step=1, limit=1
                $region84: #{forward.1} parent=82 // loop_pre_header
                  _
                $region85: #{forward.1} parent=82 // loop_header
                  %s507 = sphi 0, %s511
                  %p508 = scmp.ge.s32.totalorder %s507, 1
                  %s512 = sphi %s480, %s480
                  %s513 = sphi %s478, %s478
                $region86: #{forward.1} parent=82 // loop_header_branch
                  %510 = sbr.rel (%p508) target = $region90
                $region87: #{forward.1} parent=82 // loop_body
                  %v514 = vld [vmem:[%s512] sm:$0xff]
                  %515 = vst [vmem:[%s513] sm:$0xff] %v514
                  %v516 = vld [vmem:[%s512 + $0x20] sm:$0xff]
                  %517 = vst [vmem:[%s513 + $0x8] sm:$0xff] %v516
                  %v518 = vld [vmem:[%s512 + $0x40] sm:$0xff]
                  %519 = vst [vmem:[%s513 + $0x10] sm:$0xff] %v518
                  %v520 = vld [vmem:[%s512 + $0x60] sm:$0xff]
                  %521 = vst [vmem:[%s513 + $0x18] sm:$0xff] %v520
                $region88: #{forward.1} parent=82 // loop_footer
                  %s511 = sadd.s32 1, %s507
                $region89: #{forward.1} parent=82 // loop_footer_branch
                  %506 = sbr.rel target = $region85
                $region90: #{forward.1} parent=82 // loop_exit
                  _
              $region83: #{forward.1} parent=67 // pred_fallthru
                _
              // Predicated region
              $region91: #{forward.1} parent=67 // pred_check
                _
              $region92: #{forward.1} parent=67 // pred_check_branch
                %523 = sbr.rel target = $region94
              $region93: #{forward.1} parent=67 // pred_region
                _
              $region94: #{forward.1} parent=67 // pred_fallthru
                _
            $region68: #{forward.1} parent=63 // pred_fallthru
              _
            // Predicated region
            $region69: #{forward.1} parent=63 // pred_check
              _
            $region70: #{forward.1} parent=63 // pred_check_branch
              %486 = sbr.rel target = $region72
            $region71: #{forward.1} parent=63 // pred_region
              loop: start=0, step=1, limit=1
              $region73: #{forward.1} parent=71 // loop_pre_header
                _
              $region74: #{forward.1} parent=71 // loop_header
                %s489 = sphi 0, %s493
                %p490 = scmp.ge.s32.totalorder %s489, 1
                %s494 = sphi %s480, %s480
                %s495 = sphi %s478, %s478
              $region75: #{forward.1} parent=71 // loop_header_branch
                %492 = sbr.rel (%p490) target = $region79
              $region76: #{forward.1} parent=71 // loop_body
                %v496 = vld [vmem:[%s494] sm:$0xff]
                %497 = vst [vmem:[%s495] sm:$0xff] %v496
                %v498 = vld [vmem:[%s494 + $0x20] sm:$0xff]
                %499 = vst [vmem:[%s495 + $0x8] sm:$0xff] %v498
                %v500 = vld [vmem:[%s494 + $0x40] sm:$0xff]
                %501 = vst [vmem:[%s495 + $0x10] sm:$0xff] %v500
                %v502 = vld [vmem:[%s494 + $0x60] sm:$0xff]
                %503 = vst [vmem:[%s495 + $0x18] sm:$0xff] %v502
              $region77: #{forward.1} parent=71 // loop_footer
                %s493 = sadd.s32 1, %s489
              $region78: #{forward.1} parent=71 // loop_footer_branch
                %488 = sbr.rel target = $region74
              $region79: #{forward.1} parent=71 // loop_exit
                _
            $region72: #{forward.1} parent=63 // pred_fallthru
              _
          $region64: #{forward.1} parent=59 // pred_fallthru
            _
          %524 = vnop
        $region60: #{forward.1} parent=55 // pred_fallthru
          _
        // Predicated region
        $region95: #{forward.1} parent=55 // pred_check
          %p525 = pneg %p71
        $region96: #{forward.1} parent=55 // pred_check_branch
          %527 = sbr.rel (%p525) target = $region98
        $region97: #{forward.1} parent=55 // pred_region
          %p528 = scmp.lt.s32.totalorder %s25, 3
          %s529 = scalar_select %p528, %s25, 3
          %s530 = smul.addr %s529, 8
          %s531 = scalar_lea.vmem %s1, %s530
        $region98: #{forward.1} parent=55 // pred_fallthru
          _
        // Predicated region
        $region99: #{forward.1} parent=55 // pred_check
          %p532 = pneg %p97
        $region100: #{forward.1} parent=55 // pred_check_branch
          %534 = sbr.rel (%p532) target = $region102
        $region101: #{forward.1} parent=55 // pred_region
          %p535 = scmp.lt.s32.totalorder %s25, 3
          %s536 = scalar_select %p535, %s25, 3
          %s537 = smul.addr %s536, 8
          %s538 = scalar_lea.vmem %s2, %s537
        $region102: #{forward.1} parent=55 // pred_fallthru
          _
      $region56: #{forward.1} parent=5 // pred_fallthru
        _
      %p539 = scmp.le.s32.totalorder 1, %s25
      %p540 = scmp.lt.s32.totalorder %s25, 5
      %p541 = pnand %p539, %p540
      %p542 = pneg %p541
      // Predicated region
      $region103: #{forward.1} parent=5 // pred_check
        _
      $region104: #{forward.1} parent=5 // pred_check_branch
        %544 = sbr.rel (%p541) target = $region106
      $region105: #{forward.1} parent=5 // pred_region
        %s545 = ssub.s32 %s25, 1
        %s546 = sand.u32 %s38, 1
        %s547 = sand.u32 %s38, 1
        %s548 = smul.addr %s547, 32
        %s549 = scalar_lea.vmem [#allocation2], %s548
        // Predicated region
        $region107: #{forward.1} parent=105 // pred_check
          %p550 = pneg %p51
        $region108: #{forward.1} parent=105 // pred_check_branch
          %552 = sbr.rel (%p550) target = $region110
        $region109: #{forward.1} parent=105 // pred_region
          _
        $region110: #{forward.1} parent=105 // pred_fallthru
          _
        // Predicated region
        $region111: #{forward.1} parent=105 // pred_check
          %p553 = pneg %p124
        $region112: #{forward.1} parent=105 // pred_check_branch
          %555 = sbr.rel (%p553) target = $region114
        $region113: #{forward.1} parent=105 // pred_region
          %556 = dma.done [#allocation4], 1040
        $region114: #{forward.1} parent=105 // pred_fallthru
          _
        // Predicated region
        $region115: #{forward.1} parent=105 // pred_check
          %p557 = pneg %p187
        $region116: #{forward.1} parent=105 // pred_check_branch
          %559 = sbr.rel (%p557) target = $region118
        $region117: #{forward.1} parent=105 // pred_region
          %560 = dma.done [#allocation6], 8192
        $region118: #{forward.1} parent=105 // pred_fallthru
          _
        // Predicated region
        $region119: #{forward.1} parent=105 // pred_check
          %p561 = pneg %p250
        $region120: #{forward.1} parent=105 // pred_check_branch
          %563 = sbr.rel (%p561) target = $region122
        $region121: #{forward.1} parent=105 // pred_region
          %564 = dma.done [#allocation6], 640
        $region122: #{forward.1} parent=105 // pred_fallthru
          _
        // Predicated region
        $region123: #{forward.1} parent=105 // pred_check
          %p565 = pneg %p271
        $region124: #{forward.1} parent=105 // pred_check_branch
          %567 = sbr.rel (%p565) target = $region126
        $region125: #{forward.1} parent=105 // pred_region
          %568 = dma.done [#allocation9], 2048
        $region126: #{forward.1} parent=105 // pred_fallthru
          _
        // Predicated region
        $region127: #{forward.1} parent=105 // pred_check
          %p569 = pneg %p292
        $region128: #{forward.1} parent=105 // pred_check_branch
          %571 = sbr.rel (%p569) target = $region130
        $region129: #{forward.1} parent=105 // pred_region
          %572 = dma.done [#allocation9], 24576
        $region130: #{forward.1} parent=105 // pred_fallthru
          _
        // Predicated region
        $region131: #{forward.1} parent=105 // pred_check
          %p573 = pneg %p313
        $region132: #{forward.1} parent=105 // pred_check_branch
          %575 = sbr.rel (%p573) target = $region134
        $region133: #{forward.1} parent=105 // pred_region
          %576 = dma.done [#allocation12], 16384
        $region134: #{forward.1} parent=105 // pred_fallthru
          _
        %s577 = sand.u32 %s38, 1
        %s578 = sand.u32 %s38, 1
        %s579 = smul.addr %s578, 32
        %s580 = scalar_lea.vmem [#allocation2], %s579
        %p581 = pneg %p51
        %p582 = pneg %p48
        %p583 = scmp.lt.s32.totalorder %s30, 3
        %s584 = scalar_select %p583, %s30, 3
        %s585 = smul.addr %s584, 8
        %s586 = scalar_lea.vmem %s1, %s585
        %p587 = pneg %p77
        %p588 = pneg %p74
        %p589 = scmp.lt.s32.totalorder %s30, 3
        %s590 = scalar_select %p589, %s30, 3
        %s591 = smul.addr %s590, 8
        %s592 = scalar_lea.vmem %s2, %s591
        %p593 = pneg %p103
        %p594 = pneg %p100
        %p595 = pneg %p124
        %p596 = pneg %p121
        %p597 = pneg %p145
        %p598 = pneg %p142
        %p599 = pneg %p166
        %p600 = pneg %p163
        %p601 = pneg %p187
        %p602 = pneg %p184
        %p603 = pneg %p208
        %p604 = pneg %p205
        %p605 = pneg %p229
        %p606 = pneg %p226
        %p607 = pneg %p250
        %p608 = pneg %p247
        %p609 = pneg %p271
        %p610 = pneg %p268
        %p611 = pneg %p292
        %p612 = pneg %p289
        %p613 = pneg %p313
        %p614 = pneg %p310
        %p615 = pneg %p339
        %p616 = pneg %p336
        %p617 = scmp.lt.s32.totalorder %s30, 3
        %s618 = scalar_select %p617, %s30, 3
        %s619 = smul.addr %s618, 4
        %s620 = smul.addr %s619, 8
        %s621 = scalar_lea.vmem %s13, %s620
        %p622 = pneg %p365
        %p623 = pneg %p362
        %p624 = scmp.lt.s32.totalorder %s30, 3
        %s625 = scalar_select %p624, %s30, 3
        %s626 = smul.addr %s625, 8
        %s627 = scalar_lea.vmem %s14, %s626
        %p628 = scmp.lt.s32.totalorder %s30, 3
        %s629 = scalar_select %p628, %s30, 3
        %s630 = smul.addr %s629, 8
        %s631 = scalar_lea.vmem %s1, %s630
        %p632 = scmp.lt.s32.totalorder %s30, 3
        %s633 = scalar_select %p632, %s30, 3
        %s634 = smul.addr %s633, 8
        %s635 = scalar_lea.vmem %s2, %s634
        %p636 = scmp.lt.s32.totalorder %s30, 3
        %s637 = scalar_select %p636, %s30, 3
        %s638 = smul.addr %s637, 4
        %s639 = smul.addr %s638, 8
        %s640 = scalar_lea.vmem %s13, %s639
        %p641 = scmp.lt.s32.totalorder %s30, 3
        %s642 = scalar_select %p641, %s30, 3
        %s643 = smul.addr %s642, 8
        %s644 = scalar_lea.vmem %s14, %s643
        %v646 = vld [vmem:[%s631] sm:$0xff]
        %v647 = vld [vmem:[%s635] sm:$0xff]
        %v648 = vld [vmem:[%s4] sm:$0xf]
        %v649 = vpack.c.bf16 %v646, %v646
        %v650 = vld [vmem:[#allocation3] sm:$0x1]
        %v652 = vlaneseq
        %v653 = vshrl.u32 %v652, 7
        %v654 = vsub.s32 0, %v653
        %v655 = vrot.slane %v650, %v654
        %vm657 = vcmask 64512
        %v659 = vsel %vm657, %v649, 0
        %vm661 = vcmask 1043456
        %v663 = vsel %vm661, %v648, 0
        %665 = vmatprep.subr.bf16.mxu0 0
        %666 = vmatpush1.bf16.msra.mxu0 %v663
        %667 = vmatprep.subr.bf16.mxu0 0
        %668 = vmatpush1.bf16.msra.mxu0 0
        %669 = vmatprep.subr.bf16.mxu0 0
        %670 = vmatpush1.bf16.msra.mxu0 0
        %671 = vmatprep.subr.bf16.mxu0 0
        %672 = vmatpush1.bf16.msra.mxu0 0
        %673 = vmatprep.subr.bf16.mxu0 0
        %674 = vmatpush1.bf16.msra.mxu0 0
        %675 = vmatprep.subr.bf16.mxu0 0
        %676 = vmatpush1.bf16.msra.mxu0 0
        %677 = vmatprep.subr.bf16.mxu0 0
        %678 = vmatpush1.bf16.msra.mxu0 0
        %679 = vmatprep.subr.bf16.mxu0 0
        %680 = vmatpush1.bf16.msra.mxu0 0
        %681 = vmatprep.subr.bf16.mxu0 0
        %682 = vmatpush1.bf16.msra.mxu0 0
        %683 = vmatprep.subr.bf16.mxu0 0
        %684 = vmatpush1.bf16.msra.mxu0 0
        %685 = vmatprep.subr.bf16.mxu0 0
        %686 = vmatpush1.bf16.msra.mxu0 0
        %687 = vmatprep.subr.bf16.mxu0 0
        %688 = vmatpush1.bf16.msra.mxu0 0
        %689 = vmatprep.subr.bf16.mxu0 0
        %690 = vmatpush1.bf16.msra.mxu0 0
        %691 = vmatprep.subr.bf16.mxu0 0
        %692 = vmatpush1.bf16.msra.mxu0 0
        %693 = vmatprep.subr.bf16.mxu0 0
        %694 = vmatpush1.bf16.msra.mxu0 0
        %695 = vmatprep.subr.bf16.mxu0 0
        %696 = vmatpush1.bf16.msra.mxu0 0
        %697 = vmatprep.mubr.bf16.mxu0 0
        %698 = vmatmul.mubr.bf16.gmra.mrb[0].mxu0 %v659
        %v699 = vpop.f32.mrb[0].mxu0
        %v700 = vadd.f32 %v655, %v699
        %v701 = vpop.f32.mrb[0].mxu0
        %v702 = vpop.f32.mrb[0].mxu0
        %v703 = vpop.f32.mrb[0].mxu0
        %704 = vdwg.mxu0
        %v705 = vld [vmem:[%s549] sm:$0xff]
        %v706 = vld [vmem:[%s5] sm:$0xff]
        %v707 = vld [vmem:[%s5 + $0x8] sm:$0xff]
        %v708 = vld [vmem:[%s5 + $0x10] sm:$0xff]
        %v709 = vld [vmem:[%s5 + $0x18] sm:$0xff]
        %v710 = vld [vmem:[%s5 + $0x20] sm:$0xff]
        %v711 = vld [vmem:[%s5 + $0x28] sm:$0xff]
        %v712 = vld [vmem:[%s5 + $0x30] sm:$0xff]
        %v713 = vld [vmem:[%s5 + $0x38] sm:$0xff]
        %v714 = vld [vmem:[%s5 + $0x40] sm:$0xff]
        %v715 = vld [vmem:[%s5 + $0x48] sm:$0xff]
        %v716 = vld [vmem:[%s5 + $0x50] sm:$0xff]
        %v717 = vld [vmem:[%s5 + $0x58] sm:$0xff]
        %v718 = vld [vmem:[%s5 + $0x60] sm:$0xff]
        %v719 = vld [vmem:[%s5 + $0x68] sm:$0xff]
        %v720 = vld [vmem:[%s5 + $0x70] sm:$0xff]
        %v721 = vld [vmem:[%s5 + $0x78] sm:$0xff]
        %v722 = vpack.c.bf16 %v705, %v705
        %v723 = vld [vmem:[#allocation3 + $0x1] sm:$0x3]
        %v725 = vlaneseq
        %v726 = vshrl.u32 %v725, 7
        %v727 = vsub.s32 0, %v726
        %v728 = vrot.slane %v723, %v727
        %v729 = vlaneseq
        %v730 = vshrl.u32 %v729, 7
        %v731 = vsub.s32 1, %v730
        %v732 = vrot.slane %v723, %v731
        %v751 = vunpack.c.l.b16 %v706
        %v752 = vunpack.c.h.b16 %v706
        %v753 = vunpack.c.l.b16 %v707
        %v754 = vunpack.c.h.b16 %v707
        %v755 = vunpack.c.l.b16 %v708
        %v756 = vunpack.c.h.b16 %v708
        %v757 = vunpack.c.l.b16 %v709
        %v758 = vunpack.c.h.b16 %v709
        %v759 = vunpack.c.l.b16 %v710
        %v760 = vunpack.c.h.b16 %v710
        %v761 = vunpack.c.l.b16 %v711
        %v762 = vunpack.c.h.b16 %v711
        %v763 = vunpack.c.l.b16 %v712
        %v764 = vunpack.c.h.b16 %v712
        %v765 = vunpack.c.l.b16 %v713
        %v766 = vunpack.c.h.b16 %v713
        %v767 = vunpack.c.l.b16 %v714
        %v768 = vunpack.c.h.b16 %v714
        %v769 = vunpack.c.l.b16 %v715
        %v770 = vunpack.c.h.b16 %v715
        %v771 = vunpack.c.l.b16 %v716
        %v772 = vunpack.c.h.b16 %v716
        %v773 = vunpack.c.l.b16 %v717
        %v774 = vunpack.c.h.b16 %v717
        %v775 = vunpack.c.l.b16 %v718
        %v776 = vunpack.c.h.b16 %v718
        %v777 = vunpack.c.l.b16 %v719
        %v778 = vunpack.c.h.b16 %v719
        %v779 = vunpack.c.l.b16 %v720
        %v780 = vunpack.c.h.b16 %v720
        %v781 = vunpack.c.l.b16 %v721
        %v782 = vunpack.c.h.b16 %v721
        %v783 = vpack.c.b16 %v753, %v751
        %v784 = vpack.c.b16 %v754, %v752
        %v785 = vpack.c.b16 %v757, %v755
        %v786 = vpack.c.b16 %v758, %v756
        %v787 = vpack.c.b16 %v761, %v759
        %v788 = vpack.c.b16 %v762, %v760
        %v789 = vpack.c.b16 %v765, %v763
        %v790 = vpack.c.b16 %v766, %v764
        %v791 = vpack.c.b16 %v769, %v767
        %v792 = vpack.c.b16 %v770, %v768
        %v793 = vpack.c.b16 %v773, %v771
        %v794 = vpack.c.b16 %v774, %v772
        %v795 = vpack.c.b16 %v777, %v775
        %v796 = vpack.c.b16 %v778, %v776
        %v797 = vpack.c.b16 %v781, %v779
        %v798 = vpack.c.b16 %v782, %v780
        %815 = vmatprep.subr.bf16.mxu0 %v784
        %816 = vmatpush1.bf16.msra.mxu0 %v783
        %817 = vmatprep.subr.bf16.mxu0 %v786
        %818 = vmatpush1.bf16.msra.mxu0 %v785
        %819 = vmatprep.subr.bf16.mxu0 %v788
        %820 = vmatpush1.bf16.msra.mxu0 %v787
        %821 = vmatprep.subr.bf16.mxu0 %v790
        %822 = vmatpush1.bf16.msra.mxu0 %v789
        %823 = vmatprep.subr.bf16.mxu0 %v792
        %824 = vmatpush1.bf16.msra.mxu0 %v791
        %825 = vmatprep.subr.bf16.mxu0 %v794
        %826 = vmatpush1.bf16.msra.mxu0 %v793
        %827 = vmatprep.subr.bf16.mxu0 %v796
        %828 = vmatpush1.bf16.msra.mxu0 %v795
        %829 = vmatprep.subr.bf16.mxu0 %v798
        %830 = vmatpush1.bf16.msra.mxu0 %v797
        %831 = vmatprep.subr.bf16.mxu0 0
        %832 = vmatpush1.bf16.msra.mxu0 0
        %833 = vmatprep.subr.bf16.mxu0 0
        %834 = vmatpush1.bf16.msra.mxu0 0
        %835 = vmatprep.subr.bf16.mxu0 0
        %836 = vmatpush1.bf16.msra.mxu0 0
        %837 = vmatprep.subr.bf16.mxu0 0
        %838 = vmatpush1.bf16.msra.mxu0 0
        %839 = vmatprep.subr.bf16.mxu0 0
        %840 = vmatpush1.bf16.msra.mxu0 0
        %841 = vmatprep.subr.bf16.mxu0 0
        %842 = vmatpush1.bf16.msra.mxu0 0
        %843 = vmatprep.subr.bf16.mxu0 0
        %844 = vmatpush1.bf16.msra.mxu0 0
        %845 = vmatprep.subr.bf16.mxu0 0
        %846 = vmatpush1.bf16.msra.mxu0 0
        %847 = vmatprep.mubr.bf16.mxu0 0
        %848 = vmatmul.mubr.bf16.gmra.mrb[0].mxu0 %v722
        %v849 = vpop.f32.mrb[0].mxu0
        %v850 = vadd.f32 %v728, %v849
        %v851 = vpop.f32.mrb[0].mxu0
        %v852 = vadd.f32 %v732, %v851
        %v853 = vpop.f32.mrb[0].mxu0
        %v854 = vpop.f32.mrb[0].mxu0
        %855 = vdwg.mxu0
        %v856 = vmax.f32 %v850, 0.0
        %v857 = vmax.f32 %v852, 0.0
        %v858 = vld [vmem:[#allocation5] sm:$0xf]
        %v859 = vld [vmem:[#allocation5 + $0x4] sm:$0xf]
        %v860 = vld [vmem:[#allocation5 + $0x8] sm:$0xf]
        %v861 = vld [vmem:[#allocation5 + $0xc] sm:$0xf]
        %v862 = vld [vmem:[#allocation5 + $0x10] sm:$0xf]
        %v863 = vld [vmem:[#allocation5 + $0x14] sm:$0xf]
        %v864 = vld [vmem:[#allocation5 + $0x18] sm:$0xf]
        %v865 = vld [vmem:[#allocation5 + $0x1c] sm:$0xf]
        %v866 = vld [vmem:[#allocation5 + $0x20] sm:$0xf]
        %v867 = vld [vmem:[#allocation5 + $0x24] sm:$0xf]
        %v868 = vld [vmem:[#allocation5 + $0x28] sm:$0xf]
        %v869 = vld [vmem:[#allocation5 + $0x2c] sm:$0xf]
        %v870 = vld [vmem:[#allocation5 + $0x30] sm:$0xf]
        %v871 = vld [vmem:[#allocation5 + $0x34] sm:$0xf]
        %v872 = vld [vmem:[#allocation5 + $0x38] sm:$0xf]
        %v873 = vld [vmem:[#allocation5 + $0x3c] sm:$0xf]
        %v874 = vld [vmem:[#allocation5 + $0x40] sm:$0xf]
        %v875 = vld [vmem:[#allocation5 + $0x44] sm:$0xf]
        %v876 = vld [vmem:[#allocation5 + $0x48] sm:$0xf]
        %v877 = vld [vmem:[#allocation5 + $0x4c] sm:$0xf]
        %v878 = vld [vmem:[#allocation5 + $0x50] sm:$0xf]
        %v879 = vld [vmem:[#allocation5 + $0x54] sm:$0xf]
        %v880 = vld [vmem:[#allocation5 + $0x58] sm:$0xf]
        %v881 = vld [vmem:[#allocation5 + $0x5c] sm:$0xf]
        %v882 = vld [vmem:[#allocation5 + $0x60] sm:$0xf]
        %v883 = vld [vmem:[#allocation5 + $0x64] sm:$0xf]
        %v884 = vld [vmem:[#allocation5 + $0x68] sm:$0xf]
        %v885 = vld [vmem:[#allocation5 + $0x6c] sm:$0xf]
        %v886 = vld [vmem:[#allocation5 + $0x70] sm:$0xf]
        %v887 = vld [vmem:[#allocation5 + $0x74] sm:$0xf]
        %v888 = vld [vmem:[#allocation5 + $0x78] sm:$0xf]
        %v889 = vld [vmem:[#allocation5 + $0x7c] sm:$0xf]
        %v890 = vpack.c.bf16 %v856, %v856
        %v891 = vpack.c.bf16 %v857, %v857
        %v892 = vld [vmem:[#allocation3 + $0x3] sm:$0x1]
        %v894 = vlaneseq
        %v895 = vshrl.u32 %v894, 7
        %v896 = vsub.s32 0, %v895
        %v897 = vrot.slane %v892, %v896
        %v931 = vunpack.c.l.b16 %v858
        %v932 = vunpack.c.l.b16 %v859
        %v933 = vunpack.c.l.b16 %v860
        %v934 = vunpack.c.l.b16 %v861
        %v935 = vunpack.c.l.b16 %v862
        %v936 = vunpack.c.l.b16 %v863
        %v937 = vunpack.c.l.b16 %v864
        %v938 = vunpack.c.l.b16 %v865
        %v939 = vunpack.c.l.b16 %v866
        %v940 = vunpack.c.l.b16 %v867
        %v941 = vunpack.c.l.b16 %v868
        %v942 = vunpack.c.l.b16 %v869
        %v943 = vunpack.c.l.b16 %v870
        %v944 = vunpack.c.l.b16 %v871
        %v945 = vunpack.c.l.b16 %v872
        %v946 = vunpack.c.l.b16 %v873
        %v947 = vunpack.c.l.b16 %v874
        %v948 = vunpack.c.l.b16 %v875
        %v949 = vunpack.c.l.b16 %v876
        %v950 = vunpack.c.l.b16 %v877
        %v951 = vunpack.c.l.b16 %v878
        %v952 = vunpack.c.l.b16 %v879
        %v953 = vunpack.c.l.b16 %v880
        %v954 = vunpack.c.l.b16 %v881
        %v955 = vunpack.c.l.b16 %v882
        %v956 = vunpack.c.l.b16 %v883
        %v957 = vunpack.c.l.b16 %v884
        %v958 = vunpack.c.l.b16 %v885
        %v959 = vunpack.c.l.b16 %v886
        %v960 = vunpack.c.l.b16 %v887
        %v961 = vunpack.c.l.b16 %v888
        %v962 = vunpack.c.l.b16 %v889
        %v963 = vpack.c.b16 %v932, %v931
        %v964 = vpack.c.b16 %v934, %v933
        %v965 = vpack.c.b16 %v936, %v935
        %v966 = vpack.c.b16 %v938, %v937
        %v967 = vpack.c.b16 %v940, %v939
        %v968 = vpack.c.b16 %v942, %v941
        %v969 = vpack.c.b16 %v944, %v943
        %v970 = vpack.c.b16 %v946, %v945
        %v971 = vpack.c.b16 %v948, %v947
        %v972 = vpack.c.b16 %v950, %v949
        %v973 = vpack.c.b16 %v952, %v951
        %v974 = vpack.c.b16 %v954, %v953
        %v975 = vpack.c.b16 %v956, %v955
        %v976 = vpack.c.b16 %v958, %v957
        %v977 = vpack.c.b16 %v960, %v959
        %v978 = vpack.c.b16 %v962, %v961
        %995 = vmatprep.subr.bf16.mxu0 0
        %996 = vmatpush1.bf16.msra.mxu0 %v963
        %997 = vmatprep.subr.bf16.mxu0 0
        %998 = vmatpush1.bf16.msra.mxu0 %v964
        %999 = vmatprep.subr.bf16.mxu0 0
        %1000 = vmatpush1.bf16.msra.mxu0 %v965
        %1001 = vmatprep.subr.bf16.mxu0 0
        %1002 = vmatpush1.bf16.msra.mxu0 %v966
        %1003 = vmatprep.subr.bf16.mxu0 0
        %1004 = vmatpush1.bf16.msra.mxu0 %v967
        %1005 = vmatprep.subr.bf16.mxu0 0
        %1006 = vmatpush1.bf16.msra.mxu0 %v968
        %1007 = vmatprep.subr.bf16.mxu0 0
        %1008 = vmatpush1.bf16.msra.mxu0 %v969
        %1009 = vmatprep.subr.bf16.mxu0 0
        %1010 = vmatpush1.bf16.msra.mxu0 %v970
        %1011 = vmatprep.subr.bf16.mxu0 0
        %1012 = vmatpush1.bf16.msra.mxu0 %v971
        %1013 = vmatprep.subr.bf16.mxu0 0
        %1014 = vmatpush1.bf16.msra.mxu0 %v972
        %1015 = vmatprep.subr.bf16.mxu0 0
        %1016 = vmatpush1.bf16.msra.mxu0 %v973
        %1017 = vmatprep.subr.bf16.mxu0 0
        %1018 = vmatpush1.bf16.msra.mxu0 %v974
        %1019 = vmatprep.subr.bf16.mxu0 0
        %1020 = vmatpush1.bf16.msra.mxu0 %v975
        %1021 = vmatprep.subr.bf16.mxu0 0
        %1022 = vmatpush1.bf16.msra.mxu0 %v976
        %1023 = vmatprep.subr.bf16.mxu0 0
        %1024 = vmatpush1.bf16.msra.mxu0 %v977
        %1025 = vmatprep.subr.bf16.mxu0 0
        %1026 = vmatpush1.bf16.msra.mxu0 %v978
        %1027 = vmatprep.mubr.bf16.mxu0 %v891
        %1028 = vmatmul.mubr.bf16.gmra.mrb[0].mxu0 %v890
        %v1029 = vpop.f32.mrb[0].mxu0
        %v1030 = vadd.f32 %v897, %v1029
        %v1031 = vpop.f32.mrb[0].mxu0
        %v1032 = vpop.f32.mrb[0].mxu0
        %v1033 = vpop.f32.mrb[0].mxu0
        %1034 = vdwg.mxu0
        %v1035 = vld [vmem:[#allocation3 + $0x4] sm:$0x1]
        %v1036 = vld [vmem:[#allocation3 + $0x5] sm:$0x1]
        %v1037 = vrot.slane %v1030, 4
        %v1038 = vadd.f32 %v1030, %v1037
        %v1039 = vrot.slane %v1038, 2
        %v1040 = vadd.f32 %v1038, %v1039
        %v1041 = vrot.slane %v1040, 1
        %v1042 = vadd.f32 %v1040, %v1041
        %v1043 = vrcp.pop 8.0
        %v1044 = vmul.f32 %v1042, %v1043
        %v1045 = vsub.f32 %v1030, %v1044
        %v1046 = vmul.f32 %v1045, %v1045
        %v1047 = vrot.slane %v1046, 4
        %v1048 = vadd.f32 %v1046, %v1047
        %v1049 = vrot.slane %v1048, 2
        %v1050 = vadd.f32 %v1048, %v1049
        %v1051 = vrot.slane %v1050, 1
        %v1052 = vadd.f32 %v1050, %v1051
        %v1053 = vmul.f32 %v1052, %v1043
        %v1054 = vadd.f32 %v1053, 1e-05
        %v1055 = vrsqrt.pop %v1054
        %v1056 = vmul.f32 %v1035, %v1055
        %v1057 = vmul.f32 %v1044, %v1056
        %v1058 = vsub.f32 %v1036, %v1057
        %v1060 = vlaneseq
        %v1061 = vshrl.u32 %v1060, 7
        %v1062 = vsub.s32 0, %v1061
        %v1063 = vrot.slane %v1056, %v1062
        %v1065 = vmul.f32 %v1030, %v1063
        %v1067 = vlaneseq
        %v1068 = vshrl.u32 %v1067, 7
        %v1069 = vsub.s32 0, %v1068
        %v1070 = vrot.slane %v1058, %v1069
        %v1072 = vadd.f32 %v1065, %v1070
        %v1073 = vmax.f32 %v1072, 0.0
        %s1074 = scalar_lea.vmem %s549, 8 [#allocation2]
        %v1075 = vld [vmem:[%s1074] sm:$0xff]
        %s1076 = scalar_lea.vmem %s5, 128
        %v1077 = vld [vmem:[%s1076] sm:$0xff]
        %v1078 = vld [vmem:[%s1076 + $0x8] sm:$0xff]
        %v1079 = vld [vmem:[%s1076 + $0x10] sm:$0xff]
        %v1080 = vld [vmem:[%s1076 + $0x18] sm:$0xff]
        %v1081 = vld [vmem:[%s1076 + $0x20] sm:$0xff]
        %v1082 = vld [vmem:[%s1076 + $0x28] sm:$0xff]
        %v1083 = vld [vmem:[%s1076 + $0x30] sm:$0xff]
        %v1084 = vld [vmem:[%s1076 + $0x38] sm:$0xff]
        %v1085 = vld [vmem:[%s1076 + $0x40] sm:$0xff]
        %v1086 = vld [vmem:[%s1076 + $0x48] sm:$0xff]
        %v1087 = vld [vmem:[%s1076 + $0x50] sm:$0xff]
        %v1088 = vld [vmem:[%s1076 + $0x58] sm:$0xff]
        %v1089 = vld [vmem:[%s1076 + $0x60] sm:$0xff]
        %v1090 = vld [vmem:[%s1076 + $0x68] sm:$0xff]
        %v1091 = vld [vmem:[%s1076 + $0x70] sm:$0xff]
        %v1092 = vld [vmem:[%s1076 + $0x78] sm:$0xff]
        %v1093 = vpack.c.bf16 %v1075, %v1075
        %v1094 = vld [vmem:[#allocation3 + $0x6] sm:$0x3]
        %v1096 = vlaneseq
        %v1097 = vshrl.u32 %v1096, 7
        %v1098 = vsub.s32 0, %v1097
        %v1099 = vrot.slane %v1094, %v1098
        %v1100 = vlaneseq
        %v1101 = vshrl.u32 %v1100, 7
        %v1102 = vsub.s32 1, %v1101
        %v1103 = vrot.slane %v1094, %v1102
        %v1122 = vunpack.c.l.b16 %v1077
        %v1123 = vunpack.c.h.b16 %v1077
        %v1124 = vunpack.c.l.b16 %v1078
        %v1125 = vunpack.c.h.b16 %v1078
        %v1126 = vunpack.c.l.b16 %v1079
        %v1127 = vunpack.c.h.b16 %v1079
        %v1128 = vunpack.c.l.b16 %v1080
        %v1129 = vunpack.c.h.b16 %v1080
        %v1130 = vunpack.c.l.b16 %v1081
        %v1131 = vunpack.c.h.b16 %v1081
        %v1132 = vunpack.c.l.b16 %v1082
        %v1133 = vunpack.c.h.b16 %v1082
        %v1134 = vunpack.c.l.b16 %v1083
        %v1135 = vunpack.c.h.b16 %v1083
        %v1136 = vunpack.c.l.b16 %v1084
        %v1137 = vunpack.c.h.b16 %v1084
        %v1138 = vunpack.c.l.b16 %v1085
        %v1139 = vunpack.c.h.b16 %v1085
        %v1140 = vunpack.c.l.b16 %v1086
        %v1141 = vunpack.c.h.b16 %v1086
        %v1142 = vunpack.c.l.b16 %v1087
        %v1143 = vunpack.c.h.b16 %v1087
        %v1144 = vunpack.c.l.b16 %v1088
        %v1145 = vunpack.c.h.b16 %v1088
        %v1146 = vunpack.c.l.b16 %v1089
        %v1147 = vunpack.c.h.b16 %v1089
        %v1148 = vunpack.c.l.b16 %v1090
        %v1149 = vunpack.c.h.b16 %v1090
        %v1150 = vunpack.c.l.b16 %v1091
        %v1151 = vunpack.c.h.b16 %v1091
        %v1152 = vunpack.c.l.b16 %v1092
        %v1153 = vunpack.c.h.b16 %v1092
        %v1154 = vpack.c.b16 %v1124, %v1122
        %v1155 = vpack.c.b16 %v1125, %v1123
        %v1156 = vpack.c.b16 %v1128, %v1126
        %v1157 = vpack.c.b16 %v1129, %v1127
        %v1158 = vpack.c.b16 %v1132, %v1130
        %v1159 = vpack.c.b16 %v1133, %v1131
        %v1160 = vpack.c.b16 %v1136, %v1134
        %v1161 = vpack.c.b16 %v1137, %v1135
        %v1162 = vpack.c.b16 %v1140, %v1138
        %v1163 = vpack.c.b16 %v1141, %v1139
        %v1164 = vpack.c.b16 %v1144, %v1142
        %v1165 = vpack.c.b16 %v1145, %v1143
        %v1166 = vpack.c.b16 %v1148, %v1146
        %v1167 = vpack.c.b16 %v1149, %v1147
        %v1168 = vpack.c.b16 %v1152, %v1150
        %v1169 = vpack.c.b16 %v1153, %v1151
        %1186 = vmatprep.subr.bf16.mxu0 %v1155
        %1187 = vmatpush1.bf16.msra.mxu0 %v1154
        %1188 = vmatprep.subr.bf16.mxu0 %v1157
        %1189 = vmatpush1.bf16.msra.mxu0 %v1156
        %1190 = vmatprep.subr.bf16.mxu0 %v1159
        %1191 = vmatpush1.bf16.msra.mxu0 %v1158
        %1192 = vmatprep.subr.bf16.mxu0 %v1161
        %1193 = vmatpush1.bf16.msra.mxu0 %v1160
        %1194 = vmatprep.subr.bf16.mxu0 %v1163
        %1195 = vmatpush1.bf16.msra.mxu0 %v1162
        %1196 = vmatprep.subr.bf16.mxu0 %v1165
        %1197 = vmatpush1.bf16.msra.mxu0 %v1164
        %1198 = vmatprep.subr.bf16.mxu0 %v1167
        %1199 = vmatpush1.bf16.msra.mxu0 %v1166
        %1200 = vmatprep.subr.bf16.mxu0 %v1169
        %1201 = vmatpush1.bf16.msra.mxu0 %v1168
        %1202 = vmatprep.subr.bf16.mxu0 0
        %1203 = vmatpush1.bf16.msra.mxu0 0
        %1204 = vmatprep.subr.bf16.mxu0 0
        %1205 = vmatpush1.bf16.msra.mxu0 0
        %1206 = vmatprep.subr.bf16.mxu0 0
        %1207 = vmatpush1.bf16.msra.mxu0 0
        %1208 = vmatprep.subr.bf16.mxu0 0
        %1209 = vmatpush1.bf16.msra.mxu0 0
        %1210 = vmatprep.subr.bf16.mxu0 0
        %1211 = vmatpush1.bf16.msra.mxu0 0
        %1212 = vmatprep.subr.bf16.mxu0 0
        %1213 = vmatpush1.bf16.msra.mxu0 0
        %1214 = vmatprep.subr.bf16.mxu0 0
        %1215 = vmatpush1.bf16.msra.mxu0 0
        %1216 = vmatprep.subr.bf16.mxu0 0
        %1217 = vmatpush1.bf16.msra.mxu0 0
        %1218 = vmatprep.mubr.bf16.mxu0 0
        %1219 = vmatmul.mubr.bf16.gmra.mrb[0].mxu0 %v1093
        %v1220 = vpop.f32.mrb[0].mxu0
        %v1221 = vadd.f32 %v1099, %v1220
        %v1222 = vpop.f32.mrb[0].mxu0
        %v1223 = vadd.f32 %v1103, %v1222
        %v1224 = vpop.f32.mrb[0].mxu0
        %v1225 = vpop.f32.mrb[0].mxu0
        %1226 = vdwg.mxu0
        %v1227 = vmax.f32 %v1221, 0.0
        %v1228 = vmax.f32 %v1223, 0.0
        %s1229 = scalar_lea.vmem [#allocation5], 128
        %v1230 = vld [vmem:[%s1229] sm:$0xf]
        %v1231 = vld [vmem:[%s1229 + $0x4] sm:$0xf]
        %v1232 = vld [vmem:[%s1229 + $0x8] sm:$0xf]
        %v1233 = vld [vmem:[%s1229 + $0xc] sm:$0xf]
        %v1234 = vld [vmem:[%s1229 + $0x10] sm:$0xf]
        %v1235 = vld [vmem:[%s1229 + $0x14] sm:$0xf]
        %v1236 = vld [vmem:[%s1229 + $0x18] sm:$0xf]
        %v1237 = vld [vmem:[%s1229 + $0x1c] sm:$0xf]
        %v1238 = vld [vmem:[%s1229 + $0x20] sm:$0xf]
        %v1239 = vld [vmem:[%s1229 + $0x24] sm:$0xf]
        %v1240 = vld [vmem:[%s1229 + $0x28] sm:$0xf]
        %v1241 = vld [vmem:[%s1229 + $0x2c] sm:$0xf]
        %v1242 = vld [vmem:[%s1229 + $0x30] sm:$0xf]
        %v1243 = vld [vmem:[%s1229 + $0x34] sm:$0xf]
        %v1244 = vld [vmem:[%s1229 + $0x38] sm:$0xf]
        %v1245 = vld [vmem:[%s1229 + $0x3c] sm:$0xf]
        %v1246 = vld [vmem:[%s1229 + $0x40] sm:$0xf]
        %v1247 = vld [vmem:[%s1229 + $0x44] sm:$0xf]
        %v1248 = vld [vmem:[%s1229 + $0x48] sm:$0xf]
        %v1249 = vld [vmem:[%s1229 + $0x4c] sm:$0xf]
        %v1250 = vld [vmem:[%s1229 + $0x50] sm:$0xf]
        %v1251 = vld [vmem:[%s1229 + $0x54] sm:$0xf]
        %v1252 = vld [vmem:[%s1229 + $0x58] sm:$0xf]
        %v1253 = vld [vmem:[%s1229 + $0x5c] sm:$0xf]
        %v1254 = vld [vmem:[%s1229 + $0x60] sm:$0xf]
        %v1255 = vld [vmem:[%s1229 + $0x64] sm:$0xf]
        %v1256 = vld [vmem:[%s1229 + $0x68] sm:$0xf]
        %v1257 = vld [vmem:[%s1229 + $0x6c] sm:$0xf]
        %v1258 = vld [vmem:[%s1229 + $0x70] sm:$0xf]
        %v1259 = vld [vmem:[%s1229 + $0x74] sm:$0xf]
        %v1260 = vld [vmem:[%s1229 + $0x78] sm:$0xf]
        %v1261 = vld [vmem:[%s1229 + $0x7c] sm:$0xf]
        %v1262 = vpack.c.bf16 %v1227, %v1227
        %v1263 = vpack.c.bf16 %v1228, %v1228
        %v1264 = vld [vmem:[#allocation3 + $0x8] sm:$0x1]
        %v1266 = vlaneseq
        %v1267 = vshrl.u32 %v1266, 7
        %v1268 = vsub.s32 0, %v1267
        %v1269 = vrot.slane %v1264, %v1268
        %v1303 = vunpack.c.l.b16 %v1230
        %v1304 = vunpack.c.l.b16 %v1231
        %v1305 = vunpack.c.l.b16 %v1232
        %v1306 = vunpack.c.l.b16 %v1233
        %v1307 = vunpack.c.l.b16 %v1234
        %v1308 = vunpack.c.l.b16 %v1235
        %v1309 = vunpack.c.l.b16 %v1236
        %v1310 = vunpack.c.l.b16 %v1237
        %v1311 = vunpack.c.l.b16 %v1238
        %v1312 = vunpack.c.l.b16 %v1239
        %v1313 = vunpack.c.l.b16 %v1240
        %v1314 = vunpack.c.l.b16 %v1241
        %v1315 = vunpack.c.l.b16 %v1242
        %v1316 = vunpack.c.l.b16 %v1243
        %v1317 = vunpack.c.l.b16 %v1244
        %v1318 = vunpack.c.l.b16 %v1245
        %v1319 = vunpack.c.l.b16 %v1246
        %v1320 = vunpack.c.l.b16 %v1247
        %v1321 = vunpack.c.l.b16 %v1248
        %v1322 = vunpack.c.l.b16 %v1249
        %v1323 = vunpack.c.l.b16 %v1250
        %v1324 = vunpack.c.l.b16 %v1251
        %v1325 = vunpack.c.l.b16 %v1252
        %v1326 = vunpack.c.l.b16 %v1253
        %v1327 = vunpack.c.l.b16 %v1254
        %v1328 = vunpack.c.l.b16 %v1255
        %v1329 = vunpack.c.l.b16 %v1256
        %v1330 = vunpack.c.l.b16 %v1257
        %v1331 = vunpack.c.l.b16 %v1258
        %v1332 = vunpack.c.l.b16 %v1259
        %v1333 = vunpack.c.l.b16 %v1260
        %v1334 = vunpack.c.l.b16 %v1261
        %v1335 = vpack.c.b16 %v1304, %v1303
        %v1336 = vpack.c.b16 %v1306, %v1305
        %v1337 = vpack.c.b16 %v1308, %v1307
        %v1338 = vpack.c.b16 %v1310, %v1309
        %v1339 = vpack.c.b16 %v1312, %v1311
        %v1340 = vpack.c.b16 %v1314, %v1313
        %v1341 = vpack.c.b16 %v1316, %v1315
        %v1342 = vpack.c.b16 %v1318, %v1317
        %v1343 = vpack.c.b16 %v1320, %v1319
        %v1344 = vpack.c.b16 %v1322, %v1321
        %v1345 = vpack.c.b16 %v1324, %v1323
        %v1346 = vpack.c.b16 %v1326, %v1325
        %v1347 = vpack.c.b16 %v1328, %v1327
        %v1348 = vpack.c.b16 %v1330, %v1329
        %v1349 = vpack.c.b16 %v1332, %v1331
        %v1350 = vpack.c.b16 %v1334, %v1333
        %1367 = vmatprep.subr.bf16.mxu0 0
        %1368 = vmatpush1.bf16.msra.mxu0 %v1335
        %1369 = vmatprep.subr.bf16.mxu0 0
        %1370 = vmatpush1.bf16.msra.mxu0 %v1336
        %1371 = vmatprep.subr.bf16.mxu0 0
        %1372 = vmatpush1.bf16.msra.mxu0 %v1337
        %1373 = vmatprep.subr.bf16.mxu0 0
        %1374 = vmatpush1.bf16.msra.mxu0 %v1338
        %1375 = vmatprep.subr.bf16.mxu0 0
        %1376 = vmatpush1.bf16.msra.mxu0 %v1339
        %1377 = vmatprep.subr.bf16.mxu0 0
        %1378 = vmatpush1.bf16.msra.mxu0 %v1340
        %1379 = vmatprep.subr.bf16.mxu0 0
        %1380 = vmatpush1.bf16.msra.mxu0 %v1341
        %1381 = vmatprep.subr.bf16.mxu0 0
        %1382 = vmatpush1.bf16.msra.mxu0 %v1342
        %1383 = vmatprep.subr.bf16.mxu0 0
        %1384 = vmatpush1.bf16.msra.mxu0 %v1343
        %1385 = vmatprep.subr.bf16.mxu0 0
        %1386 = vmatpush1.bf16.msra.mxu0 %v1344
        %1387 = vmatprep.subr.bf16.mxu0 0
        %1388 = vmatpush1.bf16.msra.mxu0 %v1345
        %1389 = vmatprep.subr.bf16.mxu0 0
        %1390 = vmatpush1.bf16.msra.mxu0 %v1346
        %1391 = vmatprep.subr.bf16.mxu0 0
        %1392 = vmatpush1.bf16.msra.mxu0 %v1347
        %1393 = vmatprep.subr.bf16.mxu0 0
        %1394 = vmatpush1.bf16.msra.mxu0 %v1348
        %1395 = vmatprep.subr.bf16.mxu0 0
        %1396 = vmatpush1.bf16.msra.mxu0 %v1349
        %1397 = vmatprep.subr.bf16.mxu0 0
        %1398 = vmatpush1.bf16.msra.mxu0 %v1350
        %1399 = vmatprep.mubr.bf16.mxu0 %v1263
        %1400 = vmatmul.mubr.bf16.gmra.mrb[0].mxu0 %v1262
        %v1401 = vpop.f32.mrb[0].mxu0
        %v1402 = vadd.f32 %v1269, %v1401
        %v1403 = vpop.f32.mrb[0].mxu0
        %v1404 = vpop.f32.mrb[0].mxu0
        %v1405 = vpop.f32.mrb[0].mxu0
        %1406 = vdwg.mxu0
        %v1407 = vld [vmem:[#allocation3 + $0x9] sm:$0x1]
        %v1408 = vld [vmem:[#allocation3 + $0xa] sm:$0x1]
        %v1409 = vrot.slane %v1402, 4
        %v1410 = vadd.f32 %v1402, %v1409
        %v1411 = vrot.slane %v1410, 2
        %v1412 = vadd.f32 %v1410, %v1411
        %v1413 = vrot.slane %v1412, 1
        %v1414 = vadd.f32 %v1412, %v1413
        %v1415 = vmul.f32 %v1414, %v1043
        %v1416 = vsub.f32 %v1402, %v1415
        %v1417 = vmul.f32 %v1416, %v1416
        %v1418 = vrot.slane %v1417, 4
        %v1419 = vadd.f32 %v1417, %v1418
        %v1420 = vrot.slane %v1419, 2
        %v1421 = vadd.f32 %v1419, %v1420
        %v1422 = vrot.slane %v1421, 1
        %v1423 = vadd.f32 %v1421, %v1422
        %v1424 = vmul.f32 %v1423, %v1043
        %v1425 = vadd.f32 %v1424, 1e-05
        %v1426 = vrsqrt.pop %v1425
        %v1427 = vmul.f32 %v1407, %v1426
        %v1428 = vmul.f32 %v1415, %v1427
        %v1429 = vsub.f32 %v1408, %v1428
        %v1431 = vlaneseq
        %v1432 = vshrl.u32 %v1431, 7
        %v1433 = vsub.s32 0, %v1432
        %v1434 = vrot.slane %v1427, %v1433
        %v1436 = vmul.f32 %v1402, %v1434
        %v1438 = vlaneseq
        %v1439 = vshrl.u32 %v1438, 7
        %v1440 = vsub.s32 0, %v1439
        %v1441 = vrot.slane %v1429, %v1440
        %v1443 = vadd.f32 %v1436, %v1441
        %v1444 = vmax.f32 %v1443, 0.0
        %v1445 = vadd.f32 %v1073, %v1444
        %s1446 = scalar_lea.vmem %s549, 16 [#allocation2]
        %v1447 = vld [vmem:[%s1446] sm:$0xff]
        %s1448 = scalar_lea.vmem %s5, 256
        %v1449 = vld [vmem:[%s1448] sm:$0xff]
        %v1450 = vld [vmem:[%s1448 + $0x8] sm:$0xff]
        %v1451 = vld [vmem:[%s1448 + $0x10] sm:$0xff]
        %v1452 = vld [vmem:[%s1448 + $0x18] sm:$0xff]
        %v1453 = vld [vmem:[%s1448 + $0x20] sm:$0xff]
        %v1454 = vld [vmem:[%s1448 + $0x28] sm:$0xff]
        %v1455 = vld [vmem:[%s1448 + $0x30] sm:$0xff]
        %v1456 = vld [vmem:[%s1448 + $0x38] sm:$0xff]
        %v1457 = vld [vmem:[%s1448 + $0x40] sm:$0xff]
        %v1458 = vld [vmem:[%s1448 + $0x48] sm:$0xff]
        %v1459 = vld [vmem:[%s1448 + $0x50] sm:$0xff]
        %v1460 = vld [vmem:[%s1448 + $0x58] sm:$0xff]
        %v1461 = vld [vmem:[%s1448 + $0x60] sm:$0xff]
        %v1462 = vld [vmem:[%s1448 + $0x68] sm:$0xff]
        %v1463 = vld [vmem:[%s1448 + $0x70] sm:$0xff]
        %v1464 = vld [vmem:[%s1448 + $0x78] sm:$0xff]
        %v1465 = vpack.c.bf16 %v1447, %v1447
        %v1466 = vld [vmem:[#allocation3 + $0xb] sm:$0x3]
        %v1468 = vlaneseq
        %v1469 = vshrl.u32 %v1468, 7
        %v1470 = vsub.s32 0, %v1469
        %v1471 = vrot.slane %v1466, %v1470
        %v1472 = vlaneseq
        %v1473 = vshrl.u32 %v1472, 7
        %v1474 = vsub.s32 1, %v1473
        %v1475 = vrot.slane %v1466, %v1474
        %v1494 = vunpack.c.l.b16 %v1449
        %v1495 = vunpack.c.h.b16 %v1449
        %v1496 = vunpack.c.l.b16 %v1450
        %v1497 = vunpack.c.h.b16 %v1450
        %v1498 = vunpack.c.l.b16 %v1451
        %v1499 = vunpack.c.h.b16 %v1451
        %v1500 = vunpack.c.l.b16 %v1452
        %v1501 = vunpack.c.h.b16 %v1452
        %v1502 = vunpack.c.l.b16 %v1453
        %v1503 = vunpack.c.h.b16 %v1453
        %v1504 = vunpack.c.l.b16 %v1454
        %v1505 = vunpack.c.h.b16 %v1454
        %v1506 = vunpack.c.l.b16 %v1455
        %v1507 = vunpack.c.h.b16 %v1455
        %v1508 = vunpack.c.l.b16 %v1456
        %v1509 = vunpack.c.h.b16 %v1456
        %v1510 = vunpack.c.l.b16 %v1457
        %v1511 = vunpack.c.h.b16 %v1457
        %v1512 = vunpack.c.l.b16 %v1458
        %v1513 = vunpack.c.h.b16 %v1458
        %v1514 = vunpack.c.l.b16 %v1459
        %v1515 = vunpack.c.h.b16 %v1459
        %v1516 = vunpack.c.l.b16 %v1460
        %v1517 = vunpack.c.h.b16 %v1460
        %v1518 = vunpack.c.l.b16 %v1461
        %v1519 = vunpack.c.h.b16 %v1461
        %v1520 = vunpack.c.l.b16 %v1462
        %v1521 = vunpack.c.h.b16 %v1462
        %v1522 = vunpack.c.l.b16 %v1463
        %v1523 = vunpack.c.h.b16 %v1463
        %v1524 = vunpack.c.l.b16 %v1464
        %v1525 = vunpack.c.h.b16 %v1464
        %v1526 = vpack.c.b16 %v1496, %v1494
        %v1527 = vpack.c.b16 %v1497, %v1495
        %v1528 = vpack.c.b16 %v1500, %v1498
        %v1529 = vpack.c.b16 %v1501, %v1499
        %v1530 = vpack.c.b16 %v1504, %v1502
        %v1531 = vpack.c.b16 %v1505, %v1503
        %v1532 = vpack.c.b16 %v1508, %v1506
        %v1533 = vpack.c.b16 %v1509, %v1507
        %v1534 = vpack.c.b16 %v1512, %v1510
        %v1535 = vpack.c.b16 %v1513, %v1511
        %v1536 = vpack.c.b16 %v1516, %v1514
        %v1537 = vpack.c.b16 %v1517, %v1515
        %v1538 = vpack.c.b16 %v1520, %v1518
        %v1539 = vpack.c.b16 %v1521, %v1519
        %v1540 = vpack.c.b16 %v1524, %v1522
        %v1541 = vpack.c.b16 %v1525, %v1523
        %1558 = vmatprep.subr.bf16.mxu0 %v1527
        %1559 = vmatpush1.bf16.msra.mxu0 %v1526
        %1560 = vmatprep.subr.bf16.mxu0 %v1529
        %1561 = vmatpush1.bf16.msra.mxu0 %v1528
        %1562 = vmatprep.subr.bf16.mxu0 %v1531
        %1563 = vmatpush1.bf16.msra.mxu0 %v1530
        %1564 = vmatprep.subr.bf16.mxu0 %v1533
        %1565 = vmatpush1.bf16.msra.mxu0 %v1532
        %1566 = vmatprep.subr.bf16.mxu0 %v1535
        %1567 = vmatpush1.bf16.msra.mxu0 %v1534
        %1568 = vmatprep.subr.bf16.mxu0 %v1537
        %1569 = vmatpush1.bf16.msra.mxu0 %v1536
        %1570 = vmatprep.subr.bf16.mxu0 %v1539
        %1571 = vmatpush1.bf16.msra.mxu0 %v1538
        %1572 = vmatprep.subr.bf16.mxu0 %v1541
        %1573 = vmatpush1.bf16.msra.mxu0 %v1540
        %1574 = vmatprep.subr.bf16.mxu0 0
        %1575 = vmatpush1.bf16.msra.mxu0 0
        %1576 = vmatprep.subr.bf16.mxu0 0
        %1577 = vmatpush1.bf16.msra.mxu0 0
        %1578 = vmatprep.subr.bf16.mxu0 0
        %1579 = vmatpush1.bf16.msra.mxu0 0
        %1580 = vmatprep.subr.bf16.mxu0 0
        %1581 = vmatpush1.bf16.msra.mxu0 0
        %1582 = vmatprep.subr.bf16.mxu0 0
        %1583 = vmatpush1.bf16.msra.mxu0 0
        %1584 = vmatprep.subr.bf16.mxu0 0
        %1585 = vmatpush1.bf16.msra.mxu0 0
        %1586 = vmatprep.subr.bf16.mxu0 0
        %1587 = vmatpush1.bf16.msra.mxu0 0
        %1588 = vmatprep.subr.bf16.mxu0 0
        %1589 = vmatpush1.bf16.msra.mxu0 0
        %1590 = vmatprep.mubr.bf16.mxu0 0
        %1591 = vmatmul.mubr.bf16.gmra.mrb[0].mxu0 %v1465
        %v1592 = vpop.f32.mrb[0].mxu0
        %v1593 = vadd.f32 %v1471, %v1592
        %v1594 = vpop.f32.mrb[0].mxu0
        %v1595 = vadd.f32 %v1475, %v1594
        %v1596 = vpop.f32.mrb[0].mxu0
        %v1597 = vpop.f32.mrb[0].mxu0
        %1598 = vdwg.mxu0
        %v1599 = vmax.f32 %v1593, 0.0
        %v1600 = vmax.f32 %v1595, 0.0
        %s1601 = scalar_lea.vmem [#allocation5], 256
        %v1602 = vld [vmem:[%s1601] sm:$0xf]
        %v1603 = vld [vmem:[%s1601 + $0x4] sm:$0xf]
        %v1604 = vld [vmem:[%s1601 + $0x8] sm:$0xf]
        %v1605 = vld [vmem:[%s1601 + $0xc] sm:$0xf]
        %v1606 = vld [vmem:[%s1601 + $0x10] sm:$0xf]
        %v1607 = vld [vmem:[%s1601 + $0x14] sm:$0xf]
        %v1608 = vld [vmem:[%s1601 + $0x18] sm:$0xf]
        %v1609 = vld [vmem:[%s1601 + $0x1c] sm:$0xf]
        %v1610 = vld [vmem:[%s1601 + $0x20] sm:$0xf]
        %v1611 = vld [vmem:[%s1601 + $0x24] sm:$0xf]
        %v1612 = vld [vmem:[%s1601 + $0x28] sm:$0xf]
        %v1613 = vld [vmem:[%s1601 + $0x2c] sm:$0xf]
        %v1614 = vld [vmem:[%s1601 + $0x30] sm:$0xf]
        %v1615 = vld [vmem:[%s1601 + $0x34] sm:$0xf]
        %v1616 = vld [vmem:[%s1601 + $0x38] sm:$0xf]
        %v1617 = vld [vmem:[%s1601 + $0x3c] sm:$0xf]
        %v1618 = vld [vmem:[%s1601 + $0x40] sm:$0xf]
        %v1619 = vld [vmem:[%s1601 + $0x44] sm:$0xf]
        %v1620 = vld [vmem:[%s1601 + $0x48] sm:$0xf]
        %v1621 = vld [vmem:[%s1601 + $0x4c] sm:$0xf]
        %v1622 = vld [vmem:[%s1601 + $0x50] sm:$0xf]
        %v1623 = vld [vmem:[%s1601 + $0x54] sm:$0xf]
        %v1624 = vld [vmem:[%s1601 + $0x58] sm:$0xf]
        %v1625 = vld [vmem:[%s1601 + $0x5c] sm:$0xf]
        %v1626 = vld [vmem:[%s1601 + $0x60] sm:$0xf]
        %v1627 = vld [vmem:[%s1601 + $0x64] sm:$0xf]
        %v1628 = vld [vmem:[%s1601 + $0x68] sm:$0xf]
        %v1629 = vld [vmem:[%s1601 + $0x6c] sm:$0xf]
        %v1630 = vld [vmem:[%s1601 + $0x70] sm:$0xf]
        %v1631 = vld [vmem:[%s1601 + $0x74] sm:$0xf]
        %v1632 = vld [vmem:[%s1601 + $0x78] sm:$0xf]
        %v1633 = vld [vmem:[%s1601 + $0x7c] sm:$0xf]
        %v1634 = vpack.c.bf16 %v1599, %v1599
        %v1635 = vpack.c.bf16 %v1600, %v1600
        %v1636 = vld [vmem:[#allocation3 + $0xd] sm:$0x1]
        %v1638 = vlaneseq
        %v1639 = vshrl.u32 %v1638, 7
        %v1640 = vsub.s32 0, %v1639
        %v1641 = vrot.slane %v1636, %v1640
        %v1675 = vunpack.c.l.b16 %v1602
        %v1676 = vunpack.c.l.b16 %v1603
        %v1677 = vunpack.c.l.b16 %v1604
        %v1678 = vunpack.c.l.b16 %v1605
        %v1679 = vunpack.c.l.b16 %v1606
        %v1680 = vunpack.c.l.b16 %v1607
        %v1681 = vunpack.c.l.b16 %v1608
        %v1682 = vunpack.c.l.b16 %v1609
        %v1683 = vunpack.c.l.b16 %v1610
        %v1684 = vunpack.c.l.b16 %v1611
        %v1685 = vunpack.c.l.b16 %v1612
        %v1686 = vunpack.c.l.b16 %v1613
        %v1687 = vunpack.c.l.b16 %v1614
        %v1688 = vunpack.c.l.b16 %v1615
        %v1689 = vunpack.c.l.b16 %v1616
        %v1690 = vunpack.c.l.b16 %v1617
        %v1691 = vunpack.c.l.b16 %v1618
        %v1692 = vunpack.c.l.b16 %v1619
        %v1693 = vunpack.c.l.b16 %v1620
        %v1694 = vunpack.c.l.b16 %v1621
        %v1695 = vunpack.c.l.b16 %v1622
        %v1696 = vunpack.c.l.b16 %v1623
        %v1697 = vunpack.c.l.b16 %v1624
        %v1698 = vunpack.c.l.b16 %v1625
        %v1699 = vunpack.c.l.b16 %v1626
        %v1700 = vunpack.c.l.b16 %v1627
        %v1701 = vunpack.c.l.b16 %v1628
        %v1702 = vunpack.c.l.b16 %v1629
        %v1703 = vunpack.c.l.b16 %v1630
        %v1704 = vunpack.c.l.b16 %v1631
        %v1705 = vunpack.c.l.b16 %v1632
        %v1706 = vunpack.c.l.b16 %v1633
        %v1707 = vpack.c.b16 %v1676, %v1675
        %v1708 = vpack.c.b16 %v1678, %v1677
        %v1709 = vpack.c.b16 %v1680, %v1679
        %v1710 = vpack.c.b16 %v1682, %v1681
        %v1711 = vpack.c.b16 %v1684, %v1683
        %v1712 = vpack.c.b16 %v1686, %v1685
        %v1713 = vpack.c.b16 %v1688, %v1687
        %v1714 = vpack.c.b16 %v1690, %v1689
        %v1715 = vpack.c.b16 %v1692, %v1691
        %v1716 = vpack.c.b16 %v1694, %v1693
        %v1717 = vpack.c.b16 %v1696, %v1695
        %v1718 = vpack.c.b16 %v1698, %v1697
        %v1719 = vpack.c.b16 %v1700, %v1699
        %v1720 = vpack.c.b16 %v1702, %v1701
        %v1721 = vpack.c.b16 %v1704, %v1703
        %v1722 = vpack.c.b16 %v1706, %v1705
        %1739 = vmatprep.subr.bf16.mxu0 0
        %1740 = vmatpush1.bf16.msra.mxu0 %v1707
        %1741 = vmatprep.subr.bf16.mxu0 0
        %1742 = vmatpush1.bf16.msra.mxu0 %v1708
        %1743 = vmatprep.subr.bf16.mxu0 0
        %1744 = vmatpush1.bf16.msra.mxu0 %v1709
        %1745 = vmatprep.subr.bf16.mxu0 0
        %1746 = vmatpush1.bf16.msra.mxu0 %v1710
        %1747 = vmatprep.subr.bf16.mxu0 0
        %1748 = vmatpush1.bf16.msra.mxu0 %v1711
        %1749 = vmatprep.subr.bf16.mxu0 0
        %1750 = vmatpush1.bf16.msra.mxu0 %v1712
        %1751 = vmatprep.subr.bf16.mxu0 0
        %1752 = vmatpush1.bf16.msra.mxu0 %v1713
        %1753 = vmatprep.subr.bf16.mxu0 0
        %1754 = vmatpush1.bf16.msra.mxu0 %v1714
        %1755 = vmatprep.subr.bf16.mxu0 0
        %1756 = vmatpush1.bf16.msra.mxu0 %v1715
        %1757 = vmatprep.subr.bf16.mxu0 0
        %1758 = vmatpush1.bf16.msra.mxu0 %v1716
        %1759 = vmatprep.subr.bf16.mxu0 0
        %1760 = vmatpush1.bf16.msra.mxu0 %v1717
        %1761 = vmatprep.subr.bf16.mxu0 0
        %1762 = vmatpush1.bf16.msra.mxu0 %v1718
        %1763 = vmatprep.subr.bf16.mxu0 0
        %1764 = vmatpush1.bf16.msra.mxu0 %v1719
        %1765 = vmatprep.subr.bf16.mxu0 0
        %1766 = vmatpush1.bf16.msra.mxu0 %v1720
        %1767 = vmatprep.subr.bf16.mxu0 0
        %1768 = vmatpush1.bf16.msra.mxu0 %v1721
        %1769 = vmatprep.subr.bf16.mxu0 0
        %1770 = vmatpush1.bf16.msra.mxu0 %v1722
        %1771 = vmatprep.mubr.bf16.mxu0 %v1635
        %1772 = vmatmul.mubr.bf16.gmra.mrb[0].mxu0 %v1634
        %v1773 = vpop.f32.mrb[0].mxu0
        %v1774 = vadd.f32 %v1641, %v1773
        %v1775 = vpop.f32.mrb[0].mxu0
        %v1776 = vpop.f32.mrb[0].mxu0
        %v1777 = vpop.f32.mrb[0].mxu0
        %1778 = vdwg.mxu0
        %v1779 = vld [vmem:[#allocation3 + $0xe] sm:$0x1]
        %v1780 = vld [vmem:[#allocation3 + $0xf] sm:$0x1]
        %v1781 = vrot.slane %v1774, 4
        %v1782 = vadd.f32 %v1774, %v1781
        %v1783 = vrot.slane %v1782, 2
        %v1784 = vadd.f32 %v1782, %v1783
        %v1785 = vrot.slane %v1784, 1
        %v1786 = vadd.f32 %v1784, %v1785
        %v1787 = vmul.f32 %v1786, %v1043
        %v1788 = vsub.f32 %v1774, %v1787
        %v1789 = vmul.f32 %v1788, %v1788
        %v1790 = vrot.slane %v1789, 4
        %v1791 = vadd.f32 %v1789, %v1790
        %v1792 = vrot.slane %v1791, 2
        %v1793 = vadd.f32 %v1791, %v1792
        %v1794 = vrot.slane %v1793, 1
        %v1795 = vadd.f32 %v1793, %v1794
        %v1796 = vmul.f32 %v1795, %v1043
        %v1797 = vadd.f32 %v1796, 1e-05
        %v1798 = vrsqrt.pop %v1797
        %v1799 = vmul.f32 %v1779, %v1798
        %v1800 = vmul.f32 %v1787, %v1799
        %v1801 = vsub.f32 %v1780, %v1800
        %v1803 = vlaneseq
        %v1804 = vshrl.u32 %v1803, 7
        %v1805 = vsub.s32 0, %v1804
        %v1806 = vrot.slane %v1799, %v1805
        %v1808 = vmul.f32 %v1774, %v1806
        %v1810 = vlaneseq
        %v1811 = vshrl.u32 %v1810, 7
        %v1812 = vsub.s32 0, %v1811
        %v1813 = vrot.slane %v1801, %v1812
        %v1815 = vadd.f32 %v1808, %v1813
        %v1816 = vmax.f32 %v1815, 0.0
        %v1817 = vadd.f32 %v1445, %v1816
        %s1818 = scalar_lea.vmem %s549, 24 [#allocation2]
        %v1819 = vld [vmem:[%s1818] sm:$0xff]
        %s1820 = scalar_lea.vmem %s5, 384
        %v1821 = vld [vmem:[%s1820] sm:$0xff]
        %v1822 = vld [vmem:[%s1820 + $0x8] sm:$0xff]
        %v1823 = vld [vmem:[%s1820 + $0x10] sm:$0xff]
        %v1824 = vld [vmem:[%s1820 + $0x18] sm:$0xff]
        %v1825 = vld [vmem:[%s1820 + $0x20] sm:$0xff]
        %v1826 = vld [vmem:[%s1820 + $0x28] sm:$0xff]
        %v1827 = vld [vmem:[%s1820 + $0x30] sm:$0xff]
        %v1828 = vld [vmem:[%s1820 + $0x38] sm:$0xff]
        %v1829 = vld [vmem:[%s1820 + $0x40] sm:$0xff]
        %v1830 = vld [vmem:[%s1820 + $0x48] sm:$0xff]
        %v1831 = vld [vmem:[%s1820 + $0x50] sm:$0xff]
        %v1832 = vld [vmem:[%s1820 + $0x58] sm:$0xff]
        %v1833 = vld [vmem:[%s1820 + $0x60] sm:$0xff]
        %v1834 = vld [vmem:[%s1820 + $0x68] sm:$0xff]
        %v1835 = vld [vmem:[%s1820 + $0x70] sm:$0xff]
        %v1836 = vld [vmem:[%s1820 + $0x78] sm:$0xff]
        %v1837 = vpack.c.bf16 %v1819, %v1819
        %v1838 = vld [vmem:[#allocation3 + $0x10] sm:$0x3]
        %v1840 = vlaneseq
        %v1841 = vshrl.u32 %v1840, 7
        %v1842 = vsub.s32 0, %v1841
        %v1843 = vrot.slane %v1838, %v1842
        %v1844 = vlaneseq
        %v1845 = vshrl.u32 %v1844, 7
        %v1846 = vsub.s32 1, %v1845
        %v1847 = vrot.slane %v1838, %v1846
        %v1866 = vunpack.c.l.b16 %v1821
        %v1867 = vunpack.c.h.b16 %v1821
        %v1868 = vunpack.c.l.b16 %v1822
        %v1869 = vunpack.c.h.b16 %v1822
        %v1870 = vunpack.c.l.b16 %v1823
        %v1871 = vunpack.c.h.b16 %v1823
        %v1872 = vunpack.c.l.b16 %v1824
        %v1873 = vunpack.c.h.b16 %v1824
        %v1874 = vunpack.c.l.b16 %v1825
        %v1875 = vunpack.c.h.b16 %v1825
        %v1876 = vunpack.c.l.b16 %v1826
        %v1877 = vunpack.c.h.b16 %v1826
        %v1878 = vunpack.c.l.b16 %v1827
        %v1879 = vunpack.c.h.b16 %v1827
        %v1880 = vunpack.c.l.b16 %v1828
        %v1881 = vunpack.c.h.b16 %v1828
        %v1882 = vunpack.c.l.b16 %v1829
        %v1883 = vunpack.c.h.b16 %v1829
        %v1884 = vunpack.c.l.b16 %v1830
        %v1885 = vunpack.c.h.b16 %v1830
        %v1886 = vunpack.c.l.b16 %v1831
        %v1887 = vunpack.c.h.b16 %v1831
        %v1888 = vunpack.c.l.b16 %v1832
        %v1889 = vunpack.c.h.b16 %v1832
        %v1890 = vunpack.c.l.b16 %v1833
        %v1891 = vunpack.c.h.b16 %v1833
        %v1892 = vunpack.c.l.b16 %v1834
        %v1893 = vunpack.c.h.b16 %v1834
        %v1894 = vunpack.c.l.b16 %v1835
        %v1895 = vunpack.c.h.b16 %v1835
        %v1896 = vunpack.c.l.b16 %v1836
        %v1897 = vunpack.c.h.b16 %v1836
        %v1898 = vpack.c.b16 %v1868, %v1866
        %v1899 = vpack.c.b16 %v1869, %v1867
        %v1900 = vpack.c.b16 %v1872, %v1870
        %v1901 = vpack.c.b16 %v1873, %v1871
        %v1902 = vpack.c.b16 %v1876, %v1874
        %v1903 = vpack.c.b16 %v1877, %v1875
        %v1904 = vpack.c.b16 %v1880, %v1878
        %v1905 = vpack.c.b16 %v1881, %v1879
        %v1906 = vpack.c.b16 %v1884, %v1882
        %v1907 = vpack.c.b16 %v1885, %v1883
        %v1908 = vpack.c.b16 %v1888, %v1886
        %v1909 = vpack.c.b16 %v1889, %v1887
        %v1910 = vpack.c.b16 %v1892, %v1890
        %v1911 = vpack.c.b16 %v1893, %v1891
        %v1912 = vpack.c.b16 %v1896, %v1894
        %v1913 = vpack.c.b16 %v1897, %v1895
        %1930 = vmatprep.subr.bf16.mxu0 %v1899
        %1931 = vmatpush1.bf16.msra.mxu0 %v1898
        %1932 = vmatprep.subr.bf16.mxu0 %v1901
        %1933 = vmatpush1.bf16.msra.mxu0 %v1900
        %1934 = vmatprep.subr.bf16.mxu0 %v1903
        %1935 = vmatpush1.bf16.msra.mxu0 %v1902
        %1936 = vmatprep.subr.bf16.mxu0 %v1905
        %1937 = vmatpush1.bf16.msra.mxu0 %v1904
        %1938 = vmatprep.subr.bf16.mxu0 %v1907
        %1939 = vmatpush1.bf16.msra.mxu0 %v1906
        %1940 = vmatprep.subr.bf16.mxu0 %v1909
        %1941 = vmatpush1.bf16.msra.mxu0 %v1908
        %1942 = vmatprep.subr.bf16.mxu0 %v1911
        %1943 = vmatpush1.bf16.msra.mxu0 %v1910
        %1944 = vmatprep.subr.bf16.mxu0 %v1913
        %1945 = vmatpush1.bf16.msra.mxu0 %v1912
        %1946 = vmatprep.subr.bf16.mxu0 0
        %1947 = vmatpush1.bf16.msra.mxu0 0
        %1948 = vmatprep.subr.bf16.mxu0 0
        %1949 = vmatpush1.bf16.msra.mxu0 0
        %1950 = vmatprep.subr.bf16.mxu0 0
        %1951 = vmatpush1.bf16.msra.mxu0 0
        %1952 = vmatprep.subr.bf16.mxu0 0
        %1953 = vmatpush1.bf16.msra.mxu0 0
        %1954 = vmatprep.subr.bf16.mxu0 0
        %1955 = vmatpush1.bf16.msra.mxu0 0
        %1956 = vmatprep.subr.bf16.mxu0 0
        %1957 = vmatpush1.bf16.msra.mxu0 0
        %1958 = vmatprep.subr.bf16.mxu0 0
        %1959 = vmatpush1.bf16.msra.mxu0 0
        %1960 = vmatprep.subr.bf16.mxu0 0
        %1961 = vmatpush1.bf16.msra.mxu0 0
        %1962 = vmatprep.mubr.bf16.mxu0 0
        %1963 = vmatmul.mubr.bf16.gmra.mrb[0].mxu0 %v1837
        %v1964 = vpop.f32.mrb[0].mxu0
        %v1965 = vadd.f32 %v1843, %v1964
        %v1966 = vpop.f32.mrb[0].mxu0
        %v1967 = vadd.f32 %v1847, %v1966
        %v1968 = vpop.f32.mrb[0].mxu0
        %v1969 = vpop.f32.mrb[0].mxu0
        %1970 = vdwg.mxu0
        %v1971 = vmax.f32 %v1965, 0.0
        %v1972 = vmax.f32 %v1967, 0.0
        %s1973 = scalar_lea.vmem [#allocation5], 384
        %v1974 = vld [vmem:[%s1973] sm:$0xf]
        %v1975 = vld [vmem:[%s1973 + $0x4] sm:$0xf]
        %v1976 = vld [vmem:[%s1973 + $0x8] sm:$0xf]
        %v1977 = vld [vmem:[%s1973 + $0xc] sm:$0xf]
        %v1978 = vld [vmem:[%s1973 + $0x10] sm:$0xf]
        %v1979 = vld [vmem:[%s1973 + $0x14] sm:$0xf]
        %v1980 = vld [vmem:[%s1973 + $0x18] sm:$0xf]
        %v1981 = vld [vmem:[%s1973 + $0x1c] sm:$0xf]
        %v1982 = vld [vmem:[%s1973 + $0x20] sm:$0xf]
        %v1983 = vld [vmem:[%s1973 + $0x24] sm:$0xf]
        %v1984 = vld [vmem:[%s1973 + $0x28] sm:$0xf]
        %v1985 = vld [vmem:[%s1973 + $0x2c] sm:$0xf]
        %v1986 = vld [vmem:[%s1973 + $0x30] sm:$0xf]
        %v1987 = vld [vmem:[%s1973 + $0x34] sm:$0xf]
        %v1988 = vld [vmem:[%s1973 + $0x38] sm:$0xf]
        %v1989 = vld [vmem:[%s1973 + $0x3c] sm:$0xf]
        %v1990 = vld [vmem:[%s1973 + $0x40] sm:$0xf]
        %v1991 = vld [vmem:[%s1973 + $0x44] sm:$0xf]
        %v1992 = vld [vmem:[%s1973 + $0x48] sm:$0xf]
        %v1993 = vld [vmem:[%s1973 + $0x4c] sm:$0xf]
        %v1994 = vld [vmem:[%s1973 + $0x50] sm:$0xf]
        %v1995 = vld [vmem:[%s1973 + $0x54] sm:$0xf]
        %v1996 = vld [vmem:[%s1973 + $0x58] sm:$0xf]
        %v1997 = vld [vmem:[%s1973 + $0x5c] sm:$0xf]
        %v1998 = vld [vmem:[%s1973 + $0x60] sm:$0xf]
        %v1999 = vld [vmem:[%s1973 + $0x64] sm:$0xf]
        %v2000 = vld [vmem:[%s1973 + $0x68] sm:$0xf]
        %v2001 = vld [vmem:[%s1973 + $0x6c] sm:$0xf]
        %v2002 = vld [vmem:[%s1973 + $0x70] sm:$0xf]
        %v2003 = vld [vmem:[%s1973 + $0x74] sm:$0xf]
        %v2004 = vld [vmem:[%s1973 + $0x78] sm:$0xf]
        %v2005 = vld [vmem:[%s1973 + $0x7c] sm:$0xf]
        %v2006 = vpack.c.bf16 %v1971, %v1971
        %v2007 = vpack.c.bf16 %v1972, %v1972
        %v2008 = vld [vmem:[#allocation3 + $0x12] sm:$0x1]
        %v2010 = vlaneseq
        %v2011 = vshrl.u32 %v2010, 7
        %v2012 = vsub.s32 0, %v2011
        %v2013 = vrot.slane %v2008, %v2012
        %v2047 = vunpack.c.l.b16 %v1974
        %v2048 = vunpack.c.l.b16 %v1975
        %v2049 = vunpack.c.l.b16 %v1976
        %v2050 = vunpack.c.l.b16 %v1977
        %v2051 = vunpack.c.l.b16 %v1978
        %v2052 = vunpack.c.l.b16 %v1979
        %v2053 = vunpack.c.l.b16 %v1980
        %v2054 = vunpack.c.l.b16 %v1981
        %v2055 = vunpack.c.l.b16 %v1982
        %v2056 = vunpack.c.l.b16 %v1983
        %v2057 = vunpack.c.l.b16 %v1984
        %v2058 = vunpack.c.l.b16 %v1985
        %v2059 = vunpack.c.l.b16 %v1986
        %v2060 = vunpack.c.l.b16 %v1987
        %v2061 = vunpack.c.l.b16 %v1988
        %v2062 = vunpack.c.l.b16 %v1989
        %v2063 = vunpack.c.l.b16 %v1990
        %v2064 = vunpack.c.l.b16 %v1991
        %v2065 = vunpack.c.l.b16 %v1992
        %v2066 = vunpack.c.l.b16 %v1993
        %v2067 = vunpack.c.l.b16 %v1994
        %v2068 = vunpack.c.l.b16 %v1995
        %v2069 = vunpack.c.l.b16 %v1996
        %v2070 = vunpack.c.l.b16 %v1997
        %v2071 = vunpack.c.l.b16 %v1998
        %v2072 = vunpack.c.l.b16 %v1999
        %v2073 = vunpack.c.l.b16 %v2000
        %v2074 = vunpack.c.l.b16 %v2001
        %v2075 = vunpack.c.l.b16 %v2002
        %v2076 = vunpack.c.l.b16 %v2003
        %v2077 = vunpack.c.l.b16 %v2004
        %v2078 = vunpack.c.l.b16 %v2005
        %v2079 = vpack.c.b16 %v2048, %v2047
        %v2080 = vpack.c.b16 %v2050, %v2049
        %v2081 = vpack.c.b16 %v2052, %v2051
        %v2082 = vpack.c.b16 %v2054, %v2053
        %v2083 = vpack.c.b16 %v2056, %v2055
        %v2084 = vpack.c.b16 %v2058, %v2057
        %v2085 = vpack.c.b16 %v2060, %v2059
        %v2086 = vpack.c.b16 %v2062, %v2061
        %v2087 = vpack.c.b16 %v2064, %v2063
        %v2088 = vpack.c.b16 %v2066, %v2065
        %v2089 = vpack.c.b16 %v2068, %v2067
        %v2090 = vpack.c.b16 %v2070, %v2069
        %v2091 = vpack.c.b16 %v2072, %v2071
        %v2092 = vpack.c.b16 %v2074, %v2073
        %v2093 = vpack.c.b16 %v2076, %v2075
        %v2094 = vpack.c.b16 %v2078, %v2077
        %2111 = vmatprep.subr.bf16.mxu0 0
        %2112 = vmatpush1.bf16.msra.mxu0 %v2079
        %2113 = vmatprep.subr.bf16.mxu0 0
        %2114 = vmatpush1.bf16.msra.mxu0 %v2080
        %2115 = vmatprep.subr.bf16.mxu0 0
        %2116 = vmatpush1.bf16.msra.mxu0 %v2081
        %2117 = vmatprep.subr.bf16.mxu0 0
        %2118 = vmatpush1.bf16.msra.mxu0 %v2082
        %2119 = vmatprep.subr.bf16.mxu0 0
        %2120 = vmatpush1.bf16.msra.mxu0 %v2083
        %2121 = vmatprep.subr.bf16.mxu0 0
        %2122 = vmatpush1.bf16.msra.mxu0 %v2084
        %2123 = vmatprep.subr.bf16.mxu0 0
        %2124 = vmatpush1.bf16.msra.mxu0 %v2085
        %2125 = vmatprep.subr.bf16.mxu0 0
        %2126 = vmatpush1.bf16.msra.mxu0 %v2086
        %2127 = vmatprep.subr.bf16.mxu0 0
        %2128 = vmatpush1.bf16.msra.mxu0 %v2087
        %2129 = vmatprep.subr.bf16.mxu0 0
        %2130 = vmatpush1.bf16.msra.mxu0 %v2088
        %2131 = vmatprep.subr.bf16.mxu0 0
        %2132 = vmatpush1.bf16.msra.mxu0 %v2089
        %2133 = vmatprep.subr.bf16.mxu0 0
        %2134 = vmatpush1.bf16.msra.mxu0 %v2090
        %2135 = vmatprep.subr.bf16.mxu0 0
        %2136 = vmatpush1.bf16.msra.mxu0 %v2091
        %2137 = vmatprep.subr.bf16.mxu0 0
        %2138 = vmatpush1.bf16.msra.mxu0 %v2092
        %2139 = vmatprep.subr.bf16.mxu0 0
        %2140 = vmatpush1.bf16.msra.mxu0 %v2093
        %2141 = vmatprep.subr.bf16.mxu0 0
        %2142 = vmatpush1.bf16.msra.mxu0 %v2094
        %2143 = vmatprep.mubr.bf16.mxu0 %v2007
        %2144 = vmatmul.mubr.bf16.gmra.mrb[0].mxu0 %v2006
        %v2145 = vpop.f32.mrb[0].mxu0
        %v2146 = vadd.f32 %v2013, %v2145
        %v2147 = vpop.f32.mrb[0].mxu0
        %v2148 = vpop.f32.mrb[0].mxu0
        %v2149 = vpop.f32.mrb[0].mxu0
        %2150 = vdwg.mxu0
        %v2151 = vld [vmem:[#allocation3 + $0x13] sm:$0x1]
        %v2152 = vld [vmem:[#allocation3 + $0x14] sm:$0x1]
        %v2153 = vrot.slane %v2146, 4
        %v2154 = vadd.f32 %v2146, %v2153
        %v2155 = vrot.slane %v2154, 2
        %v2156 = vadd.f32 %v2154, %v2155
        %v2157 = vrot.slane %v2156, 1
        %v2158 = vadd.f32 %v2156, %v2157
        %v2159 = vmul.f32 %v2158, %v1043
        %v2160 = vsub.f32 %v2146, %v2159
        %v2161 = vmul.f32 %v2160, %v2160
        %v2162 = vrot.slane %v2161, 4
        %v2163 = vadd.f32 %v2161, %v2162
        %v2164 = vrot.slane %v2163, 2
        %v2165 = vadd.f32 %v2163, %v2164
        %v2166 = vrot.slane %v2165, 1
        %v2167 = vadd.f32 %v2165, %v2166
        %v2168 = vmul.f32 %v2167, %v1043
        %v2169 = vadd.f32 %v2168, 1e-05
        %v2170 = vrsqrt.pop %v2169
        %v2171 = vmul.f32 %v2151, %v2170
        %v2172 = vmul.f32 %v2159, %v2171
        %v2173 = vsub.f32 %v2152, %v2172
        %v2175 = vlaneseq
        %v2176 = vshrl.u32 %v2175, 7
        %v2177 = vsub.s32 0, %v2176
        %v2178 = vrot.slane %v2171, %v2177
        %v2180 = vmul.f32 %v2146, %v2178
        %v2182 = vlaneseq
        %v2183 = vshrl.u32 %v2182, 7
        %v2184 = vsub.s32 0, %v2183
        %v2185 = vrot.slane %v2173, %v2184
        %v2187 = vadd.f32 %v2180, %v2185
        %v2188 = vmax.f32 %v2187, 0.0
        %v2189 = vadd.f32 %v1817, %v2188
        %v2190 = vmul.f32 %v2189, 0.25
        %v2191 = vld [vmem:[%s4 + $0x4] sm:$0xf]
        %v2192 = vld [vmem:[%s4 + $0x8] sm:$0xf]
        %v2193 = vld [vmem:[%s4 + $0xc] sm:$0xf]
        %v2194 = vld [vmem:[%s4 + $0x10] sm:$0xf]
        %v2195 = vld [vmem:[%s4 + $0x14] sm:$0xf]
        %v2196 = vld [vmem:[%s4 + $0x18] sm:$0xf]
        %v2197 = vld [vmem:[%s4 + $0x1c] sm:$0xf]
        %v2198 = vld [vmem:[%s4 + $0x20] sm:$0xf]
        %v2199 = vld [vmem:[%s4 + $0x24] sm:$0xf]
        %v2200 = vld [vmem:[%s4 + $0x28] sm:$0xf]
        %v2201 = vld [vmem:[%s4 + $0x2c] sm:$0xf]
        %v2202 = vld [vmem:[%s4 + $0x30] sm:$0xf]
        %v2203 = vld [vmem:[%s4 + $0x34] sm:$0xf]
        %v2204 = vld [vmem:[%s4 + $0x38] sm:$0xf]
        %v2205 = vld [vmem:[%s4 + $0x3c] sm:$0xf]
        %v2206 = vld [vmem:[%s4 + $0x40] sm:$0xf]
        %v2207 = vpack.c.bf16 %v2190, %v2190
        %v2208 = vld [vmem:[#allocation3 + $0x15] sm:$0x1]
        %v2210 = vlaneseq
        %v2211 = vshrl.u32 %v2210, 7
        %v2212 = vsub.s32 0, %v2211
        %v2213 = vrot.slane %v2208, %v2212
        %v2231 = vunpack.c.l.b16 %v2191
        %v2232 = vunpack.c.l.b16 %v2192
        %v2233 = vunpack.c.l.b16 %v2193
        %v2234 = vunpack.c.l.b16 %v2194
        %v2235 = vunpack.c.l.b16 %v2195
        %v2236 = vunpack.c.l.b16 %v2196
        %v2237 = vunpack.c.l.b16 %v2197
        %v2238 = vunpack.c.l.b16 %v2198
        %v2239 = vunpack.c.l.b16 %v2199
        %v2240 = vunpack.c.l.b16 %v2200
        %v2241 = vunpack.c.l.b16 %v2201
        %v2242 = vunpack.c.l.b16 %v2202
        %v2243 = vunpack.c.l.b16 %v2203
        %v2244 = vunpack.c.l.b16 %v2204
        %v2245 = vunpack.c.l.b16 %v2205
        %v2246 = vunpack.c.l.b16 %v2206
        %v2247 = vpack.c.b16 %v2232, %v2231
        %v2248 = vpack.c.b16 %v2234, %v2233
        %v2249 = vpack.c.b16 %v2236, %v2235
        %v2250 = vpack.c.b16 %v2238, %v2237
        %v2251 = vpack.c.b16 %v2240, %v2239
        %v2252 = vpack.c.b16 %v2242, %v2241
        %v2253 = vpack.c.b16 %v2244, %v2243
        %v2254 = vpack.c.b16 %v2246, %v2245
        %2263 = vmatprep.subr.bf16.mxu0 0
        %2264 = vmatpush1.bf16.msra.mxu0 %v2247
        %2265 = vmatprep.subr.bf16.mxu0 0
        %2266 = vmatpush1.bf16.msra.mxu0 %v2248
        %2267 = vmatprep.subr.bf16.mxu0 0
        %2268 = vmatpush1.bf16.msra.mxu0 %v2249
        %2269 = vmatprep.subr.bf16.mxu0 0
        %2270 = vmatpush1.bf16.msra.mxu0 %v2250
        %2271 = vmatprep.subr.bf16.mxu0 0
        %2272 = vmatpush1.bf16.msra.mxu0 %v2251
        %2273 = vmatprep.subr.bf16.mxu0 0
        %2274 = vmatpush1.bf16.msra.mxu0 %v2252
        %2275 = vmatprep.subr.bf16.mxu0 0
        %2276 = vmatpush1.bf16.msra.mxu0 %v2253
        %2277 = vmatprep.subr.bf16.mxu0 0
        %2278 = vmatpush1.bf16.msra.mxu0 %v2254
        %2279 = vmatprep.subr.bf16.mxu0 0
        %2280 = vmatpush1.bf16.msra.mxu0 0
        %2281 = vmatprep.subr.bf16.mxu0 0
        %2282 = vmatpush1.bf16.msra.mxu0 0
        %2283 = vmatprep.subr.bf16.mxu0 0
        %2284 = vmatpush1.bf16.msra.mxu0 0
        %2285 = vmatprep.subr.bf16.mxu0 0
        %2286 = vmatpush1.bf16.msra.mxu0 0
        %2287 = vmatprep.subr.bf16.mxu0 0
        %2288 = vmatpush1.bf16.msra.mxu0 0
        %2289 = vmatprep.subr.bf16.mxu0 0
        %2290 = vmatpush1.bf16.msra.mxu0 0
        %2291 = vmatprep.subr.bf16.mxu0 0
        %2292 = vmatpush1.bf16.msra.mxu0 0
        %2293 = vmatprep.subr.bf16.mxu0 0
        %2294 = vmatpush1.bf16.msra.mxu0 0
        %2295 = vmatprep.mubr.bf16.mxu0 0
        %2296 = vmatmul.mubr.bf16.gmra.mrb[0].mxu0 %v2207
        %v2297 = vpop.f32.mrb[0].mxu0
        %v2298 = vadd.f32 %v2213, %v2297
        %v2299 = vpop.f32.mrb[0].mxu0
        %v2300 = vpop.f32.mrb[0].mxu0
        %v2301 = vpop.f32.mrb[0].mxu0
        %2302 = vdwg.mxu0
        %v2303 = vld [vmem:[#allocation3 + $0x16] sm:$0x1]
        %v2304 = vld [vmem:[#allocation3 + $0x17] sm:$0x1]
        %vm2305 = vcmask 523264
        %v2306 = vsel %vm2305, %v2298, 0.0
        %v2307 = vrot.slane %v2306, 4
        %v2308 = vadd.f32 %v2306, %v2307
        %v2309 = vrot.slane %v2308, 2
        %v2310 = vadd.f32 %v2308, %v2309
        %v2311 = vrot.slane %v2310, 1
        %v2312 = vadd.f32 %v2310, %v2311
        %v2313 = vmul.f32 %v2312, %v1043
        %v2314 = vsub.f32 %v2298, %v2313
        %v2315 = vmul.f32 %v2314, %v2314
        %v2316 = vsel %vm2305, %v2315, 0.0
        %v2317 = vrot.slane %v2316, 4
        %v2318 = vadd.f32 %v2316, %v2317
        %v2319 = vrot.slane %v2318, 2
        %v2320 = vadd.f32 %v2318, %v2319
        %v2321 = vrot.slane %v2320, 1
        %v2322 = vadd.f32 %v2320, %v2321
        %v2323 = vmul.f32 %v2322, %v1043
        %v2324 = vadd.f32 %v2323, 1e-05
        %v2325 = vrsqrt.pop %v2324
        %v2326 = vmul.f32 %v2303, %v2325
        %v2327 = vmul.f32 %v2313, %v2326
        %v2328 = vsub.f32 %v2304, %v2327
        %v2330 = vlaneseq
        %v2331 = vshrl.u32 %v2330, 7
        %v2332 = vsub.s32 0, %v2331
        %v2333 = vrot.slane %v2326, %v2332
        %v2335 = vmul.f32 %v2298, %v2333
        %v2337 = vlaneseq
        %v2338 = vshrl.u32 %v2337, 7
        %v2339 = vsub.s32 0, %v2338
        %v2340 = vrot.slane %v2328, %v2339
        %v2342 = vadd.f32 %v2335, %v2340
        %v2343 = vmax.f32 %v2342, 0.0
        %v2344 = vld [vmem:[%s7] sm:$0xf]
        %v2345 = vld [vmem:[%s7 + $0x4] sm:$0xf]
        %v2346 = vld [vmem:[%s7 + $0x8] sm:$0xf]
        %v2347 = vld [vmem:[%s7 + $0xc] sm:$0xf]
        %v2348 = vld [vmem:[%s7 + $0x10] sm:$0xf]
        %v2349 = vld [vmem:[%s7 + $0x14] sm:$0xf]
        %v2350 = vld [vmem:[%s7 + $0x18] sm:$0xf]
        %v2351 = vld [vmem:[%s7 + $0x1c] sm:$0xf]
        %v2352 = vpack.c.bf16 %v2343, %v2343
        %v2353 = vld [vmem:[%s7 + $0x20] sm:$0xf]
        %v2354 = vld [vmem:[%s7 + $0x24] sm:$0xf]
        %v2355 = vld [vmem:[%s7 + $0x28] sm:$0xf]
        %v2356 = vld [vmem:[%s7 + $0x2c] sm:$0xf]
        %v2357 = vld [vmem:[%s7 + $0x30] sm:$0xf]
        %v2358 = vld [vmem:[%s7 + $0x34] sm:$0xf]
        %v2359 = vld [vmem:[%s7 + $0x38] sm:$0xf]
        %v2360 = vld [vmem:[%s7 + $0x3c] sm:$0xf]
        %v2361 = vpack.c.bf16 %v700, %v700
        %v2370 = vunpack.c.l.b16 %v2353
        %v2371 = vunpack.c.l.b16 %v2354
        %v2372 = vunpack.c.l.b16 %v2355
        %v2373 = vunpack.c.l.b16 %v2356
        %v2374 = vunpack.c.l.b16 %v2357
        %v2375 = vunpack.c.l.b16 %v2358
        %v2376 = vunpack.c.l.b16 %v2359
        %v2377 = vunpack.c.l.b16 %v2360
        %v2378 = vpack.c.b16 %v2371, %v2370
        %v2379 = vpack.c.b16 %v2373, %v2372
        %v2380 = vpack.c.b16 %v2375, %v2374
        %v2381 = vpack.c.b16 %v2377, %v2376
        %v2387 = vsel %vm2305, %v2361, 0
        %2389 = vmatprep.subr.bf16.mxu0 0
        %2390 = vmatpush1.bf16.msra.mxu0 %v2378
        %2391 = vmatprep.subr.bf16.mxu0 0
        %2392 = vmatpush1.bf16.msra.mxu0 %v2379
        %2393 = vmatprep.subr.bf16.mxu0 0
        %2394 = vmatpush1.bf16.msra.mxu0 %v2380
        %2395 = vmatprep.subr.bf16.mxu0 0
        %2396 = vmatpush1.bf16.msra.mxu0 %v2381
        %2397 = vmatprep.subr.bf16.mxu0 0
        %2398 = vmatpush1.bf16.msra.mxu0 0
        %2399 = vmatprep.subr.bf16.mxu0 0
        %2400 = vmatpush1.bf16.msra.mxu0 0
        %2401 = vmatprep.subr.bf16.mxu0 0
        %2402 = vmatpush1.bf16.msra.mxu0 0
        %2403 = vmatprep.subr.bf16.mxu0 0
        %2404 = vmatpush1.bf16.msra.mxu0 0
        %2405 = vmatprep.subr.bf16.mxu0 0
        %2406 = vmatpush1.bf16.msra.mxu0 0
        %2407 = vmatprep.subr.bf16.mxu0 0
        %2408 = vmatpush1.bf16.msra.mxu0 0
        %2409 = vmatprep.subr.bf16.mxu0 0
        %2410 = vmatpush1.bf16.msra.mxu0 0
        %2411 = vmatprep.subr.bf16.mxu0 0
        %2412 = vmatpush1.bf16.msra.mxu0 0
        %2413 = vmatprep.subr.bf16.mxu0 0
        %2414 = vmatpush1.bf16.msra.mxu0 0
        %2415 = vmatprep.subr.bf16.mxu0 0
        %2416 = vmatpush1.bf16.msra.mxu0 0
        %2417 = vmatprep.subr.bf16.mxu0 0
        %2418 = vmatpush1.bf16.msra.mxu0 0
        %2419 = vmatprep.subr.bf16.mxu0 0
        %2420 = vmatpush1.bf16.msra.mxu0 0
        %2421 = vmatprep.mubr.bf16.mxu0 0
        %2422 = vmatmul.mubr.bf16.gmra.mrb[0].mxu0 %v2387
        %v2423 = vpop.f32.mrb[0].mxu0
        %v2424 = vadd.f32 0.0, %v2423
        %v2425 = vpop.f32.mrb[0].mxu0
        %v2426 = vpop.f32.mrb[0].mxu0
        %v2427 = vpop.f32.mrb[0].mxu0
        %2428 = vdwg.mxu0
        %v2437 = vunpack.c.l.b16 %v2344
        %v2438 = vunpack.c.l.b16 %v2345
        %v2439 = vunpack.c.l.b16 %v2346
        %v2440 = vunpack.c.l.b16 %v2347
        %v2441 = vunpack.c.l.b16 %v2348
        %v2442 = vunpack.c.l.b16 %v2349
        %v2443 = vunpack.c.l.b16 %v2350
        %v2444 = vunpack.c.l.b16 %v2351
        %v2445 = vpack.c.b16 %v2438, %v2437
        %v2446 = vpack.c.b16 %v2440, %v2439
        %v2447 = vpack.c.b16 %v2442, %v2441
        %v2448 = vpack.c.b16 %v2444, %v2443
        %v2454 = vsel %vm2305, %v2352, 0
        %2456 = vmatprep.subr.bf16.mxu0 0
        %2457 = vmatpush1.bf16.msra.mxu0 %v2445
        %2458 = vmatprep.subr.bf16.mxu0 0
        %2459 = vmatpush1.bf16.msra.mxu0 %v2446
        %2460 = vmatprep.subr.bf16.mxu0 0
        %2461 = vmatpush1.bf16.msra.mxu0 %v2447
        %2462 = vmatprep.subr.bf16.mxu0 0
        %2463 = vmatpush1.bf16.msra.mxu0 %v2448
        %2464 = vmatprep.subr.bf16.mxu0 0
        %2465 = vmatpush1.bf16.msra.mxu0 0
        %2466 = vmatprep.subr.bf16.mxu0 0
        %2467 = vmatpush1.bf16.msra.mxu0 0
        %2468 = vmatprep.subr.bf16.mxu0 0
        %2469 = vmatpush1.bf16.msra.mxu0 0
        %2470 = vmatprep.subr.bf16.mxu0 0
        %2471 = vmatpush1.bf16.msra.mxu0 0
        %2472 = vmatprep.subr.bf16.mxu0 0
        %2473 = vmatpush1.bf16.msra.mxu0 0
        %2474 = vmatprep.subr.bf16.mxu0 0
        %2475 = vmatpush1.bf16.msra.mxu0 0
        %2476 = vmatprep.subr.bf16.mxu0 0
        %2477 = vmatpush1.bf16.msra.mxu0 0
        %2478 = vmatprep.subr.bf16.mxu0 0
        %2479 = vmatpush1.bf16.msra.mxu0 0
        %2480 = vmatprep.subr.bf16.mxu0 0
        %2481 = vmatpush1.bf16.msra.mxu0 0
        %2482 = vmatprep.subr.bf16.mxu0 0
        %2483 = vmatpush1.bf16.msra.mxu0 0
        %2484 = vmatprep.subr.bf16.mxu0 0
        %2485 = vmatpush1.bf16.msra.mxu0 0
        %2486 = vmatprep.subr.bf16.mxu0 0
        %2487 = vmatpush1.bf16.msra.mxu0 0
        %2488 = vmatprep.mubr.bf16.mxu0 0
        %2489 = vmatmul.mubr.bf16.gmra.mrb[0].mxu0 %v2454
        %v2490 = vpop.f32.mrb[0].mxu0
        %v2491 = vadd.f32 %v2424, %v2490
        %v2492 = vpop.f32.mrb[0].mxu0
        %v2493 = vpop.f32.mrb[0].mxu0
        %v2494 = vpop.f32.mrb[0].mxu0
        %2495 = vdwg.mxu0
        %v2496 = vld [vmem:[#allocation3 + $0x18] sm:$0x1]
        %v2498 = vlaneseq
        %v2499 = vshrl.u32 %v2498, 7
        %v2500 = vsub.s32 0, %v2499
        %v2501 = vrot.slane %v2496, %v2500
        %v2503 = vadd.f32 %v2491, %v2501
        %v2504 = vld [vmem:[#allocation3 + $0x19] sm:$0x1]
        %v2505 = vld [vmem:[#allocation3 + $0x1a] sm:$0x1]
        %v2506 = vrot.slane %v2503, 4
        %v2507 = vadd.f32 %v2503, %v2506
        %v2508 = vrot.slane %v2507, 2
        %v2509 = vadd.f32 %v2507, %v2508
        %v2510 = vrot.slane %v2509, 1
        %v2511 = vadd.f32 %v2509, %v2510
        %v2512 = vmul.f32 %v2511, %v1043
        %v2513 = vsub.f32 %v2503, %v2512
        %v2514 = vmul.f32 %v2513, %v2513
        %v2515 = vrot.slane %v2514, 4
        %v2516 = vadd.f32 %v2514, %v2515
        %v2517 = vrot.slane %v2516, 2
        %v2518 = vadd.f32 %v2516, %v2517
        %v2519 = vrot.slane %v2518, 1
        %v2520 = vadd.f32 %v2518, %v2519
        %v2521 = vmul.f32 %v2520, %v1043
        %v2522 = vadd.f32 %v2521, 1e-05
        %v2523 = vrsqrt.pop %v2522
        %v2524 = vmul.f32 %v2504, %v2523
        %v2525 = vmul.f32 %v2512, %v2524
        %v2526 = vsub.f32 %v2505, %v2525
        %v2528 = vlaneseq
        %v2529 = vshrl.u32 %v2528, 7
        %v2530 = vsub.s32 0, %v2529
        %v2531 = vrot.slane %v2524, %v2530
        %v2533 = vmul.f32 %v2503, %v2531
        %v2535 = vlaneseq
        %v2536 = vshrl.u32 %v2535, 7
        %v2537 = vsub.s32 0, %v2536
        %v2538 = vrot.slane %v2526, %v2537
        %v2540 = vadd.f32 %v2533, %v2538
        %v2541 = vxor.u32 %v2540, 2147483648
        %v2542 = vmul.f32 %v2541, 1.442695
        %v2543 = vpow.pop %v2542
        %v2544 = vadd.f32 %v2543, 1.0
        %v2545 = vrcp.pop %v2544
        %v2546 = vmul.f32 1.0, %v2545
        %v2547 = vld [vmem:[%s8] sm:$0xf]
        %v2548 = vld [vmem:[%s8 + $0x4] sm:$0xf]
        %v2549 = vld [vmem:[%s8 + $0x8] sm:$0xf]
        %v2550 = vld [vmem:[%s8 + $0xc] sm:$0xf]
        %v2551 = vld [vmem:[%s8 + $0x10] sm:$0xf]
        %v2552 = vld [vmem:[%s8 + $0x14] sm:$0xf]
        %v2553 = vld [vmem:[%s8 + $0x18] sm:$0xf]
        %v2554 = vld [vmem:[%s8 + $0x1c] sm:$0xf]
        %v2555 = vld [vmem:[%s8 + $0x20] sm:$0xf]
        %v2556 = vld [vmem:[%s8 + $0x24] sm:$0xf]
        %v2557 = vld [vmem:[%s8 + $0x28] sm:$0xf]
        %v2558 = vld [vmem:[%s8 + $0x2c] sm:$0xf]
        %v2559 = vld [vmem:[%s8 + $0x30] sm:$0xf]
        %v2560 = vld [vmem:[%s8 + $0x34] sm:$0xf]
        %v2561 = vld [vmem:[%s8 + $0x38] sm:$0xf]
        %v2562 = vld [vmem:[%s8 + $0x3c] sm:$0xf]
        %v2563 = vpack.c.bf16 %v2546, %v2546
        %v2564 = vld [vmem:[#allocation3 + $0x1b] sm:$0x1]
        %v2566 = vlaneseq
        %v2567 = vshrl.u32 %v2566, 7
        %v2568 = vsub.s32 0, %v2567
        %v2569 = vrot.slane %v2564, %v2568
        %v2587 = vunpack.c.l.b16 %v2547
        %v2588 = vunpack.c.l.b16 %v2548
        %v2589 = vunpack.c.l.b16 %v2549
        %v2590 = vunpack.c.l.b16 %v2550
        %v2591 = vunpack.c.l.b16 %v2551
        %v2592 = vunpack.c.l.b16 %v2552
        %v2593 = vunpack.c.l.b16 %v2553
        %v2594 = vunpack.c.l.b16 %v2554
        %v2595 = vunpack.c.l.b16 %v2555
        %v2596 = vunpack.c.l.b16 %v2556
        %v2597 = vunpack.c.l.b16 %v2557
        %v2598 = vunpack.c.l.b16 %v2558
        %v2599 = vunpack.c.l.b16 %v2559
        %v2600 = vunpack.c.l.b16 %v2560
        %v2601 = vunpack.c.l.b16 %v2561
        %v2602 = vunpack.c.l.b16 %v2562
        %v2603 = vpack.c.b16 %v2588, %v2587
        %v2604 = vpack.c.b16 %v2590, %v2589
        %v2605 = vpack.c.b16 %v2592, %v2591
        %v2606 = vpack.c.b16 %v2594, %v2593
        %v2607 = vpack.c.b16 %v2596, %v2595
        %v2608 = vpack.c.b16 %v2598, %v2597
        %v2609 = vpack.c.b16 %v2600, %v2599
        %v2610 = vpack.c.b16 %v2602, %v2601
        %2619 = vmatprep.subr.bf16.mxu0 0
        %2620 = vmatpush1.bf16.msra.mxu0 %v2603
        %2621 = vmatprep.subr.bf16.mxu0 0
        %2622 = vmatpush1.bf16.msra.mxu0 %v2604
        %2623 = vmatprep.subr.bf16.mxu0 0
        %2624 = vmatpush1.bf16.msra.mxu0 %v2605
        %2625 = vmatprep.subr.bf16.mxu0 0
        %2626 = vmatpush1.bf16.msra.mxu0 %v2606
        %2627 = vmatprep.subr.bf16.mxu0 0
        %2628 = vmatpush1.bf16.msra.mxu0 %v2607
        %2629 = vmatprep.subr.bf16.mxu0 0
        %2630 = vmatpush1.bf16.msra.mxu0 %v2608
        %2631 = vmatprep.subr.bf16.mxu0 0
        %2632 = vmatpush1.bf16.msra.mxu0 %v2609
        %2633 = vmatprep.subr.bf16.mxu0 0
        %2634 = vmatpush1.bf16.msra.mxu0 %v2610
        %2635 = vmatprep.subr.bf16.mxu0 0
        %2636 = vmatpush1.bf16.msra.mxu0 0
        %2637 = vmatprep.subr.bf16.mxu0 0
        %2638 = vmatpush1.bf16.msra.mxu0 0
        %2639 = vmatprep.subr.bf16.mxu0 0
        %2640 = vmatpush1.bf16.msra.mxu0 0
        %2641 = vmatprep.subr.bf16.mxu0 0
        %2642 = vmatpush1.bf16.msra.mxu0 0
        %2643 = vmatprep.subr.bf16.mxu0 0
        %2644 = vmatpush1.bf16.msra.mxu0 0
        %2645 = vmatprep.subr.bf16.mxu0 0
        %2646 = vmatpush1.bf16.msra.mxu0 0
        %2647 = vmatprep.subr.bf16.mxu0 0
        %2648 = vmatpush1.bf16.msra.mxu0 0
        %2649 = vmatprep.subr.bf16.mxu0 0
        %2650 = vmatpush1.bf16.msra.mxu0 0
        %2651 = vmatprep.mubr.bf16.mxu0 0
        %2652 = vmatmul.mubr.bf16.gmra.mrb[0].mxu0 %v2563
        %v2653 = vpop.f32.mrb[0].mxu0
        %v2654 = vadd.f32 %v2569, %v2653
        %v2655 = vpop.f32.mrb[0].mxu0
        %v2656 = vpop.f32.mrb[0].mxu0
        %v2657 = vpop.f32.mrb[0].mxu0
        %2658 = vdwg.mxu0
        %v2659 = vmul.f32 %v2654, 1.442695
        %v2660 = vpow.pop %v2659
        %v2661 = vmul.f32 %v2660, 0.5
        %2663 = vrot.lane.b32.xlu0 %v2661, 112
        %v2664 = vpop.permute.xlu0 %2663
        %v2666 = vmul.f32 %v647, %v2664
        %v2667 = vadd.f32 %v2654, %v2666
        %v2668 = vld [vmem:[#allocation7] sm:$0xf]
        %v2669 = vld [vmem:[#allocation7 + $0x4] sm:$0xf]
        %v2670 = vpack.c.bf16 %v2667, %v2667
        %v2671 = vld [vmem:[#allocation7 + $0x8] sm:$0xf]
        %v2672 = vld [vmem:[#allocation7 + $0xc] sm:$0xf]
        %v2673 = vld [vmem:[#allocation7 + $0x10] sm:$0xf]
        %v2674 = vld [vmem:[#allocation7 + $0x14] sm:$0xf]
        %v2675 = vld [vmem:[#allocation7 + $0x18] sm:$0xf]
        %v2676 = vld [vmem:[#allocation7 + $0x1c] sm:$0xf]
        %v2677 = vld [vmem:[#allocation7 + $0x20] sm:$0xf]
        %v2678 = vld [vmem:[#allocation7 + $0x24] sm:$0xf]
        %v2687 = vunpack.c.l.b16 %v2671
        %v2688 = vunpack.c.l.b16 %v2672
        %v2689 = vunpack.c.l.b16 %v2673
        %v2690 = vunpack.c.l.b16 %v2674
        %v2691 = vunpack.c.l.b16 %v2675
        %v2692 = vunpack.c.l.b16 %v2676
        %v2693 = vunpack.c.l.b16 %v2677
        %v2694 = vunpack.c.l.b16 %v2678
        %v2695 = vpack.c.b16 %v2688, %v2687
        %v2696 = vpack.c.b16 %v2690, %v2689
        %v2697 = vpack.c.b16 %v2692, %v2691
        %v2698 = vpack.c.b16 %v2694, %v2693
        %2703 = vmatprep.subr.bf16.mxu0 0
        %2704 = vmatpush1.bf16.msra.mxu0 %v2695
        %2705 = vmatprep.subr.bf16.mxu0 0
        %2706 = vmatpush1.bf16.msra.mxu0 %v2696
        %2707 = vmatprep.subr.bf16.mxu0 0
        %2708 = vmatpush1.bf16.msra.mxu0 %v2697
        %2709 = vmatprep.subr.bf16.mxu0 0
        %2710 = vmatpush1.bf16.msra.mxu0 %v2698
        %2711 = vmatprep.subr.bf16.mxu0 0
        %2712 = vmatpush1.bf16.msra.mxu0 0
        %2713 = vmatprep.subr.bf16.mxu0 0
        %2714 = vmatpush1.bf16.msra.mxu0 0
        %2715 = vmatprep.subr.bf16.mxu0 0
        %2716 = vmatpush1.bf16.msra.mxu0 0
        %2717 = vmatprep.subr.bf16.mxu0 0
        %2718 = vmatpush1.bf16.msra.mxu0 0
        %2719 = vmatprep.subr.bf16.mxu0 0
        %2720 = vmatpush1.bf16.msra.mxu0 0
        %2721 = vmatprep.subr.bf16.mxu0 0
        %2722 = vmatpush1.bf16.msra.mxu0 0
        %2723 = vmatprep.subr.bf16.mxu0 0
        %2724 = vmatpush1.bf16.msra.mxu0 0
        %2725 = vmatprep.subr.bf16.mxu0 0
        %2726 = vmatpush1.bf16.msra.mxu0 0
        %2727 = vmatprep.subr.bf16.mxu0 0
        %2728 = vmatpush1.bf16.msra.mxu0 0
        %2729 = vmatprep.subr.bf16.mxu0 0
        %2730 = vmatpush1.bf16.msra.mxu0 0
        %2731 = vmatprep.subr.bf16.mxu0 0
        %2732 = vmatpush1.bf16.msra.mxu0 0
        %2733 = vmatprep.subr.bf16.mxu0 0
        %2734 = vmatpush1.bf16.msra.mxu0 0
        %2735 = vmatprep.mubr.bf16.mxu0 0
        %2736 = vmatmul.mubr.bf16.gmra.mrb[0].mxu0 %v2387
        %v2737 = vpop.f32.mrb[0].mxu0
        %v2738 = vadd.f32 0.0, %v2737
        %v2739 = vpop.f32.mrb[0].mxu0
        %v2740 = vpop.f32.mrb[0].mxu0
        %v2741 = vpop.f32.mrb[0].mxu0
        %2742 = vdwg.mxu0
        %v2745 = vunpack.c.l.b16 %v2668
        %v2746 = vunpack.c.l.b16 %v2669
        %v2747 = vpack.c.b16 %v2746, %v2745
        %vm2749 = vcmask 130048
        %v2751 = vsel %vm2749, %v2670, 0
        %2753 = vmatprep.subr.bf16.mxu0 0
        %2754 = vmatpush1.bf16.msra.mxu0 %v2747
        %2755 = vmatprep.subr.bf16.mxu0 0
        %2756 = vmatpush1.bf16.msra.mxu0 0
        %2757 = vmatprep.subr.bf16.mxu0 0
        %2758 = vmatpush1.bf16.msra.mxu0 0
        %2759 = vmatprep.subr.bf16.mxu0 0
        %2760 = vmatpush1.bf16.msra.mxu0 0
        %2761 = vmatprep.subr.bf16.mxu0 0
        %2762 = vmatpush1.bf16.msra.mxu0 0
        %2763 = vmatprep.subr.bf16.mxu0 0
        %2764 = vmatpush1.bf16.msra.mxu0 0
        %2765 = vmatprep.subr.bf16.mxu0 0
        %2766 = vmatpush1.bf16.msra.mxu0 0
        %2767 = vmatprep.subr.bf16.mxu0 0
        %2768 = vmatpush1.bf16.msra.mxu0 0
        %2769 = vmatprep.subr.bf16.mxu0 0
        %2770 = vmatpush1.bf16.msra.mxu0 0
        %2771 = vmatprep.subr.bf16.mxu0 0
        %2772 = vmatpush1.bf16.msra.mxu0 0
        %2773 = vmatprep.subr.bf16.mxu0 0
        %2774 = vmatpush1.bf16.msra.mxu0 0
        %2775 = vmatprep.subr.bf16.mxu0 0
        %2776 = vmatpush1.bf16.msra.mxu0 0
        %2777 = vmatprep.subr.bf16.mxu0 0
        %2778 = vmatpush1.bf16.msra.mxu0 0
        %2779 = vmatprep.subr.bf16.mxu0 0
        %2780 = vmatpush1.bf16.msra.mxu0 0
        %2781 = vmatprep.subr.bf16.mxu0 0
        %2782 = vmatpush1.bf16.msra.mxu0 0
        %2783 = vmatprep.subr.bf16.mxu0 0
        %2784 = vmatpush1.bf16.msra.mxu0 0
        %2785 = vmatprep.mubr.bf16.mxu0 0
        %2786 = vmatmul.mubr.bf16.gmra.mrb[0].mxu0 %v2751
        %v2787 = vpop.f32.mrb[0].mxu0
        %v2788 = vadd.f32 %v2738, %v2787
        %v2789 = vpop.f32.mrb[0].mxu0
        %v2790 = vpop.f32.mrb[0].mxu0
        %v2791 = vpop.f32.mrb[0].mxu0
        %2792 = vdwg.mxu0
        %v2793 = vld [vmem:[#allocation3 + $0x1c] sm:$0x1]
        %v2795 = vlaneseq
        %v2796 = vshrl.u32 %v2795, 7
        %v2797 = vsub.s32 0, %v2796
        %v2798 = vrot.slane %v2793, %v2797
        %v2800 = vadd.f32 %v2788, %v2798
        %v2801 = vld [vmem:[#allocation3 + $0x1d] sm:$0x1]
        %v2802 = vld [vmem:[#allocation3 + $0x1e] sm:$0x1]
        %v2803 = vrot.slane %v2800, 4
        %v2804 = vadd.f32 %v2800, %v2803
        %v2805 = vrot.slane %v2804, 2
        %v2806 = vadd.f32 %v2804, %v2805
        %v2807 = vrot.slane %v2806, 1
        %v2808 = vadd.f32 %v2806, %v2807
        %v2809 = vmul.f32 %v2808, %v1043
        %v2810 = vsub.f32 %v2800, %v2809
        %v2811 = vmul.f32 %v2810, %v2810
        %v2812 = vrot.slane %v2811, 4
        %v2813 = vadd.f32 %v2811, %v2812
        %v2814 = vrot.slane %v2813, 2
        %v2815 = vadd.f32 %v2813, %v2814
        %v2816 = vrot.slane %v2815, 1
        %v2817 = vadd.f32 %v2815, %v2816
        %v2818 = vmul.f32 %v2817, %v1043
        %v2819 = vadd.f32 %v2818, 1e-05
        %v2820 = vrsqrt.pop %v2819
        %v2821 = vmul.f32 %v2801, %v2820
        %v2822 = vmul.f32 %v2809, %v2821
        %v2823 = vsub.f32 %v2802, %v2822
        %v2825 = vlaneseq
        %v2826 = vshrl.u32 %v2825, 7
        %v2827 = vsub.s32 0, %v2826
        %v2828 = vrot.slane %v2821, %v2827
        %v2830 = vmul.f32 %v2800, %v2828
        %v2832 = vlaneseq
        %v2833 = vshrl.u32 %v2832, 7
        %v2834 = vsub.s32 0, %v2833
        %v2835 = vrot.slane %v2823, %v2834
        %v2837 = vadd.f32 %v2830, %v2835
        %v2838 = vxor.u32 %v2837, 2147483648
        %v2839 = vmul.f32 %v2838, 1.442695
        %v2840 = vpow.pop %v2839
        %v2841 = vadd.f32 %v2840, 1.0
        %v2842 = vrcp.pop %v2841
        %v2843 = vmul.f32 1.0, %v2842
        %v2844 = vld [vmem:[#allocation8] sm:$0xff]
        %v2845 = vld [vmem:[#allocation8 + $0x8] sm:$0xff]
        %v2846 = vld [vmem:[#allocation8 + $0x10] sm:$0xff]
        %v2847 = vld [vmem:[#allocation8 + $0x18] sm:$0xff]
        %v2848 = vld [vmem:[#allocation8 + $0x20] sm:$0xff]
        %v2849 = vld [vmem:[#allocation8 + $0x28] sm:$0xff]
        %v2850 = vld [vmem:[#allocation8 + $0x30] sm:$0xff]
        %v2851 = vld [vmem:[#allocation8 + $0x38] sm:$0xff]
        %v2852 = vld [vmem:[#allocation8 + $0x40] sm:$0xff]
        %v2853 = vld [vmem:[#allocation8 + $0x48] sm:$0xff]
        %v2854 = vld [vmem:[#allocation8 + $0x50] sm:$0xff]
        %v2855 = vld [vmem:[#allocation8 + $0x58] sm:$0xff]
        %v2856 = vld [vmem:[#allocation8 + $0x60] sm:$0xff]
        %v2857 = vld [vmem:[#allocation8 + $0x68] sm:$0xff]
        %v2858 = vld [vmem:[#allocation8 + $0x70] sm:$0xff]
        %v2859 = vld [vmem:[#allocation8 + $0x78] sm:$0xff]
        %v2860 = vpack.c.bf16 %v2843, %v2843
        %v2861 = vld [vmem:[#allocation3 + $0x1f] sm:$0x3]
        %v2863 = vlaneseq
        %v2864 = vshrl.u32 %v2863, 7
        %v2865 = vsub.s32 0, %v2864
        %v2866 = vrot.slane %v2861, %v2865
        %v2867 = vlaneseq
        %v2868 = vshrl.u32 %v2867, 7
        %v2869 = vsub.s32 1, %v2868
        %v2870 = vrot.slane %v2861, %v2869
        %v2889 = vunpack.c.l.b16 %v2844
        %v2890 = vunpack.c.h.b16 %v2844
        %v2891 = vunpack.c.l.b16 %v2845
        %v2892 = vunpack.c.h.b16 %v2845
        %v2893 = vunpack.c.l.b16 %v2846
        %v2894 = vunpack.c.h.b16 %v2846
        %v2895 = vunpack.c.l.b16 %v2847
        %v2896 = vunpack.c.h.b16 %v2847
        %v2897 = vunpack.c.l.b16 %v2848
        %v2898 = vunpack.c.h.b16 %v2848
        %v2899 = vunpack.c.l.b16 %v2849
        %v2900 = vunpack.c.h.b16 %v2849
        %v2901 = vunpack.c.l.b16 %v2850
        %v2902 = vunpack.c.h.b16 %v2850
        %v2903 = vunpack.c.l.b16 %v2851
        %v2904 = vunpack.c.h.b16 %v2851
        %v2905 = vunpack.c.l.b16 %v2852
        %v2906 = vunpack.c.h.b16 %v2852
        %v2907 = vunpack.c.l.b16 %v2853
        %v2908 = vunpack.c.h.b16 %v2853
        %v2909 = vunpack.c.l.b16 %v2854
        %v2910 = vunpack.c.h.b16 %v2854
        %v2911 = vunpack.c.l.b16 %v2855
        %v2912 = vunpack.c.h.b16 %v2855
        %v2913 = vunpack.c.l.b16 %v2856
        %v2914 = vunpack.c.h.b16 %v2856
        %v2915 = vunpack.c.l.b16 %v2857
        %v2916 = vunpack.c.h.b16 %v2857
        %v2917 = vunpack.c.l.b16 %v2858
        %v2918 = vunpack.c.h.b16 %v2858
        %v2919 = vunpack.c.l.b16 %v2859
        %v2920 = vunpack.c.h.b16 %v2859
        %v2921 = vpack.c.b16 %v2891, %v2889
        %v2922 = vpack.c.b16 %v2892, %v2890
        %v2923 = vpack.c.b16 %v2895, %v2893
        %v2924 = vpack.c.b16 %v2896, %v2894
        %v2925 = vpack.c.b16 %v2899, %v2897
        %v2926 = vpack.c.b16 %v2900, %v2898
        %v2927 = vpack.c.b16 %v2903, %v2901
        %v2928 = vpack.c.b16 %v2904, %v2902
        %v2929 = vpack.c.b16 %v2907, %v2905
        %v2930 = vpack.c.b16 %v2908, %v2906
        %v2931 = vpack.c.b16 %v2911, %v2909
        %v2932 = vpack.c.b16 %v2912, %v2910
        %v2933 = vpack.c.b16 %v2915, %v2913
        %v2934 = vpack.c.b16 %v2916, %v2914
        %v2935 = vpack.c.b16 %v2919, %v2917
        %v2936 = vpack.c.b16 %v2920, %v2918
        %2953 = vmatprep.subr.bf16.mxu0 %v2922
        %2954 = vmatpush1.bf16.msra.mxu0 %v2921
        %2955 = vmatprep.subr.bf16.mxu0 %v2924
        %2956 = vmatpush1.bf16.msra.mxu0 %v2923
        %2957 = vmatprep.subr.bf16.mxu0 %v2926
        %2958 = vmatpush1.bf16.msra.mxu0 %v2925
        %2959 = vmatprep.subr.bf16.mxu0 %v2928
        %2960 = vmatpush1.bf16.msra.mxu0 %v2927
        %2961 = vmatprep.subr.bf16.mxu0 %v2930
        %2962 = vmatpush1.bf16.msra.mxu0 %v2929
        %2963 = vmatprep.subr.bf16.mxu0 %v2932
        %2964 = vmatpush1.bf16.msra.mxu0 %v2931
        %2965 = vmatprep.subr.bf16.mxu0 %v2934
        %2966 = vmatpush1.bf16.msra.mxu0 %v2933
        %2967 = vmatprep.subr.bf16.mxu0 %v2936
        %2968 = vmatpush1.bf16.msra.mxu0 %v2935
        %2969 = vmatprep.subr.bf16.mxu0 0
        %2970 = vmatpush1.bf16.msra.mxu0 0
        %2971 = vmatprep.subr.bf16.mxu0 0
        %2972 = vmatpush1.bf16.msra.mxu0 0
        %2973 = vmatprep.subr.bf16.mxu0 0
        %2974 = vmatpush1.bf16.msra.mxu0 0
        %2975 = vmatprep.subr.bf16.mxu0 0
        %2976 = vmatpush1.bf16.msra.mxu0 0
        %2977 = vmatprep.subr.bf16.mxu0 0
        %2978 = vmatpush1.bf16.msra.mxu0 0
        %2979 = vmatprep.subr.bf16.mxu0 0
        %2980 = vmatpush1.bf16.msra.mxu0 0
        %2981 = vmatprep.subr.bf16.mxu0 0
        %2982 = vmatpush1.bf16.msra.mxu0 0
        %2983 = vmatprep.subr.bf16.mxu0 0
        %2984 = vmatpush1.bf16.msra.mxu0 0
        %2985 = vmatprep.mubr.bf16.mxu0 0
        %2986 = vmatmul.mubr.bf16.gmra.mrb[0].mxu0 %v2860
        %v2987 = vpop.f32.mrb[0].mxu0
        %v2988 = vadd.f32 %v2866, %v2987
        %v2989 = vpop.f32.mrb[0].mxu0
        %v2990 = vadd.f32 %v2870, %v2989
        %v2991 = vpop.f32.mrb[0].mxu0
        %v2992 = vpop.f32.mrb[0].mxu0
        %2993 = vdwg.mxu0
        %v2994 = vld [vmem:[#allocation3 + $0x21] sm:$0x3]
        %v2995 = vld [vmem:[#allocation3 + $0x23] sm:$0x3]
        %v2996 = vrot.slane %v2988, 4
        %v2997 = vadd.f32 %v2988, %v2996
        %v2998 = vrot.slane %v2997, 2
        %v2999 = vadd.f32 %v2997, %v2998
        %v3000 = vrot.slane %v2999, 1
        %v3001 = vadd.f32 %v2999, %v3000
        %v3002 = vrot.slane %v2990, 4
        %v3003 = vadd.f32 %v2990, %v3002
        %v3004 = vrot.slane %v3003, 2
        %v3005 = vadd.f32 %v3003, %v3004
        %v3006 = vrot.slane %v3005, 1
        %v3007 = vadd.f32 %v3005, %v3006
        %v3008 = vmul.f32 %v3001, %v1043
        %v3009 = vmul.f32 %v3007, %v1043
        %v3010 = vsub.f32 %v2988, %v3008
        %v3011 = vsub.f32 %v2990, %v3009
        %v3012 = vmul.f32 %v3010, %v3010
        %v3013 = vmul.f32 %v3011, %v3011
        %v3014 = vrot.slane %v3012, 4
        %v3015 = vadd.f32 %v3012, %v3014
        %v3016 = vrot.slane %v3015, 2
        %v3017 = vadd.f32 %v3015, %v3016
        %v3018 = vrot.slane %v3017, 1
        %v3019 = vadd.f32 %v3017, %v3018
        %v3020 = vrot.slane %v3013, 4
        %v3021 = vadd.f32 %v3013, %v3020
        %v3022 = vrot.slane %v3021, 2
        %v3023 = vadd.f32 %v3021, %v3022
        %v3024 = vrot.slane %v3023, 1
        %v3025 = vadd.f32 %v3023, %v3024
        %v3026 = vmul.f32 %v3019, %v1043
        %v3027 = vmul.f32 %v3025, %v1043
        %v3028 = vadd.f32 %v3026, 1e-05
        %v3029 = vadd.f32 %v3027, 1e-05
        %v3030 = vrsqrt.pop %v3028
        %v3031 = vrsqrt.pop %v3029
        %v3034 = vcombine.low %v3030, %v3031
        %v3036 = vunpack.c.l.s4 1966171168
        %v3037 = vunpack.c.0.s8 %v3036
        %v3038 = vlaneseq
        %v3039 = vshrl.u32 %v3038, 7
        %v3040 = vsub.s32 %v3037, %v3039
        %v3041 = vrot.slane %v3034, %v3040
        %v3043 = vunpack.c.l.s4 1966171168
        %v3044 = vunpack.c.0.s8 %v3043
        %v3045 = vlaneseq
        %v3046 = vshrl.u32 %v3045, 7
        %v3047 = vsub.s32 %v3044, %v3046
        %v3048 = vrot.slane %v3041, %v3047
        %v3050 = vmul.f32 %v2994, %v3048
        %v3052 = vlaneseq
        %v3053 = vshrl.u32 %v3052, 7
        %v3054 = vsub.s32 0, %v3053
        %v3055 = vrot.slane %v3050, %v3054
        %v3056 = vlaneseq
        %v3057 = vshrl.u32 %v3056, 7
        %v3058 = vsub.s32 1, %v3057
        %v3059 = vrot.slane %v3050, %v3058
        %v3062 = vmul.f32 %v3008, %v3055
        %v3063 = vmul.f32 %v3009, %v3059
        %v3066 = vcombine.low %v3062, %v3063
        %v3068 = vunpack.c.l.s4 1966171168
        %v3069 = vunpack.c.0.s8 %v3068
        %v3070 = vlaneseq
        %v3071 = vshrl.u32 %v3070, 7
        %v3072 = vsub.s32 %v3069, %v3071
        %v3073 = vrot.slane %v3066, %v3072
        %v3075 = vunpack.c.l.s4 1966171168
        %v3076 = vunpack.c.0.s8 %v3075
        %v3077 = vlaneseq
        %v3078 = vshrl.u32 %v3077, 7
        %v3079 = vsub.s32 %v3076, %v3078
        %v3080 = vrot.slane %v3073, %v3079
        %v3082 = vsub.f32 %v2995, %v3080
        %v3083 = vmul.f32 %v2988, %v3055
        %v3084 = vmul.f32 %v2990, %v3059
        %v3086 = vlaneseq
        %v3087 = vshrl.u32 %v3086, 7
        %v3088 = vsub.s32 0, %v3087
        %v3089 = vrot.slane %v3082, %v3088
        %v3090 = vlaneseq
        %v3091 = vshrl.u32 %v3090, 7
        %v3092 = vsub.s32 1, %v3091
        %v3093 = vrot.slane %v3082, %v3092
        %v3096 = vadd.f32 %v3083, %v3089
        %v3097 = vadd.f32 %v3084, %v3093
        %v3098 = vxor.u32 %v3096, 2147483648
        %v3099 = vxor.u32 %v3097, 2147483648
        %v3100 = vmul.f32 %v3098, 1.442695
        %v3101 = vpow.pop %v3100
        %v3102 = vmul.f32 %v3099, 1.442695
        %v3103 = vpow.pop %v3102
        %v3104 = vadd.f32 %v3101, 1.0
        %v3105 = vadd.f32 %v3103, 1.0
        %v3106 = vrcp.pop %v3104
        %v3107 = vmul.f32 1.0, %v3106
        %v3108 = vrcp.pop %v3105
        %v3109 = vmul.f32 1.0, %v3108
        %v3110 = vld [vmem:[#allocation10] sm:$0xff]
        %v3111 = vld [vmem:[#allocation10 + $0x8] sm:$0xff]
        %v3112 = vld [vmem:[#allocation10 + $0x10] sm:$0xff]
        %v3113 = vld [vmem:[#allocation10 + $0x18] sm:$0xff]
        %v3114 = vld [vmem:[#allocation10 + $0x20] sm:$0xff]
        %v3115 = vld [vmem:[#allocation10 + $0x28] sm:$0xff]
        %v3116 = vld [vmem:[#allocation10 + $0x30] sm:$0xff]
        %v3117 = vld [vmem:[#allocation10 + $0x38] sm:$0xff]
        %v3118 = vld [vmem:[#allocation10 + $0x40] sm:$0xff]
        %v3119 = vld [vmem:[#allocation10 + $0x48] sm:$0xff]
        %v3120 = vld [vmem:[#allocation10 + $0x50] sm:$0xff]
        %v3121 = vld [vmem:[#allocation10 + $0x58] sm:$0xff]
        %v3122 = vld [vmem:[#allocation10 + $0x60] sm:$0xff]
        %v3123 = vld [vmem:[#allocation10 + $0x68] sm:$0xff]
        %v3124 = vld [vmem:[#allocation10 + $0x70] sm:$0xff]
        %v3125 = vld [vmem:[#allocation10 + $0x78] sm:$0xff]
        %v3126 = vld [vmem:[#allocation10 + $0x80] sm:$0xff]
        %v3127 = vld [vmem:[#allocation10 + $0x88] sm:$0xff]
        %v3128 = vld [vmem:[#allocation10 + $0x90] sm:$0xff]
        %v3129 = vld [vmem:[#allocation10 + $0x98] sm:$0xff]
        %v3130 = vld [vmem:[#allocation10 + $0xa0] sm:$0xff]
        %v3131 = vld [vmem:[#allocation10 + $0xa8] sm:$0xff]
        %v3132 = vld [vmem:[#allocation10 + $0xb0] sm:$0xff]
        %v3133 = vld [vmem:[#allocation10 + $0xb8] sm:$0xff]
        %v3134 = vld [vmem:[#allocation10 + $0xc0] sm:$0xff]
        %v3135 = vld [vmem:[#allocation10 + $0xc8] sm:$0xff]
        %v3136 = vld [vmem:[#allocation10 + $0xd0] sm:$0xff]
        %v3137 = vld [vmem:[#allocation10 + $0xd8] sm:$0xff]
        %v3138 = vld [vmem:[#allocation10 + $0xe0] sm:$0xff]
        %v3139 = vld [vmem:[#allocation10 + $0xe8] sm:$0xff]
        %v3140 = vld [vmem:[#allocation10 + $0xf0] sm:$0xff]
        %v3141 = vld [vmem:[#allocation10 + $0xf8] sm:$0xff]
        %v3142 = vld [vmem:[#allocation10 + $0x100] sm:$0xff]
        %v3143 = vld [vmem:[#allocation10 + $0x108] sm:$0xff]
        %v3144 = vld [vmem:[#allocation10 + $0x110] sm:$0xff]
        %v3145 = vld [vmem:[#allocation10 + $0x118] sm:$0xff]
        %v3146 = vld [vmem:[#allocation10 + $0x120] sm:$0xff]
        %v3147 = vld [vmem:[#allocation10 + $0x128] sm:$0xff]
        %v3148 = vld [vmem:[#allocation10 + $0x130] sm:$0xff]
        %v3149 = vld [vmem:[#allocation10 + $0x138] sm:$0xff]
        %v3150 = vld [vmem:[#allocation10 + $0x140] sm:$0xff]
        %v3151 = vld [vmem:[#allocation10 + $0x148] sm:$0xff]
        %v3152 = vld [vmem:[#allocation10 + $0x150] sm:$0xff]
        %v3153 = vld [vmem:[#allocation10 + $0x158] sm:$0xff]
        %v3154 = vld [vmem:[#allocation10 + $0x160] sm:$0xff]
        %v3155 = vld [vmem:[#allocation10 + $0x168] sm:$0xff]
        %v3156 = vld [vmem:[#allocation10 + $0x170] sm:$0xff]
        %v3157 = vld [vmem:[#allocation10 + $0x178] sm:$0xff]
        %v3158 = vld [vmem:[#allocation10 + $0x180] sm:$0xff]
        %v3159 = vld [vmem:[#allocation10 + $0x188] sm:$0xff]
        %v3160 = vld [vmem:[#allocation10 + $0x190] sm:$0xff]
        %v3161 = vld [vmem:[#allocation10 + $0x198] sm:$0xff]
        %v3162 = vld [vmem:[#allocation10 + $0x1a0] sm:$0xff]
        %v3163 = vld [vmem:[#allocation10 + $0x1a8] sm:$0xff]
        %v3164 = vld [vmem:[#allocation10 + $0x1b0] sm:$0xff]
        %v3165 = vld [vmem:[#allocation10 + $0x1b8] sm:$0xff]
        %v3166 = vld [vmem:[#allocation10 + $0x1c0] sm:$0xff]
        %v3167 = vld [vmem:[#allocation10 + $0x1c8] sm:$0xff]
        %v3168 = vld [vmem:[#allocation10 + $0x1d0] sm:$0xff]
        %v3169 = vld [vmem:[#allocation10 + $0x1d8] sm:$0xff]
        %v3170 = vld [vmem:[#allocation10 + $0x1e0] sm:$0xff]
        %v3171 = vld [vmem:[#allocation10 + $0x1e8] sm:$0xff]
        %v3172 = vld [vmem:[#allocation10 + $0x1f0] sm:$0xff]
        %v3173 = vld [vmem:[#allocation10 + $0x1f8] sm:$0xff]
        %v3174 = vpack.c.bf16 %v3107, %v3107
        %v3175 = vpack.c.bf16 %v3109, %v3109
        %v3176 = vld [vmem:[#allocation3 + $0x25] sm:$0xf]
        %v3178 = vlaneseq
        %v3179 = vshrl.u32 %v3178, 7
        %v3180 = vsub.s32 0, %v3179
        %v3181 = vrot.slane %v3176, %v3180
        %v3182 = vlaneseq
        %v3183 = vshrl.u32 %v3182, 7
        %v3184 = vsub.s32 1, %v3183
        %v3185 = vrot.slane %v3176, %v3184
        %v3186 = vlaneseq
        %v3187 = vshrl.u32 %v3186, 7
        %v3188 = vsub.s32 2, %v3187
        %v3189 = vrot.slane %v3176, %v3188
        %v3190 = vlaneseq
        %v3191 = vshrl.u32 %v3190, 7
        %v3192 = vsub.s32 3, %v3191
        %v3193 = vrot.slane %v3176, %v3192
        %v3262 = vunpack.c.l.b16 %v3110
        %v3263 = vunpack.c.h.b16 %v3110
        %v3264 = vunpack.c.l.b16 %v3111
        %v3265 = vunpack.c.h.b16 %v3111
        %v3266 = vunpack.c.l.b16 %v3112
        %v3267 = vunpack.c.h.b16 %v3112
        %v3268 = vunpack.c.l.b16 %v3113
        %v3269 = vunpack.c.h.b16 %v3113
        %v3270 = vunpack.c.l.b16 %v3114
        %v3271 = vunpack.c.h.b16 %v3114
        %v3272 = vunpack.c.l.b16 %v3115
        %v3273 = vunpack.c.h.b16 %v3115
        %v3274 = vunpack.c.l.b16 %v3116
        %v3275 = vunpack.c.h.b16 %v3116
        %v3276 = vunpack.c.l.b16 %v3117
        %v3277 = vunpack.c.h.b16 %v3117
        %v3278 = vunpack.c.l.b16 %v3118
        %v3279 = vunpack.c.h.b16 %v3118
        %v3280 = vunpack.c.l.b16 %v3119
        %v3281 = vunpack.c.h.b16 %v3119
        %v3282 = vunpack.c.l.b16 %v3120
        %v3283 = vunpack.c.h.b16 %v3120
        %v3284 = vunpack.c.l.b16 %v3121
        %v3285 = vunpack.c.h.b16 %v3121
        %v3286 = vunpack.c.l.b16 %v3122
        %v3287 = vunpack.c.h.b16 %v3122
        %v3288 = vunpack.c.l.b16 %v3123
        %v3289 = vunpack.c.h.b16 %v3123
        %v3290 = vunpack.c.l.b16 %v3124
        %v3291 = vunpack.c.h.b16 %v3124
        %v3292 = vunpack.c.l.b16 %v3125
        %v3293 = vunpack.c.h.b16 %v3125
        %v3294 = vunpack.c.l.b16 %v3126
        %v3295 = vunpack.c.h.b16 %v3126
        %v3296 = vunpack.c.l.b16 %v3127
        %v3297 = vunpack.c.h.b16 %v3127
        %v3298 = vunpack.c.l.b16 %v3128
        %v3299 = vunpack.c.h.b16 %v3128
        %v3300 = vunpack.c.l.b16 %v3129
        %v3301 = vunpack.c.h.b16 %v3129
        %v3302 = vunpack.c.l.b16 %v3130
        %v3303 = vunpack.c.h.b16 %v3130
        %v3304 = vunpack.c.l.b16 %v3131
        %v3305 = vunpack.c.h.b16 %v3131
        %v3306 = vunpack.c.l.b16 %v3132
        %v3307 = vunpack.c.h.b16 %v3132
        %v3308 = vunpack.c.l.b16 %v3133
        %v3309 = vunpack.c.h.b16 %v3133
        %v3310 = vunpack.c.l.b16 %v3134
        %v3311 = vunpack.c.h.b16 %v3134
        %v3312 = vunpack.c.l.b16 %v3135
        %v3313 = vunpack.c.h.b16 %v3135
        %v3314 = vunpack.c.l.b16 %v3136
        %v3315 = vunpack.c.h.b16 %v3136
        %v3316 = vunpack.c.l.b16 %v3137
        %v3317 = vunpack.c.h.b16 %v3137
        %v3318 = vunpack.c.l.b16 %v3138
        %v3319 = vunpack.c.h.b16 %v3138
        %v3320 = vunpack.c.l.b16 %v3139
        %v3321 = vunpack.c.h.b16 %v3139
        %v3322 = vunpack.c.l.b16 %v3140
        %v3323 = vunpack.c.h.b16 %v3140
        %v3324 = vunpack.c.l.b16 %v3141
        %v3325 = vunpack.c.h.b16 %v3141
        %v3326 = vunpack.c.l.b16 %v3142
        %v3327 = vunpack.c.h.b16 %v3142
        %v3328 = vunpack.c.l.b16 %v3143
        %v3329 = vunpack.c.h.b16 %v3143
        %v3330 = vunpack.c.l.b16 %v3144
        %v3331 = vunpack.c.h.b16 %v3144
        %v3332 = vunpack.c.l.b16 %v3145
        %v3333 = vunpack.c.h.b16 %v3145
        %v3334 = vunpack.c.l.b16 %v3146
        %v3335 = vunpack.c.h.b16 %v3146
        %v3336 = vunpack.c.l.b16 %v3147
        %v3337 = vunpack.c.h.b16 %v3147
        %v3338 = vunpack.c.l.b16 %v3148
        %v3339 = vunpack.c.h.b16 %v3148
        %v3340 = vunpack.c.l.b16 %v3149
        %v3341 = vunpack.c.h.b16 %v3149
        %v3342 = vunpack.c.l.b16 %v3150
        %v3343 = vunpack.c.h.b16 %v3150
        %v3344 = vunpack.c.l.b16 %v3151
        %v3345 = vunpack.c.h.b16 %v3151
        %v3346 = vunpack.c.l.b16 %v3152
        %v3347 = vunpack.c.h.b16 %v3152
        %v3348 = vunpack.c.l.b16 %v3153
        %v3349 = vunpack.c.h.b16 %v3153
        %v3350 = vunpack.c.l.b16 %v3154
        %v3351 = vunpack.c.h.b16 %v3154
        %v3352 = vunpack.c.l.b16 %v3155
        %v3353 = vunpack.c.h.b16 %v3155
        %v3354 = vunpack.c.l.b16 %v3156
        %v3355 = vunpack.c.h.b16 %v3156
        %v3356 = vunpack.c.l.b16 %v3157
        %v3357 = vunpack.c.h.b16 %v3157
        %v3358 = vunpack.c.l.b16 %v3158
        %v3359 = vunpack.c.h.b16 %v3158
        %v3360 = vunpack.c.l.b16 %v3159
        %v3361 = vunpack.c.h.b16 %v3159
        %v3362 = vunpack.c.l.b16 %v3160
        %v3363 = vunpack.c.h.b16 %v3160
        %v3364 = vunpack.c.l.b16 %v3161
        %v3365 = vunpack.c.h.b16 %v3161
        %v3366 = vunpack.c.l.b16 %v3162
        %v3367 = vunpack.c.h.b16 %v3162
        %v3368 = vunpack.c.l.b16 %v3163
        %v3369 = vunpack.c.h.b16 %v3163
        %v3370 = vunpack.c.l.b16 %v3164
        %v3371 = vunpack.c.h.b16 %v3164
        %v3372 = vunpack.c.l.b16 %v3165
        %v3373 = vunpack.c.h.b16 %v3165
        %v3374 = vunpack.c.l.b16 %v3166
        %v3375 = vunpack.c.h.b16 %v3166
        %v3376 = vunpack.c.l.b16 %v3167
        %v3377 = vunpack.c.h.b16 %v3167
        %v3378 = vunpack.c.l.b16 %v3168
        %v3379 = vunpack.c.h.b16 %v3168
        %v3380 = vunpack.c.l.b16 %v3169
        %v3381 = vunpack.c.h.b16 %v3169
        %v3382 = vunpack.c.l.b16 %v3170
        %v3383 = vunpack.c.h.b16 %v3170
        %v3384 = vunpack.c.l.b16 %v3171
        %v3385 = vunpack.c.h.b16 %v3171
        %v3386 = vunpack.c.l.b16 %v3172
        %v3387 = vunpack.c.h.b16 %v3172
        %v3388 = vunpack.c.l.b16 %v3173
        %v3389 = vunpack.c.h.b16 %v3173
        %v3390 = vpack.c.b16 %v3266, %v3262
        %v3391 = vpack.c.b16 %v3267, %v3263
        %v3392 = vpack.c.b16 %v3268, %v3264
        %v3393 = vpack.c.b16 %v3269, %v3265
        %v3394 = vpack.c.b16 %v3274, %v3270
        %v3395 = vpack.c.b16 %v3275, %v3271
        %v3396 = vpack.c.b16 %v3276, %v3272
        %v3397 = vpack.c.b16 %v3277, %v3273
        %v3398 = vpack.c.b16 %v3282, %v3278
        %v3399 = vpack.c.b16 %v3283, %v3279
        %v3400 = vpack.c.b16 %v3284, %v3280
        %v3401 = vpack.c.b16 %v3285, %v3281
        %v3402 = vpack.c.b16 %v3290, %v3286
        %v3403 = vpack.c.b16 %v3291, %v3287
        %v3404 = vpack.c.b16 %v3292, %v3288
        %v3405 = vpack.c.b16 %v3293, %v3289
        %v3406 = vpack.c.b16 %v3298, %v3294
        %v3407 = vpack.c.b16 %v3299, %v3295
        %v3408 = vpack.c.b16 %v3300, %v3296
        %v3409 = vpack.c.b16 %v3301, %v3297
        %v3410 = vpack.c.b16 %v3306, %v3302
        %v3411 = vpack.c.b16 %v3307, %v3303
        %v3412 = vpack.c.b16 %v3308, %v3304
        %v3413 = vpack.c.b16 %v3309, %v3305
        %v3414 = vpack.c.b16 %v3314, %v3310
        %v3415 = vpack.c.b16 %v3315, %v3311
        %v3416 = vpack.c.b16 %v3316, %v3312
        %v3417 = vpack.c.b16 %v3317, %v3313
        %v3418 = vpack.c.b16 %v3322, %v3318
        %v3419 = vpack.c.b16 %v3323, %v3319
        %v3420 = vpack.c.b16 %v3324, %v3320
        %v3421 = vpack.c.b16 %v3325, %v3321
        %v3422 = vpack.c.b16 %v3330, %v3326
        %v3423 = vpack.c.b16 %v3331, %v3327
        %v3424 = vpack.c.b16 %v3332, %v3328
        %v3425 = vpack.c.b16 %v3333, %v3329
        %v3426 = vpack.c.b16 %v3338, %v3334
        %v3427 = vpack.c.b16 %v3339, %v3335
        %v3428 = vpack.c.b16 %v3340, %v3336
        %v3429 = vpack.c.b16 %v3341, %v3337
        %v3430 = vpack.c.b16 %v3346, %v3342
        %v3431 = vpack.c.b16 %v3347, %v3343
        %v3432 = vpack.c.b16 %v3348, %v3344
        %v3433 = vpack.c.b16 %v3349, %v3345
        %v3434 = vpack.c.b16 %v3354, %v3350
        %v3435 = vpack.c.b16 %v3355, %v3351
        %v3436 = vpack.c.b16 %v3356, %v3352
        %v3437 = vpack.c.b16 %v3357, %v3353
        %v3438 = vpack.c.b16 %v3362, %v3358
        %v3439 = vpack.c.b16 %v3363, %v3359
        %v3440 = vpack.c.b16 %v3364, %v3360
        %v3441 = vpack.c.b16 %v3365, %v3361
        %v3442 = vpack.c.b16 %v3370, %v3366
        %v3443 = vpack.c.b16 %v3371, %v3367
        %v3444 = vpack.c.b16 %v3372, %v3368
        %v3445 = vpack.c.b16 %v3373, %v3369
        %v3446 = vpack.c.b16 %v3378, %v3374
        %v3447 = vpack.c.b16 %v3379, %v3375
        %v3448 = vpack.c.b16 %v3380, %v3376
        %v3449 = vpack.c.b16 %v3381, %v3377
        %v3450 = vpack.c.b16 %v3386, %v3382
        %v3451 = vpack.c.b16 %v3387, %v3383
        %v3452 = vpack.c.b16 %v3388, %v3384
        %v3453 = vpack.c.b16 %v3389, %v3385
        %3518 = vmatprep.subr.bf16.mxu0 %v3391
        %3519 = vmatpush1.bf16.msra.mxu0 %v3390
        %3520 = vmatprep.subr.bf16.mxu0 %v3395
        %3521 = vmatpush1.bf16.msra.mxu0 %v3394
        %3522 = vmatprep.subr.bf16.mxu0 %v3399
        %3523 = vmatpush1.bf16.msra.mxu0 %v3398
        %3524 = vmatprep.subr.bf16.mxu0 %v3403
        %3525 = vmatpush1.bf16.msra.mxu0 %v3402
        %3526 = vmatprep.subr.bf16.mxu0 %v3407
        %3527 = vmatpush1.bf16.msra.mxu0 %v3406
        %3528 = vmatprep.subr.bf16.mxu0 %v3411
        %3529 = vmatpush1.bf16.msra.mxu0 %v3410
        %3530 = vmatprep.subr.bf16.mxu0 %v3415
        %3531 = vmatpush1.bf16.msra.mxu0 %v3414
        %3532 = vmatprep.subr.bf16.mxu0 %v3419
        %3533 = vmatpush1.bf16.msra.mxu0 %v3418
        %3534 = vmatprep.subr.bf16.mxu0 %v3423
        %3535 = vmatpush1.bf16.msra.mxu0 %v3422
        %3536 = vmatprep.subr.bf16.mxu0 %v3427
        %3537 = vmatpush1.bf16.msra.mxu0 %v3426
        %3538 = vmatprep.subr.bf16.mxu0 %v3431
        %3539 = vmatpush1.bf16.msra.mxu0 %v3430
        %3540 = vmatprep.subr.bf16.mxu0 %v3435
        %3541 = vmatpush1.bf16.msra.mxu0 %v3434
        %3542 = vmatprep.subr.bf16.mxu0 %v3439
        %3543 = vmatpush1.bf16.msra.mxu0 %v3438
        %3544 = vmatprep.subr.bf16.mxu0 %v3443
        %3545 = vmatpush1.bf16.msra.mxu0 %v3442
        %3546 = vmatprep.subr.bf16.mxu0 %v3447
        %3547 = vmatpush1.bf16.msra.mxu0 %v3446
        %3548 = vmatprep.subr.bf16.mxu0 %v3451
        %3549 = vmatpush1.bf16.msra.mxu0 %v3450
        %3550 = vmatprep.mubr.bf16.mxu0 %v3175
        %3551 = vmatmul.mubr.bf16.gmra.mrb[0].mxu0 %v3174
        %v3552 = vpop.f32.mrb[0].mxu0
        %v3553 = vadd.f32 %v3181, %v3552
        %v3554 = vpop.f32.mrb[0].mxu0
        %v3555 = vadd.f32 %v3185, %v3554
        %v3556 = vpop.f32.mrb[0].mxu0
        %v3557 = vpop.f32.mrb[0].mxu0
        %3558 = vdwg.mxu0
        %3559 = vmatprep.subr.bf16.mxu0 %v3393
        %3560 = vmatpush1.bf16.msra.mxu0 %v3392
        %3561 = vmatprep.subr.bf16.mxu0 %v3397
        %3562 = vmatpush1.bf16.msra.mxu0 %v3396
        %3563 = vmatprep.subr.bf16.mxu0 %v3401
        %3564 = vmatpush1.bf16.msra.mxu0 %v3400
        %3565 = vmatprep.subr.bf16.mxu0 %v3405
        %3566 = vmatpush1.bf16.msra.mxu0 %v3404
        %3567 = vmatprep.subr.bf16.mxu0 %v3409
        %3568 = vmatpush1.bf16.msra.mxu0 %v3408
        %3569 = vmatprep.subr.bf16.mxu0 %v3413
        %3570 = vmatpush1.bf16.msra.mxu0 %v3412
        %3571 = vmatprep.subr.bf16.mxu0 %v3417
        %3572 = vmatpush1.bf16.msra.mxu0 %v3416
        %3573 = vmatprep.subr.bf16.mxu0 %v3421
        %3574 = vmatpush1.bf16.msra.mxu0 %v3420
        %3575 = vmatprep.subr.bf16.mxu0 %v3425
        %3576 = vmatpush1.bf16.msra.mxu0 %v3424
        %3577 = vmatprep.subr.bf16.mxu0 %v3429
        %3578 = vmatpush1.bf16.msra.mxu0 %v3428
        %3579 = vmatprep.subr.bf16.mxu0 %v3433
        %3580 = vmatpush1.bf16.msra.mxu0 %v3432
        %3581 = vmatprep.subr.bf16.mxu0 %v3437
        %3582 = vmatpush1.bf16.msra.mxu0 %v3436
        %3583 = vmatprep.subr.bf16.mxu0 %v3441
        %3584 = vmatpush1.bf16.msra.mxu0 %v3440
        %3585 = vmatprep.subr.bf16.mxu0 %v3445
        %3586 = vmatpush1.bf16.msra.mxu0 %v3444
        %3587 = vmatprep.subr.bf16.mxu0 %v3449
        %3588 = vmatpush1.bf16.msra.mxu0 %v3448
        %3589 = vmatprep.subr.bf16.mxu0 %v3453
        %3590 = vmatpush1.bf16.msra.mxu0 %v3452
        %3591 = vmatprep.mubr.bf16.mxu0 %v3175
        %3592 = vmatmul.mubr.bf16.gmra.mrb[0].mxu0 %v3174
        %v3593 = vpop.f32.mrb[0].mxu0
        %v3594 = vadd.f32 %v3189, %v3593
        %v3595 = vpop.f32.mrb[0].mxu0
        %v3596 = vadd.f32 %v3193, %v3595
        %v3597 = vpop.f32.mrb[0].mxu0
        %v3598 = vpop.f32.mrb[0].mxu0
        %3599 = vdwg.mxu0
        %v3600 = vld [vmem:[#allocation3 + $0x29] sm:$0xf]
        %v3601 = vld [vmem:[#allocation3 + $0x2d] sm:$0xf]
        %v3602 = vrot.slane %v3553, 4
        %v3603 = vadd.f32 %v3553, %v3602
        %v3604 = vrot.slane %v3603, 2
        %v3605 = vadd.f32 %v3603, %v3604
        %v3606 = vrot.slane %v3605, 1
        %v3607 = vadd.f32 %v3605, %v3606
        %v3608 = vrot.slane %v3555, 4
        %v3609 = vadd.f32 %v3555, %v3608
        %v3610 = vrot.slane %v3609, 2
        %v3611 = vadd.f32 %v3609, %v3610
        %v3612 = vrot.slane %v3611, 1
        %v3613 = vadd.f32 %v3611, %v3612
        %v3614 = vrot.slane %v3594, 4
        %v3615 = vadd.f32 %v3594, %v3614
        %v3616 = vrot.slane %v3615, 2
        %v3617 = vadd.f32 %v3615, %v3616
        %v3618 = vrot.slane %v3617, 1
        %v3619 = vadd.f32 %v3617, %v3618
        %v3620 = vrot.slane %v3596, 4
        %v3621 = vadd.f32 %v3596, %v3620
        %v3622 = vrot.slane %v3621, 2
        %v3623 = vadd.f32 %v3621, %v3622
        %v3624 = vrot.slane %v3623, 1
        %v3625 = vadd.f32 %v3623, %v3624
        %v3626 = vmul.f32 %v3607, %v1043
        %v3627 = vmul.f32 %v3613, %v1043
        %v3628 = vmul.f32 %v3619, %v1043
        %v3629 = vmul.f32 %v3625, %v1043
        %v3630 = vsub.f32 %v3553, %v3626
        %v3631 = vsub.f32 %v3555, %v3627
        %v3632 = vsub.f32 %v3594, %v3628
        %v3633 = vsub.f32 %v3596, %v3629
        %v3634 = vmul.f32 %v3630, %v3630
        %v3635 = vmul.f32 %v3631, %v3631
        %v3636 = vmul.f32 %v3632, %v3632
        %v3637 = vmul.f32 %v3633, %v3633
        %v3638 = vrot.slane %v3634, 4
        %v3639 = vadd.f32 %v3634, %v3638
        %v3640 = vrot.slane %v3639, 2
        %v3641 = vadd.f32 %v3639, %v3640
        %v3642 = vrot.slane %v3641, 1
        %v3643 = vadd.f32 %v3641, %v3642
        %v3644 = vrot.slane %v3635, 4
        %v3645 = vadd.f32 %v3635, %v3644
        %v3646 = vrot.slane %v3645, 2
        %v3647 = vadd.f32 %v3645, %v3646
        %v3648 = vrot.slane %v3647, 1
        %v3649 = vadd.f32 %v3647, %v3648
        %v3650 = vrot.slane %v3636, 4
        %v3651 = vadd.f32 %v3636, %v3650
        %v3652 = vrot.slane %v3651, 2
        %v3653 = vadd.f32 %v3651, %v3652
        %v3654 = vrot.slane %v3653, 1
        %v3655 = vadd.f32 %v3653, %v3654
        %v3656 = vrot.slane %v3637, 4
        %v3657 = vadd.f32 %v3637, %v3656
        %v3658 = vrot.slane %v3657, 2
        %v3659 = vadd.f32 %v3657, %v3658
        %v3660 = vrot.slane %v3659, 1
        %v3661 = vadd.f32 %v3659, %v3660
        %v3662 = vmul.f32 %v3643, %v1043
        %v3663 = vmul.f32 %v3649, %v1043
        %v3664 = vmul.f32 %v3655, %v1043
        %v3665 = vmul.f32 %v3661, %v1043
        %v3666 = vadd.f32 %v3662, 1e-05
        %v3667 = vadd.f32 %v3663, 1e-05
        %v3668 = vadd.f32 %v3664, 1e-05
        %v3669 = vadd.f32 %v3665, 1e-05
        %v3670 = vrsqrt.pop %v3666
        %v3671 = vrsqrt.pop %v3667
        %v3672 = vrsqrt.pop %v3668
        %v3673 = vrsqrt.pop %v3669
        %v3678 = vcombine.low %v3670, %v3671
        %v3679 = vcombine.low %v3672, %v3673
        %v3681 = vunpack.c.l.s4 1966171168
        %v3682 = vunpack.c.0.s8 %v3681
        %v3683 = vlaneseq
        %v3684 = vshrl.u32 %v3683, 7
        %v3685 = vsub.s32 %v3682, %v3684
        %v3686 = vrot.slane %v3678, %v3685
        %v3688 = vunpack.c.l.s4 1966171168
        %v3689 = vunpack.c.0.s8 %v3688
        %v3690 = vlaneseq
        %v3691 = vshrl.u32 %v3690, 7
        %v3692 = vsub.s32 %v3689, %v3691
        %v3693 = vrot.slane %v3679, %v3692
        %v3694 = vcombine.low %v3686, %v3693
        %v3696 = vunpack.c.l.s4 1966171168
        %v3697 = vunpack.c.0.s8 %v3696
        %v3698 = vlaneseq
        %v3699 = vshrl.u32 %v3698, 7
        %v3700 = vsub.s32 %v3697, %v3699
        %v3701 = vrot.slane %v3694, %v3700
        %v3703 = vmul.f32 %v3600, %v3701
        %v3705 = vlaneseq
        %v3706 = vshrl.u32 %v3705, 7
        %v3707 = vsub.s32 0, %v3706
        %v3708 = vrot.slane %v3703, %v3707
        %v3709 = vlaneseq
        %v3710 = vshrl.u32 %v3709, 7
        %v3711 = vsub.s32 1, %v3710
        %v3712 = vrot.slane %v3703, %v3711
        %v3713 = vlaneseq
        %v3714 = vshrl.u32 %v3713, 7
        %v3715 = vsub.s32 2, %v3714
        %v3716 = vrot.slane %v3703, %v3715
        %v3717 = vlaneseq
        %v3718 = vshrl.u32 %v3717, 7
        %v3719 = vsub.s32 3, %v3718
        %v3720 = vrot.slane %v3703, %v3719
        %v3725 = vmul.f32 %v3626, %v3708
        %v3726 = vmul.f32 %v3627, %v3712
        %v3727 = vmul.f32 %v3628, %v3716
        %v3728 = vmul.f32 %v3629, %v3720
        %v3733 = vcombine.low %v3725, %v3726
        %v3734 = vcombine.low %v3727, %v3728
        %v3736 = vunpack.c.l.s4 1966171168
        %v3737 = vunpack.c.0.s8 %v3736
        %v3738 = vlaneseq
        %v3739 = vshrl.u32 %v3738, 7
        %v3740 = vsub.s32 %v3737, %v3739
        %v3741 = vrot.slane %v3733, %v3740
        %v3743 = vunpack.c.l.s4 1966171168
        %v3744 = vunpack.c.0.s8 %v3743
        %v3745 = vlaneseq
        %v3746 = vshrl.u32 %v3745, 7
        %v3747 = vsub.s32 %v3744, %v3746
        %v3748 = vrot.slane %v3734, %v3747
        %v3749 = vcombine.low %v3741, %v3748
        %v3751 = vunpack.c.l.s4 1966171168
        %v3752 = vunpack.c.0.s8 %v3751
        %v3753 = vlaneseq
        %v3754 = vshrl.u32 %v3753, 7
        %v3755 = vsub.s32 %v3752, %v3754
        %v3756 = vrot.slane %v3749, %v3755
        %v3758 = vsub.f32 %v3601, %v3756
        %v3759 = vmul.f32 %v3553, %v3708
        %v3760 = vmul.f32 %v3555, %v3712
        %v3761 = vmul.f32 %v3594, %v3716
        %v3762 = vmul.f32 %v3596, %v3720
        %v3764 = vlaneseq
        %v3765 = vshrl.u32 %v3764, 7
        %v3766 = vsub.s32 0, %v3765
        %v3767 = vrot.slane %v3758, %v3766
        %v3768 = vlaneseq
        %v3769 = vshrl.u32 %v3768, 7
        %v3770 = vsub.s32 1, %v3769
        %v3771 = vrot.slane %v3758, %v3770
        %v3772 = vlaneseq
        %v3773 = vshrl.u32 %v3772, 7
        %v3774 = vsub.s32 2, %v3773
        %v3775 = vrot.slane %v3758, %v3774
        %v3776 = vlaneseq
        %v3777 = vshrl.u32 %v3776, 7
        %v3778 = vsub.s32 3, %v3777
        %v3779 = vrot.slane %v3758, %v3778
        %v3784 = vadd.f32 %v3759, %v3767
        %v3785 = vadd.f32 %v3760, %v3771
        %v3786 = vadd.f32 %v3761, %v3775
        %v3787 = vadd.f32 %v3762, %v3779
        %v3788 = vxor.u32 %v3784, 2147483648
        %v3789 = vxor.u32 %v3785, 2147483648
        %v3790 = vxor.u32 %v3786, 2147483648
        %v3791 = vxor.u32 %v3787, 2147483648
        %v3792 = vmul.f32 %v3788, 1.442695
        %v3793 = vpow.pop %v3792
        %v3794 = vmul.f32 %v3789, 1.442695
        %v3795 = vpow.pop %v3794
        %v3796 = vmul.f32 %v3790, 1.442695
        %v3797 = vpow.pop %v3796
        %v3798 = vmul.f32 %v3791, 1.442695
        %v3799 = vpow.pop %v3798
        %v3800 = vadd.f32 %v3793, 1.0
        %v3801 = vadd.f32 %v3795, 1.0
        %v3802 = vadd.f32 %v3797, 1.0
        %v3803 = vadd.f32 %v3799, 1.0
        %v3804 = vrcp.pop %v3800
        %v3805 = vmul.f32 1.0, %v3804
        %v3806 = vrcp.pop %v3801
        %v3807 = vmul.f32 1.0, %v3806
        %v3808 = vrcp.pop %v3802
        %v3809 = vmul.f32 1.0, %v3808
        %v3810 = vrcp.pop %v3803
        %v3811 = vmul.f32 1.0, %v3810
        %v3812 = vld [vmem:[#allocation10 + $0x200] sm:$0xff]
        %v3813 = vld [vmem:[#allocation10 + $0x208] sm:$0xff]
        %v3814 = vld [vmem:[#allocation10 + $0x210] sm:$0xff]
        %v3815 = vld [vmem:[#allocation10 + $0x218] sm:$0xff]
        %v3816 = vld [vmem:[#allocation10 + $0x220] sm:$0xff]
        %v3817 = vld [vmem:[#allocation10 + $0x228] sm:$0xff]
        %v3818 = vld [vmem:[#allocation10 + $0x230] sm:$0xff]
        %v3819 = vld [vmem:[#allocation10 + $0x238] sm:$0xff]
        %v3820 = vld [vmem:[#allocation10 + $0x240] sm:$0xff]
        %v3821 = vld [vmem:[#allocation10 + $0x248] sm:$0xff]
        %v3822 = vld [vmem:[#allocation10 + $0x250] sm:$0xff]
        %v3823 = vld [vmem:[#allocation10 + $0x258] sm:$0xff]
        %v3824 = vld [vmem:[#allocation10 + $0x260] sm:$0xff]
        %v3825 = vld [vmem:[#allocation10 + $0x268] sm:$0xff]
        %v3826 = vld [vmem:[#allocation10 + $0x270] sm:$0xff]
        %v3827 = vld [vmem:[#allocation10 + $0x278] sm:$0xff]
        %v3828 = vld [vmem:[#allocation10 + $0x280] sm:$0xff]
        %v3829 = vld [vmem:[#allocation10 + $0x288] sm:$0xff]
        %v3830 = vld [vmem:[#allocation10 + $0x290] sm:$0xff]
        %v3831 = vld [vmem:[#allocation10 + $0x298] sm:$0xff]
        %v3832 = vld [vmem:[#allocation10 + $0x2a0] sm:$0xff]
        %v3833 = vld [vmem:[#allocation10 + $0x2a8] sm:$0xff]
        %v3834 = vld [vmem:[#allocation10 + $0x2b0] sm:$0xff]
        %v3835 = vld [vmem:[#allocation10 + $0x2b8] sm:$0xff]
        %v3836 = vld [vmem:[#allocation10 + $0x2c0] sm:$0xff]
        %v3837 = vld [vmem:[#allocation10 + $0x2c8] sm:$0xff]
        %v3838 = vld [vmem:[#allocation10 + $0x2d0] sm:$0xff]
        %v3839 = vld [vmem:[#allocation10 + $0x2d8] sm:$0xff]
        %v3840 = vld [vmem:[#allocation10 + $0x2e0] sm:$0xff]
        %v3841 = vld [vmem:[#allocation10 + $0x2e8] sm:$0xff]
        %v3842 = vld [vmem:[#allocation10 + $0x2f0] sm:$0xff]
        %v3843 = vld [vmem:[#allocation10 + $0x2f8] sm:$0xff]
        %v3844 = vld [vmem:[#allocation10 + $0x300] sm:$0xff]
        %v3845 = vld [vmem:[#allocation10 + $0x308] sm:$0xff]
        %v3846 = vld [vmem:[#allocation10 + $0x310] sm:$0xff]
        %v3847 = vld [vmem:[#allocation10 + $0x318] sm:$0xff]
        %v3848 = vld [vmem:[#allocation10 + $0x320] sm:$0xff]
        %v3849 = vld [vmem:[#allocation10 + $0x328] sm:$0xff]
        %v3850 = vld [vmem:[#allocation10 + $0x330] sm:$0xff]
        %v3851 = vld [vmem:[#allocation10 + $0x338] sm:$0xff]
        %v3852 = vld [vmem:[#allocation10 + $0x340] sm:$0xff]
        %v3853 = vld [vmem:[#allocation10 + $0x348] sm:$0xff]
        %v3854 = vld [vmem:[#allocation10 + $0x350] sm:$0xff]
        %v3855 = vld [vmem:[#allocation10 + $0x358] sm:$0xff]
        %v3856 = vld [vmem:[#allocation10 + $0x360] sm:$0xff]
        %v3857 = vld [vmem:[#allocation10 + $0x368] sm:$0xff]
        %v3858 = vld [vmem:[#allocation10 + $0x370] sm:$0xff]
        %v3859 = vld [vmem:[#allocation10 + $0x378] sm:$0xff]
        %v3860 = vld [vmem:[#allocation10 + $0x380] sm:$0xff]
        %v3861 = vld [vmem:[#allocation10 + $0x388] sm:$0xff]
        %v3862 = vld [vmem:[#allocation10 + $0x390] sm:$0xff]
        %v3863 = vld [vmem:[#allocation10 + $0x398] sm:$0xff]
        %v3864 = vld [vmem:[#allocation10 + $0x3a0] sm:$0xff]
        %v3865 = vld [vmem:[#allocation10 + $0x3a8] sm:$0xff]
        %v3866 = vld [vmem:[#allocation10 + $0x3b0] sm:$0xff]
        %v3867 = vld [vmem:[#allocation10 + $0x3b8] sm:$0xff]
        %v3868 = vld [vmem:[#allocation10 + $0x3c0] sm:$0xff]
        %v3869 = vld [vmem:[#allocation10 + $0x3c8] sm:$0xff]
        %v3870 = vld [vmem:[#allocation10 + $0x3d0] sm:$0xff]
        %v3871 = vld [vmem:[#allocation10 + $0x3d8] sm:$0xff]
        %v3872 = vld [vmem:[#allocation10 + $0x3e0] sm:$0xff]
        %v3873 = vld [vmem:[#allocation10 + $0x3e8] sm:$0xff]
        %v3874 = vld [vmem:[#allocation10 + $0x3f0] sm:$0xff]
        %v3875 = vld [vmem:[#allocation10 + $0x3f8] sm:$0xff]
        %v3876 = vld [vmem:[#allocation10 + $0x400] sm:$0xff]
        %v3877 = vld [vmem:[#allocation10 + $0x408] sm:$0xff]
        %v3878 = vld [vmem:[#allocation10 + $0x410] sm:$0xff]
        %v3879 = vld [vmem:[#allocation10 + $0x418] sm:$0xff]
        %v3880 = vld [vmem:[#allocation10 + $0x420] sm:$0xff]
        %v3881 = vld [vmem:[#allocation10 + $0x428] sm:$0xff]
        %v3882 = vld [vmem:[#allocation10 + $0x430] sm:$0xff]
        %v3883 = vld [vmem:[#allocation10 + $0x438] sm:$0xff]
        %v3884 = vld [vmem:[#allocation10 + $0x440] sm:$0xff]
        %v3885 = vld [vmem:[#allocation10 + $0x448] sm:$0xff]
        %v3886 = vld [vmem:[#allocation10 + $0x450] sm:$0xff]
        %v3887 = vld [vmem:[#allocation10 + $0x458] sm:$0xff]
        %v3888 = vld [vmem:[#allocation10 + $0x460] sm:$0xff]
        %v3889 = vld [vmem:[#allocation10 + $0x468] sm:$0xff]
        %v3890 = vld [vmem:[#allocation10 + $0x470] sm:$0xff]
        %v3891 = vld [vmem:[#allocation10 + $0x478] sm:$0xff]
        %v3892 = vld [vmem:[#allocation10 + $0x480] sm:$0xff]
        %v3893 = vld [vmem:[#allocation10 + $0x488] sm:$0xff]
        %v3894 = vld [vmem:[#allocation10 + $0x490] sm:$0xff]
        %v3895 = vld [vmem:[#allocation10 + $0x498] sm:$0xff]
        %v3896 = vld [vmem:[#allocation10 + $0x4a0] sm:$0xff]
        %v3897 = vld [vmem:[#allocation10 + $0x4a8] sm:$0xff]
        %v3898 = vld [vmem:[#allocation10 + $0x4b0] sm:$0xff]
        %v3899 = vld [vmem:[#allocation10 + $0x4b8] sm:$0xff]
        %v3900 = vld [vmem:[#allocation10 + $0x4c0] sm:$0xff]
        %v3901 = vld [vmem:[#allocation10 + $0x4c8] sm:$0xff]
        %v3902 = vld [vmem:[#allocation10 + $0x4d0] sm:$0xff]
        %v3903 = vld [vmem:[#allocation10 + $0x4d8] sm:$0xff]
        %v3904 = vld [vmem:[#allocation10 + $0x4e0] sm:$0xff]
        %v3905 = vld [vmem:[#allocation10 + $0x4e8] sm:$0xff]
        %v3906 = vld [vmem:[#allocation10 + $0x4f0] sm:$0xff]
        %v3907 = vld [vmem:[#allocation10 + $0x4f8] sm:$0xff]
        %v3908 = vld [vmem:[#allocation10 + $0x500] sm:$0xff]
        %v3909 = vld [vmem:[#allocation10 + $0x508] sm:$0xff]
        %v3910 = vld [vmem:[#allocation10 + $0x510] sm:$0xff]
        %v3911 = vld [vmem:[#allocation10 + $0x518] sm:$0xff]
        %v3912 = vld [vmem:[#allocation10 + $0x520] sm:$0xff]
        %v3913 = vld [vmem:[#allocation10 + $0x528] sm:$0xff]
        %v3914 = vld [vmem:[#allocation10 + $0x530] sm:$0xff]
        %v3915 = vld [vmem:[#allocation10 + $0x538] sm:$0xff]
        %v3916 = vld [vmem:[#allocation10 + $0x540] sm:$0xff]
        %v3917 = vld [vmem:[#allocation10 + $0x548] sm:$0xff]
        %v3918 = vld [vmem:[#allocation10 + $0x550] sm:$0xff]
        %v3919 = vld [vmem:[#allocation10 + $0x558] sm:$0xff]
        %v3920 = vld [vmem:[#allocation10 + $0x560] sm:$0xff]
        %v3921 = vld [vmem:[#allocation10 + $0x568] sm:$0xff]
        %v3922 = vld [vmem:[#allocation10 + $0x570] sm:$0xff]
        %v3923 = vld [vmem:[#allocation10 + $0x578] sm:$0xff]
        %v3924 = vld [vmem:[#allocation10 + $0x580] sm:$0xff]
        %v3925 = vld [vmem:[#allocation10 + $0x588] sm:$0xff]
        %v3926 = vld [vmem:[#allocation10 + $0x590] sm:$0xff]
        %v3927 = vld [vmem:[#allocation10 + $0x598] sm:$0xff]
        %v3928 = vld [vmem:[#allocation10 + $0x5a0] sm:$0xff]
        %v3929 = vld [vmem:[#allocation10 + $0x5a8] sm:$0xff]
        %v3930 = vld [vmem:[#allocation10 + $0x5b0] sm:$0xff]
        %v3931 = vld [vmem:[#allocation10 + $0x5b8] sm:$0xff]
        %v3932 = vld [vmem:[#allocation10 + $0x5c0] sm:$0xff]
        %v3933 = vld [vmem:[#allocation10 + $0x5c8] sm:$0xff]
        %v3934 = vld [vmem:[#allocation10 + $0x5d0] sm:$0xff]
        %v3935 = vld [vmem:[#allocation10 + $0x5d8] sm:$0xff]
        %v3936 = vld [vmem:[#allocation10 + $0x5e0] sm:$0xff]
        %v3937 = vld [vmem:[#allocation10 + $0x5e8] sm:$0xff]
        %v3938 = vld [vmem:[#allocation10 + $0x5f0] sm:$0xff]
        %v3939 = vld [vmem:[#allocation10 + $0x5f8] sm:$0xff]
        %v3940 = vpack.c.bf16 %v3805, %v3805
        %v3941 = vpack.c.bf16 %v3807, %v3807
        %v3942 = vpack.c.bf16 %v3809, %v3809
        %v3943 = vpack.c.bf16 %v3811, %v3811
        %v3944 = vld [vmem:[#allocation3 + $0x31] sm:$0xf]
        %v3946 = vlaneseq
        %v3947 = vshrl.u32 %v3946, 7
        %v3948 = vsub.s32 0, %v3947
        %v3949 = vrot.slane %v3944, %v3948
        %v3950 = vlaneseq
        %v3951 = vshrl.u32 %v3950, 7
        %v3952 = vsub.s32 1, %v3951
        %v3953 = vrot.slane %v3944, %v3952
        %v3954 = vlaneseq
        %v3955 = vshrl.u32 %v3954, 7
        %v3956 = vsub.s32 2, %v3955
        %v3957 = vrot.slane %v3944, %v3956
        %v3958 = vlaneseq
        %v3959 = vshrl.u32 %v3958, 7
        %v3960 = vsub.s32 3, %v3959
        %v3961 = vrot.slane %v3944, %v3960
        %v4094 = vunpack.c.l.b16 %v3812
        %v4095 = vunpack.c.h.b16 %v3812
        %v4096 = vunpack.c.l.b16 %v3813
        %v4097 = vunpack.c.h.b16 %v3813
        %v4098 = vunpack.c.l.b16 %v3814
        %v4099 = vunpack.c.h.b16 %v3814
        %v4100 = vunpack.c.l.b16 %v3815
        %v4101 = vunpack.c.h.b16 %v3815
        %v4102 = vunpack.c.l.b16 %v3816
        %v4103 = vunpack.c.h.b16 %v3816
        %v4104 = vunpack.c.l.b16 %v3817
        %v4105 = vunpack.c.h.b16 %v3817
        %v4106 = vunpack.c.l.b16 %v3818
        %v4107 = vunpack.c.h.b16 %v3818
        %v4108 = vunpack.c.l.b16 %v3819
        %v4109 = vunpack.c.h.b16 %v3819
        %v4110 = vunpack.c.l.b16 %v3820
        %v4111 = vunpack.c.h.b16 %v3820
        %v4112 = vunpack.c.l.b16 %v3821
        %v4113 = vunpack.c.h.b16 %v3821
        %v4114 = vunpack.c.l.b16 %v3822
        %v4115 = vunpack.c.h.b16 %v3822
        %v4116 = vunpack.c.l.b16 %v3823
        %v4117 = vunpack.c.h.b16 %v3823
        %v4118 = vunpack.c.l.b16 %v3824
        %v4119 = vunpack.c.h.b16 %v3824
        %v4120 = vunpack.c.l.b16 %v3825
        %v4121 = vunpack.c.h.b16 %v3825
        %v4122 = vunpack.c.l.b16 %v3826
        %v4123 = vunpack.c.h.b16 %v3826
        %v4124 = vunpack.c.l.b16 %v3827
        %v4125 = vunpack.c.h.b16 %v3827
        %v4126 = vunpack.c.l.b16 %v3828
        %v4127 = vunpack.c.h.b16 %v3828
        %v4128 = vunpack.c.l.b16 %v3829
        %v4129 = vunpack.c.h.b16 %v3829
        %v4130 = vunpack.c.l.b16 %v3830
        %v4131 = vunpack.c.h.b16 %v3830
        %v4132 = vunpack.c.l.b16 %v3831
        %v4133 = vunpack.c.h.b16 %v3831
        %v4134 = vunpack.c.l.b16 %v3832
        %v4135 = vunpack.c.h.b16 %v3832
        %v4136 = vunpack.c.l.b16 %v3833
        %v4137 = vunpack.c.h.b16 %v3833
        %v4138 = vunpack.c.l.b16 %v3834
        %v4139 = vunpack.c.h.b16 %v3834
        %v4140 = vunpack.c.l.b16 %v3835
        %v4141 = vunpack.c.h.b16 %v3835
        %v4142 = vunpack.c.l.b16 %v3836
        %v4143 = vunpack.c.h.b16 %v3836
        %v4144 = vunpack.c.l.b16 %v3837
        %v4145 = vunpack.c.h.b16 %v3837
        %v4146 = vunpack.c.l.b16 %v3838
        %v4147 = vunpack.c.h.b16 %v3838
        %v4148 = vunpack.c.l.b16 %v3839
        %v4149 = vunpack.c.h.b16 %v3839
        %v4150 = vunpack.c.l.b16 %v3840
        %v4151 = vunpack.c.h.b16 %v3840
        %v4152 = vunpack.c.l.b16 %v3841
        %v4153 = vunpack.c.h.b16 %v3841
        %v4154 = vunpack.c.l.b16 %v3842
        %v4155 = vunpack.c.h.b16 %v3842
        %v4156 = vunpack.c.l.b16 %v3843
        %v4157 = vunpack.c.h.b16 %v3843
        %v4158 = vunpack.c.l.b16 %v3844
        %v4159 = vunpack.c.h.b16 %v3844
        %v4160 = vunpack.c.l.b16 %v3845
        %v4161 = vunpack.c.h.b16 %v3845
        %v4162 = vunpack.c.l.b16 %v3846
        %v4163 = vunpack.c.h.b16 %v3846
        %v4164 = vunpack.c.l.b16 %v3847
        %v4165 = vunpack.c.h.b16 %v3847
        %v4166 = vunpack.c.l.b16 %v3848
        %v4167 = vunpack.c.h.b16 %v3848
        %v4168 = vunpack.c.l.b16 %v3849
        %v4169 = vunpack.c.h.b16 %v3849
        %v4170 = vunpack.c.l.b16 %v3850
        %v4171 = vunpack.c.h.b16 %v3850
        %v4172 = vunpack.c.l.b16 %v3851
        %v4173 = vunpack.c.h.b16 %v3851
        %v4174 = vunpack.c.l.b16 %v3852
        %v4175 = vunpack.c.h.b16 %v3852
        %v4176 = vunpack.c.l.b16 %v3853
        %v4177 = vunpack.c.h.b16 %v3853
        %v4178 = vunpack.c.l.b16 %v3854
        %v4179 = vunpack.c.h.b16 %v3854
        %v4180 = vunpack.c.l.b16 %v3855
        %v4181 = vunpack.c.h.b16 %v3855
        %v4182 = vunpack.c.l.b16 %v3856
        %v4183 = vunpack.c.h.b16 %v3856
        %v4184 = vunpack.c.l.b16 %v3857
        %v4185 = vunpack.c.h.b16 %v3857
        %v4186 = vunpack.c.l.b16 %v3858
        %v4187 = vunpack.c.h.b16 %v3858
        %v4188 = vunpack.c.l.b16 %v3859
        %v4189 = vunpack.c.h.b16 %v3859
        %v4190 = vunpack.c.l.b16 %v3860
        %v4191 = vunpack.c.h.b16 %v3860
        %v4192 = vunpack.c.l.b16 %v3861
        %v4193 = vunpack.c.h.b16 %v3861
        %v4194 = vunpack.c.l.b16 %v3862
        %v4195 = vunpack.c.h.b16 %v3862
        %v4196 = vunpack.c.l.b16 %v3863
        %v4197 = vunpack.c.h.b16 %v3863
        %v4198 = vunpack.c.l.b16 %v3864
        %v4199 = vunpack.c.h.b16 %v3864
        %v4200 = vunpack.c.l.b16 %v3865
        %v4201 = vunpack.c.h.b16 %v3865
        %v4202 = vunpack.c.l.b16 %v3866
        %v4203 = vunpack.c.h.b16 %v3866
        %v4204 = vunpack.c.l.b16 %v3867
        %v4205 = vunpack.c.h.b16 %v3867
        %v4206 = vunpack.c.l.b16 %v3868
        %v4207 = vunpack.c.h.b16 %v3868
        %v4208 = vunpack.c.l.b16 %v3869
        %v4209 = vunpack.c.h.b16 %v3869
        %v4210 = vunpack.c.l.b16 %v3870
        %v4211 = vunpack.c.h.b16 %v3870
        %v4212 = vunpack.c.l.b16 %v3871
        %v4213 = vunpack.c.h.b16 %v3871
        %v4214 = vunpack.c.l.b16 %v3872
        %v4215 = vunpack.c.h.b16 %v3872
        %v4216 = vunpack.c.l.b16 %v3873
        %v4217 = vunpack.c.h.b16 %v3873
        %v4218 = vunpack.c.l.b16 %v3874
        %v4219 = vunpack.c.h.b16 %v3874
        %v4220 = vunpack.c.l.b16 %v3875
        %v4221 = vunpack.c.h.b16 %v3875
        %v4222 = vunpack.c.l.b16 %v3876
        %v4223 = vunpack.c.h.b16 %v3876
        %v4224 = vunpack.c.l.b16 %v3877
        %v4225 = vunpack.c.h.b16 %v3877
        %v4226 = vunpack.c.l.b16 %v3878
        %v4227 = vunpack.c.h.b16 %v3878
        %v4228 = vunpack.c.l.b16 %v3879
        %v4229 = vunpack.c.h.b16 %v3879
        %v4230 = vunpack.c.l.b16 %v3880
        %v4231 = vunpack.c.h.b16 %v3880
        %v4232 = vunpack.c.l.b16 %v3881
        %v4233 = vunpack.c.h.b16 %v3881
        %v4234 = vunpack.c.l.b16 %v3882
        %v4235 = vunpack.c.h.b16 %v3882
        %v4236 = vunpack.c.l.b16 %v3883
        %v4237 = vunpack.c.h.b16 %v3883
        %v4238 = vunpack.c.l.b16 %v3884
        %v4239 = vunpack.c.h.b16 %v3884
        %v4240 = vunpack.c.l.b16 %v3885
        %v4241 = vunpack.c.h.b16 %v3885
        %v4242 = vunpack.c.l.b16 %v3886
        %v4243 = vunpack.c.h.b16 %v3886
        %v4244 = vunpack.c.l.b16 %v3887
        %v4245 = vunpack.c.h.b16 %v3887
        %v4246 = vunpack.c.l.b16 %v3888
        %v4247 = vunpack.c.h.b16 %v3888
        %v4248 = vunpack.c.l.b16 %v3889
        %v4249 = vunpack.c.h.b16 %v3889
        %v4250 = vunpack.c.l.b16 %v3890
        %v4251 = vunpack.c.h.b16 %v3890
        %v4252 = vunpack.c.l.b16 %v3891
        %v4253 = vunpack.c.h.b16 %v3891
        %v4254 = vunpack.c.l.b16 %v3892
        %v4255 = vunpack.c.h.b16 %v3892
        %v4256 = vunpack.c.l.b16 %v3893
        %v4257 = vunpack.c.h.b16 %v3893
        %v4258 = vunpack.c.l.b16 %v3894
        %v4259 = vunpack.c.h.b16 %v3894
        %v4260 = vunpack.c.l.b16 %v3895
        %v4261 = vunpack.c.h.b16 %v3895
        %v4262 = vunpack.c.l.b16 %v3896
        %v4263 = vunpack.c.h.b16 %v3896
        %v4264 = vunpack.c.l.b16 %v3897
        %v4265 = vunpack.c.h.b16 %v3897
        %v4266 = vunpack.c.l.b16 %v3898
        %v4267 = vunpack.c.h.b16 %v3898
        %v4268 = vunpack.c.l.b16 %v3899
        %v4269 = vunpack.c.h.b16 %v3899
        %v4270 = vunpack.c.l.b16 %v3900
        %v4271 = vunpack.c.h.b16 %v3900
        %v4272 = vunpack.c.l.b16 %v3901
        %v4273 = vunpack.c.h.b16 %v3901
        %v4274 = vunpack.c.l.b16 %v3902
        %v4275 = vunpack.c.h.b16 %v3902
        %v4276 = vunpack.c.l.b16 %v3903
        %v4277 = vunpack.c.h.b16 %v3903
        %v4278 = vunpack.c.l.b16 %v3904
        %v4279 = vunpack.c.h.b16 %v3904
        %v4280 = vunpack.c.l.b16 %v3905
        %v4281 = vunpack.c.h.b16 %v3905
        %v4282 = vunpack.c.l.b16 %v3906
        %v4283 = vunpack.c.h.b16 %v3906
        %v4284 = vunpack.c.l.b16 %v3907
        %v4285 = vunpack.c.h.b16 %v3907
        %v4286 = vunpack.c.l.b16 %v3908
        %v4287 = vunpack.c.h.b16 %v3908
        %v4288 = vunpack.c.l.b16 %v3909
        %v4289 = vunpack.c.h.b16 %v3909
        %v4290 = vunpack.c.l.b16 %v3910
        %v4291 = vunpack.c.h.b16 %v3910
        %v4292 = vunpack.c.l.b16 %v3911
        %v4293 = vunpack.c.h.b16 %v3911
        %v4294 = vunpack.c.l.b16 %v3912
        %v4295 = vunpack.c.h.b16 %v3912
        %v4296 = vunpack.c.l.b16 %v3913
        %v4297 = vunpack.c.h.b16 %v3913
        %v4298 = vunpack.c.l.b16 %v3914
        %v4299 = vunpack.c.h.b16 %v3914
        %v4300 = vunpack.c.l.b16 %v3915
        %v4301 = vunpack.c.h.b16 %v3915
        %v4302 = vunpack.c.l.b16 %v3916
        %v4303 = vunpack.c.h.b16 %v3916
        %v4304 = vunpack.c.l.b16 %v3917
        %v4305 = vunpack.c.h.b16 %v3917
        %v4306 = vunpack.c.l.b16 %v3918
        %v4307 = vunpack.c.h.b16 %v3918
        %v4308 = vunpack.c.l.b16 %v3919
        %v4309 = vunpack.c.h.b16 %v3919
        %v4310 = vunpack.c.l.b16 %v3920
        %v4311 = vunpack.c.h.b16 %v3920
        %v4312 = vunpack.c.l.b16 %v3921
        %v4313 = vunpack.c.h.b16 %v3921
        %v4314 = vunpack.c.l.b16 %v3922
        %v4315 = vunpack.c.h.b16 %v3922
        %v4316 = vunpack.c.l.b16 %v3923
        %v4317 = vunpack.c.h.b16 %v3923
        %v4318 = vunpack.c.l.b16 %v3924
        %v4319 = vunpack.c.h.b16 %v3924
        %v4320 = vunpack.c.l.b16 %v3925
        %v4321 = vunpack.c.h.b16 %v3925
        %v4322 = vunpack.c.l.b16 %v3926
        %v4323 = vunpack.c.h.b16 %v3926
        %v4324 = vunpack.c.l.b16 %v3927
        %v4325 = vunpack.c.h.b16 %v3927
        %v4326 = vunpack.c.l.b16 %v3928
        %v4327 = vunpack.c.h.b16 %v3928
        %v4328 = vunpack.c.l.b16 %v3929
        %v4329 = vunpack.c.h.b16 %v3929
        %v4330 = vunpack.c.l.b16 %v3930
        %v4331 = vunpack.c.h.b16 %v3930
        %v4332 = vunpack.c.l.b16 %v3931
        %v4333 = vunpack.c.h.b16 %v3931
        %v4334 = vunpack.c.l.b16 %v3932
        %v4335 = vunpack.c.h.b16 %v3932
        %v4336 = vunpack.c.l.b16 %v3933
        %v4337 = vunpack.c.h.b16 %v3933
        %v4338 = vunpack.c.l.b16 %v3934
        %v4339 = vunpack.c.h.b16 %v3934
        %v4340 = vunpack.c.l.b16 %v3935
        %v4341 = vunpack.c.h.b16 %v3935
        %v4342 = vunpack.c.l.b16 %v3936
        %v4343 = vunpack.c.h.b16 %v3936
        %v4344 = vunpack.c.l.b16 %v3937
        %v4345 = vunpack.c.h.b16 %v3937
        %v4346 = vunpack.c.l.b16 %v3938
        %v4347 = vunpack.c.h.b16 %v3938
        %v4348 = vunpack.c.l.b16 %v3939
        %v4349 = vunpack.c.h.b16 %v3939
        %v4350 = vpack.c.b16 %v4098, %v4094
        %v4351 = vpack.c.b16 %v4099, %v4095
        %v4352 = vpack.c.b16 %v4100, %v4096
        %v4353 = vpack.c.b16 %v4101, %v4097
        %v4354 = vpack.c.b16 %v4106, %v4102
        %v4355 = vpack.c.b16 %v4107, %v4103
        %v4356 = vpack.c.b16 %v4108, %v4104
        %v4357 = vpack.c.b16 %v4109, %v4105
        %v4358 = vpack.c.b16 %v4114, %v4110
        %v4359 = vpack.c.b16 %v4115, %v4111
        %v4360 = vpack.c.b16 %v4116, %v4112
        %v4361 = vpack.c.b16 %v4117, %v4113
        %v4362 = vpack.c.b16 %v4122, %v4118
        %v4363 = vpack.c.b16 %v4123, %v4119
        %v4364 = vpack.c.b16 %v4124, %v4120
        %v4365 = vpack.c.b16 %v4125, %v4121
        %v4366 = vpack.c.b16 %v4130, %v4126
        %v4367 = vpack.c.b16 %v4131, %v4127
        %v4368 = vpack.c.b16 %v4132, %v4128
        %v4369 = vpack.c.b16 %v4133, %v4129
        %v4370 = vpack.c.b16 %v4138, %v4134
        %v4371 = vpack.c.b16 %v4139, %v4135
        %v4372 = vpack.c.b16 %v4140, %v4136
        %v4373 = vpack.c.b16 %v4141, %v4137
        %v4374 = vpack.c.b16 %v4146, %v4142
        %v4375 = vpack.c.b16 %v4147, %v4143
        %v4376 = vpack.c.b16 %v4148, %v4144
        %v4377 = vpack.c.b16 %v4149, %v4145
        %v4378 = vpack.c.b16 %v4154, %v4150
        %v4379 = vpack.c.b16 %v4155, %v4151
        %v4380 = vpack.c.b16 %v4156, %v4152
        %v4381 = vpack.c.b16 %v4157, %v4153
        %v4382 = vpack.c.b16 %v4162, %v4158
        %v4383 = vpack.c.b16 %v4163, %v4159
        %v4384 = vpack.c.b16 %v4164, %v4160
        %v4385 = vpack.c.b16 %v4165, %v4161
        %v4386 = vpack.c.b16 %v4170, %v4166
        %v4387 = vpack.c.b16 %v4171, %v4167
        %v4388 = vpack.c.b16 %v4172, %v4168
        %v4389 = vpack.c.b16 %v4173, %v4169
        %v4390 = vpack.c.b16 %v4178, %v4174
        %v4391 = vpack.c.b16 %v4179, %v4175
        %v4392 = vpack.c.b16 %v4180, %v4176
        %v4393 = vpack.c.b16 %v4181, %v4177
        %v4394 = vpack.c.b16 %v4186, %v4182
        %v4395 = vpack.c.b16 %v4187, %v4183
        %v4396 = vpack.c.b16 %v4188, %v4184
        %v4397 = vpack.c.b16 %v4189, %v4185
        %v4398 = vpack.c.b16 %v4194, %v4190
        %v4399 = vpack.c.b16 %v4195, %v4191
        %v4400 = vpack.c.b16 %v4196, %v4192
        %v4401 = vpack.c.b16 %v4197, %v4193
        %v4402 = vpack.c.b16 %v4202, %v4198
        %v4403 = vpack.c.b16 %v4203, %v4199
        %v4404 = vpack.c.b16 %v4204, %v4200
        %v4405 = vpack.c.b16 %v4205, %v4201
        %v4406 = vpack.c.b16 %v4210, %v4206
        %v4407 = vpack.c.b16 %v4211, %v4207
        %v4408 = vpack.c.b16 %v4212, %v4208
        %v4409 = vpack.c.b16 %v4213, %v4209
        %v4410 = vpack.c.b16 %v4218, %v4214
        %v4411 = vpack.c.b16 %v4219, %v4215
        %v4412 = vpack.c.b16 %v4220, %v4216
        %v4413 = vpack.c.b16 %v4221, %v4217
        %v4414 = vpack.c.b16 %v4226, %v4222
        %v4415 = vpack.c.b16 %v4227, %v4223
        %v4416 = vpack.c.b16 %v4228, %v4224
        %v4417 = vpack.c.b16 %v4229, %v4225
        %v4418 = vpack.c.b16 %v4234, %v4230
        %v4419 = vpack.c.b16 %v4235, %v4231
        %v4420 = vpack.c.b16 %v4236, %v4232
        %v4421 = vpack.c.b16 %v4237, %v4233
        %v4422 = vpack.c.b16 %v4242, %v4238
        %v4423 = vpack.c.b16 %v4243, %v4239
        %v4424 = vpack.c.b16 %v4244, %v4240
        %v4425 = vpack.c.b16 %v4245, %v4241
        %v4426 = vpack.c.b16 %v4250, %v4246
        %v4427 = vpack.c.b16 %v4251, %v4247
        %v4428 = vpack.c.b16 %v4252, %v4248
        %v4429 = vpack.c.b16 %v4253, %v4249
        %v4430 = vpack.c.b16 %v4258, %v4254
        %v4431 = vpack.c.b16 %v4259, %v4255
        %v4432 = vpack.c.b16 %v4260, %v4256
        %v4433 = vpack.c.b16 %v4261, %v4257
        %v4434 = vpack.c.b16 %v4266, %v4262
        %v4435 = vpack.c.b16 %v4267, %v4263
        %v4436 = vpack.c.b16 %v4268, %v4264
        %v4437 = vpack.c.b16 %v4269, %v4265
        %v4438 = vpack.c.b16 %v4274, %v4270
        %v4439 = vpack.c.b16 %v4275, %v4271
        %v4440 = vpack.c.b16 %v4276, %v4272
        %v4441 = vpack.c.b16 %v4277, %v4273
        %v4442 = vpack.c.b16 %v4282, %v4278
        %v4443 = vpack.c.b16 %v4283, %v4279
        %v4444 = vpack.c.b16 %v4284, %v4280
        %v4445 = vpack.c.b16 %v4285, %v4281
        %v4446 = vpack.c.b16 %v4290, %v4286
        %v4447 = vpack.c.b16 %v4291, %v4287
        %v4448 = vpack.c.b16 %v4292, %v4288
        %v4449 = vpack.c.b16 %v4293, %v4289
        %v4450 = vpack.c.b16 %v4298, %v4294
        %v4451 = vpack.c.b16 %v4299, %v4295
        %v4452 = vpack.c.b16 %v4300, %v4296
        %v4453 = vpack.c.b16 %v4301, %v4297
        %v4454 = vpack.c.b16 %v4306, %v4302
        %v4455 = vpack.c.b16 %v4307, %v4303
        %v4456 = vpack.c.b16 %v4308, %v4304
        %v4457 = vpack.c.b16 %v4309, %v4305
        %v4458 = vpack.c.b16 %v4314, %v4310
        %v4459 = vpack.c.b16 %v4315, %v4311
        %v4460 = vpack.c.b16 %v4316, %v4312
        %v4461 = vpack.c.b16 %v4317, %v4313
        %v4462 = vpack.c.b16 %v4322, %v4318
        %v4463 = vpack.c.b16 %v4323, %v4319
        %v4464 = vpack.c.b16 %v4324, %v4320
        %v4465 = vpack.c.b16 %v4325, %v4321
        %v4466 = vpack.c.b16 %v4330, %v4326
        %v4467 = vpack.c.b16 %v4331, %v4327
        %v4468 = vpack.c.b16 %v4332, %v4328
        %v4469 = vpack.c.b16 %v4333, %v4329
        %v4470 = vpack.c.b16 %v4338, %v4334
        %v4471 = vpack.c.b16 %v4339, %v4335
        %v4472 = vpack.c.b16 %v4340, %v4336
        %v4473 = vpack.c.b16 %v4341, %v4337
        %v4474 = vpack.c.b16 %v4346, %v4342
        %v4475 = vpack.c.b16 %v4347, %v4343
        %v4476 = vpack.c.b16 %v4348, %v4344
        %v4477 = vpack.c.b16 %v4349, %v4345
        %4606 = vmatprep.subr.bf16.mxu0 %v4351
        %4607 = vmatpush1.bf16.msra.mxu0 %v4350
        %4608 = vmatprep.subr.bf16.mxu0 %v4355
        %4609 = vmatpush1.bf16.msra.mxu0 %v4354
        %4610 = vmatprep.subr.bf16.mxu0 %v4359
        %4611 = vmatpush1.bf16.msra.mxu0 %v4358
        %4612 = vmatprep.subr.bf16.mxu0 %v4363
        %4613 = vmatpush1.bf16.msra.mxu0 %v4362
        %4614 = vmatprep.subr.bf16.mxu0 %v4367
        %4615 = vmatpush1.bf16.msra.mxu0 %v4366
        %4616 = vmatprep.subr.bf16.mxu0 %v4371
        %4617 = vmatpush1.bf16.msra.mxu0 %v4370
        %4618 = vmatprep.subr.bf16.mxu0 %v4375
        %4619 = vmatpush1.bf16.msra.mxu0 %v4374
        %4620 = vmatprep.subr.bf16.mxu0 %v4379
        %4621 = vmatpush1.bf16.msra.mxu0 %v4378
        %4622 = vmatprep.subr.bf16.mxu0 %v4383
        %4623 = vmatpush1.bf16.msra.mxu0 %v4382
        %4624 = vmatprep.subr.bf16.mxu0 %v4387
        %4625 = vmatpush1.bf16.msra.mxu0 %v4386
        %4626 = vmatprep.subr.bf16.mxu0 %v4391
        %4627 = vmatpush1.bf16.msra.mxu0 %v4390
        %4628 = vmatprep.subr.bf16.mxu0 %v4395
        %4629 = vmatpush1.bf16.msra.mxu0 %v4394
        %4630 = vmatprep.subr.bf16.mxu0 %v4399
        %4631 = vmatpush1.bf16.msra.mxu0 %v4398
        %4632 = vmatprep.subr.bf16.mxu0 %v4403
        %4633 = vmatpush1.bf16.msra.mxu0 %v4402
        %4634 = vmatprep.subr.bf16.mxu0 %v4407
        %4635 = vmatpush1.bf16.msra.mxu0 %v4406
        %4636 = vmatprep.subr.bf16.mxu0 %v4411
        %4637 = vmatpush1.bf16.msra.mxu0 %v4410
        %4638 = vmatprep.mubr.bf16.mxu0 %v3941
        %4639 = vmatmul.mubr.bf16.gmra.mrb[0].mxu0 %v3940
        %v4640 = vpop.f32.mrb[0].mxu0
        %v4641 = vadd.f32 %v3949, %v4640
        %v4642 = vpop.f32.mrb[0].mxu0
        %v4643 = vadd.f32 %v3953, %v4642
        %v4644 = vpop.f32.mrb[0].mxu0
        %v4645 = vpop.f32.mrb[0].mxu0
        %4646 = vdwg.mxu0
        %4647 = vmatprep.subr.bf16.mxu0 %v4415
        %4648 = vmatpush1.bf16.msra.mxu0 %v4414
        %4649 = vmatprep.subr.bf16.mxu0 %v4419
        %4650 = vmatpush1.bf16.msra.mxu0 %v4418
        %4651 = vmatprep.subr.bf16.mxu0 %v4423
        %4652 = vmatpush1.bf16.msra.mxu0 %v4422
        %4653 = vmatprep.subr.bf16.mxu0 %v4427
        %4654 = vmatpush1.bf16.msra.mxu0 %v4426
        %4655 = vmatprep.subr.bf16.mxu0 %v4431
        %4656 = vmatpush1.bf16.msra.mxu0 %v4430
        %4657 = vmatprep.subr.bf16.mxu0 %v4435
        %4658 = vmatpush1.bf16.msra.mxu0 %v4434
        %4659 = vmatprep.subr.bf16.mxu0 %v4439
        %4660 = vmatpush1.bf16.msra.mxu0 %v4438
        %4661 = vmatprep.subr.bf16.mxu0 %v4443
        %4662 = vmatpush1.bf16.msra.mxu0 %v4442
        %4663 = vmatprep.subr.bf16.mxu0 %v4447
        %4664 = vmatpush1.bf16.msra.mxu0 %v4446
        %4665 = vmatprep.subr.bf16.mxu0 %v4451
        %4666 = vmatpush1.bf16.msra.mxu0 %v4450
        %4667 = vmatprep.subr.bf16.mxu0 %v4455
        %4668 = vmatpush1.bf16.msra.mxu0 %v4454
        %4669 = vmatprep.subr.bf16.mxu0 %v4459
        %4670 = vmatpush1.bf16.msra.mxu0 %v4458
        %4671 = vmatprep.subr.bf16.mxu0 %v4463
        %4672 = vmatpush1.bf16.msra.mxu0 %v4462
        %4673 = vmatprep.subr.bf16.mxu0 %v4467
        %4674 = vmatpush1.bf16.msra.mxu0 %v4466
        %4675 = vmatprep.subr.bf16.mxu0 %v4471
        %4676 = vmatpush1.bf16.msra.mxu0 %v4470
        %4677 = vmatprep.subr.bf16.mxu0 %v4475
        %4678 = vmatpush1.bf16.msra.mxu0 %v4474
        %4679 = vmatprep.mubr.bf16.mxu0 %v3943
        %4680 = vmatmul.mubr.bf16.gmra.mrb[0].mxu0 %v3942
        %v4681 = vpop.f32.mrb[0].mxu0
        %v4682 = vadd.f32 %v4641, %v4681
        %v4683 = vpop.f32.mrb[0].mxu0
        %v4684 = vadd.f32 %v4643, %v4683
        %v4685 = vpop.f32.mrb[0].mxu0
        %v4686 = vpop.f32.mrb[0].mxu0
        %4687 = vdwg.mxu0
        %4688 = vmatprep.subr.bf16.mxu0 %v4353
        %4689 = vmatpush1.bf16.msra.mxu0 %v4352
        %4690 = vmatprep.subr.bf16.mxu0 %v4357
        %4691 = vmatpush1.bf16.msra.mxu0 %v4356
        %4692 = vmatprep.subr.bf16.mxu0 %v4361
        %4693 = vmatpush1.bf16.msra.mxu0 %v4360
        %4694 = vmatprep.subr.bf16.mxu0 %v4365
        %4695 = vmatpush1.bf16.msra.mxu0 %v4364
        %4696 = vmatprep.subr.bf16.mxu0 %v4369
        %4697 = vmatpush1.bf16.msra.mxu0 %v4368
        %4698 = vmatprep.subr.bf16.mxu0 %v4373
        %4699 = vmatpush1.bf16.msra.mxu0 %v4372
        %4700 = vmatprep.subr.bf16.mxu0 %v4377
        %4701 = vmatpush1.bf16.msra.mxu0 %v4376
        %4702 = vmatprep.subr.bf16.mxu0 %v4381
        %4703 = vmatpush1.bf16.msra.mxu0 %v4380
        %4704 = vmatprep.subr.bf16.mxu0 %v4385
        %4705 = vmatpush1.bf16.msra.mxu0 %v4384
        %4706 = vmatprep.subr.bf16.mxu0 %v4389
        %4707 = vmatpush1.bf16.msra.mxu0 %v4388
        %4708 = vmatprep.subr.bf16.mxu0 %v4393
        %4709 = vmatpush1.bf16.msra.mxu0 %v4392
        %4710 = vmatprep.subr.bf16.mxu0 %v4397
        %4711 = vmatpush1.bf16.msra.mxu0 %v4396
        %4712 = vmatprep.subr.bf16.mxu0 %v4401
        %4713 = vmatpush1.bf16.msra.mxu0 %v4400
        %4714 = vmatprep.subr.bf16.mxu0 %v4405
        %4715 = vmatpush1.bf16.msra.mxu0 %v4404
        %4716 = vmatprep.subr.bf16.mxu0 %v4409
        %4717 = vmatpush1.bf16.msra.mxu0 %v4408
        %4718 = vmatprep.subr.bf16.mxu0 %v4413
        %4719 = vmatpush1.bf16.msra.mxu0 %v4412
        %4720 = vmatprep.mubr.bf16.mxu0 %v3941
        %4721 = vmatmul.mubr.bf16.gmra.mrb[0].mxu0 %v3940
        %v4722 = vpop.f32.mrb[0].mxu0
        %v4723 = vadd.f32 %v3957, %v4722
        %v4724 = vpop.f32.mrb[0].mxu0
        %v4725 = vadd.f32 %v3961, %v4724
        %v4726 = vpop.f32.mrb[0].mxu0
        %v4727 = vpop.f32.mrb[0].mxu0
        %4728 = vdwg.mxu0
        %4729 = vmatprep.subr.bf16.mxu0 %v4417
        %4730 = vmatpush1.bf16.msra.mxu0 %v4416
        %4731 = vmatprep.subr.bf16.mxu0 %v4421
        %4732 = vmatpush1.bf16.msra.mxu0 %v4420
        %4733 = vmatprep.subr.bf16.mxu0 %v4425
        %4734 = vmatpush1.bf16.msra.mxu0 %v4424
        %4735 = vmatprep.subr.bf16.mxu0 %v4429
        %4736 = vmatpush1.bf16.msra.mxu0 %v4428
        %4737 = vmatprep.subr.bf16.mxu0 %v4433
        %4738 = vmatpush1.bf16.msra.mxu0 %v4432
        %4739 = vmatprep.subr.bf16.mxu0 %v4437
        %4740 = vmatpush1.bf16.msra.mxu0 %v4436
        %4741 = vmatprep.subr.bf16.mxu0 %v4441
        %4742 = vmatpush1.bf16.msra.mxu0 %v4440
        %4743 = vmatprep.subr.bf16.mxu0 %v4445
        %4744 = vmatpush1.bf16.msra.mxu0 %v4444
        %4745 = vmatprep.subr.bf16.mxu0 %v4449
        %4746 = vmatpush1.bf16.msra.mxu0 %v4448
        %4747 = vmatprep.subr.bf16.mxu0 %v4453
        %4748 = vmatpush1.bf16.msra.mxu0 %v4452
        %4749 = vmatprep.subr.bf16.mxu0 %v4457
        %4750 = vmatpush1.bf16.msra.mxu0 %v4456
        %4751 = vmatprep.subr.bf16.mxu0 %v4461
        %4752 = vmatpush1.bf16.msra.mxu0 %v4460
        %4753 = vmatprep.subr.bf16.mxu0 %v4465
        %4754 = vmatpush1.bf16.msra.mxu0 %v4464
        %4755 = vmatprep.subr.bf16.mxu0 %v4469
        %4756 = vmatpush1.bf16.msra.mxu0 %v4468
        %4757 = vmatprep.subr.bf16.mxu0 %v4473
        %4758 = vmatpush1.bf16.msra.mxu0 %v4472
        %4759 = vmatprep.subr.bf16.mxu0 %v4477
        %4760 = vmatpush1.bf16.msra.mxu0 %v4476
        %4761 = vmatprep.mubr.bf16.mxu0 %v3943
        %4762 = vmatmul.mubr.bf16.gmra.mrb[0].mxu0 %v3942
        %v4763 = vpop.f32.mrb[0].mxu0
        %v4764 = vadd.f32 %v4723, %v4763
        %v4765 = vpop.f32.mrb[0].mxu0
        %v4766 = vadd.f32 %v4725, %v4765
        %v4767 = vpop.f32.mrb[0].mxu0
        %v4768 = vpop.f32.mrb[0].mxu0
        %4769 = vdwg.mxu0
        %v4770 = vld [vmem:[#allocation3 + $0x35] sm:$0xf]
        %v4771 = vld [vmem:[#allocation3 + $0x39] sm:$0xf]
        %v4772 = vrot.slane %v4682, 4
        %v4773 = vadd.f32 %v4682, %v4772
        %v4774 = vrot.slane %v4773, 2
        %v4775 = vadd.f32 %v4773, %v4774
        %v4776 = vrot.slane %v4775, 1
        %v4777 = vadd.f32 %v4775, %v4776
        %v4778 = vrot.slane %v4684, 4
        %v4779 = vadd.f32 %v4684, %v4778
        %v4780 = vrot.slane %v4779, 2
        %v4781 = vadd.f32 %v4779, %v4780
        %v4782 = vrot.slane %v4781, 1
        %v4783 = vadd.f32 %v4781, %v4782
        %v4784 = vrot.slane %v4764, 4
        %v4785 = vadd.f32 %v4764, %v4784
        %v4786 = vrot.slane %v4785, 2
        %v4787 = vadd.f32 %v4785, %v4786
        %v4788 = vrot.slane %v4787, 1
        %v4789 = vadd.f32 %v4787, %v4788
        %v4790 = vrot.slane %v4766, 4
        %v4791 = vadd.f32 %v4766, %v4790
        %v4792 = vrot.slane %v4791, 2
        %v4793 = vadd.f32 %v4791, %v4792
        %v4794 = vrot.slane %v4793, 1
        %v4795 = vadd.f32 %v4793, %v4794
        %v4796 = vmul.f32 %v4777, %v1043
        %v4797 = vmul.f32 %v4783, %v1043
        %v4798 = vmul.f32 %v4789, %v1043
        %v4799 = vmul.f32 %v4795, %v1043
        %v4800 = vsub.f32 %v4682, %v4796
        %v4801 = vsub.f32 %v4684, %v4797
        %v4802 = vsub.f32 %v4764, %v4798
        %v4803 = vsub.f32 %v4766, %v4799
        %v4804 = vmul.f32 %v4800, %v4800
        %v4805 = vmul.f32 %v4801, %v4801
        %v4806 = vmul.f32 %v4802, %v4802
        %v4807 = vmul.f32 %v4803, %v4803
        %v4808 = vrot.slane %v4804, 4
        %v4809 = vadd.f32 %v4804, %v4808
        %v4810 = vrot.slane %v4809, 2
        %v4811 = vadd.f32 %v4809, %v4810
        %v4812 = vrot.slane %v4811, 1
        %v4813 = vadd.f32 %v4811, %v4812
        %v4814 = vrot.slane %v4805, 4
        %v4815 = vadd.f32 %v4805, %v4814
        %v4816 = vrot.slane %v4815, 2
        %v4817 = vadd.f32 %v4815, %v4816
        %v4818 = vrot.slane %v4817, 1
        %v4819 = vadd.f32 %v4817, %v4818
        %v4820 = vrot.slane %v4806, 4
        %v4821 = vadd.f32 %v4806, %v4820
        %v4822 = vrot.slane %v4821, 2
        %v4823 = vadd.f32 %v4821, %v4822
        %v4824 = vrot.slane %v4823, 1
        %v4825 = vadd.f32 %v4823, %v4824
        %v4826 = vrot.slane %v4807, 4
        %v4827 = vadd.f32 %v4807, %v4826
        %v4828 = vrot.slane %v4827, 2
        %v4829 = vadd.f32 %v4827, %v4828
        %v4830 = vrot.slane %v4829, 1
        %v4831 = vadd.f32 %v4829, %v4830
        %v4832 = vmul.f32 %v4813, %v1043
        %v4833 = vmul.f32 %v4819, %v1043
        %v4834 = vmul.f32 %v4825, %v1043
        %v4835 = vmul.f32 %v4831, %v1043
        %v4836 = vadd.f32 %v4832, 1e-05
        %v4837 = vadd.f32 %v4833, 1e-05
        %v4838 = vadd.f32 %v4834, 1e-05
        %v4839 = vadd.f32 %v4835, 1e-05
        %v4840 = vrsqrt.pop %v4836
        %v4841 = vrsqrt.pop %v4837
        %v4842 = vrsqrt.pop %v4838
        %v4843 = vrsqrt.pop %v4839
        %v4848 = vcombine.low %v4840, %v4841
        %v4849 = vcombine.low %v4842, %v4843
        %v4851 = vunpack.c.l.s4 1966171168
        %v4852 = vunpack.c.0.s8 %v4851
        %v4853 = vlaneseq
        %v4854 = vshrl.u32 %v4853, 7
        %v4855 = vsub.s32 %v4852, %v4854
        %v4856 = vrot.slane %v4848, %v4855
        %v4858 = vunpack.c.l.s4 1966171168
        %v4859 = vunpack.c.0.s8 %v4858
        %v4860 = vlaneseq
        %v4861 = vshrl.u32 %v4860, 7
        %v4862 = vsub.s32 %v4859, %v4861
        %v4863 = vrot.slane %v4849, %v4862
        %v4864 = vcombine.low %v4856, %v4863
        %v4866 = vunpack.c.l.s4 1966171168
        %v4867 = vunpack.c.0.s8 %v4866
        %v4868 = vlaneseq
        %v4869 = vshrl.u32 %v4868, 7
        %v4870 = vsub.s32 %v4867, %v4869
        %v4871 = vrot.slane %v4864, %v4870
        %v4873 = vmul.f32 %v4770, %v4871
        %v4875 = vlaneseq
        %v4876 = vshrl.u32 %v4875, 7
        %v4877 = vsub.s32 0, %v4876
        %v4878 = vrot.slane %v4873, %v4877
        %v4879 = vlaneseq
        %v4880 = vshrl.u32 %v4879, 7
        %v4881 = vsub.s32 1, %v4880
        %v4882 = vrot.slane %v4873, %v4881
        %v4883 = vlaneseq
        %v4884 = vshrl.u32 %v4883, 7
        %v4885 = vsub.s32 2, %v4884
        %v4886 = vrot.slane %v4873, %v4885
        %v4887 = vlaneseq
        %v4888 = vshrl.u32 %v4887, 7
        %v4889 = vsub.s32 3, %v4888
        %v4890 = vrot.slane %v4873, %v4889
        %v4895 = vmul.f32 %v4796, %v4878
        %v4896 = vmul.f32 %v4797, %v4882
        %v4897 = vmul.f32 %v4798, %v4886
        %v4898 = vmul.f32 %v4799, %v4890
        %v4903 = vcombine.low %v4895, %v4896
        %v4904 = vcombine.low %v4897, %v4898
        %v4906 = vunpack.c.l.s4 1966171168
        %v4907 = vunpack.c.0.s8 %v4906
        %v4908 = vlaneseq
        %v4909 = vshrl.u32 %v4908, 7
        %v4910 = vsub.s32 %v4907, %v4909
        %v4911 = vrot.slane %v4903, %v4910
        %v4913 = vunpack.c.l.s4 1966171168
        %v4914 = vunpack.c.0.s8 %v4913
        %v4915 = vlaneseq
        %v4916 = vshrl.u32 %v4915, 7
        %v4917 = vsub.s32 %v4914, %v4916
        %v4918 = vrot.slane %v4904, %v4917
        %v4919 = vcombine.low %v4911, %v4918
        %v4921 = vunpack.c.l.s4 1966171168
        %v4922 = vunpack.c.0.s8 %v4921
        %v4923 = vlaneseq
        %v4924 = vshrl.u32 %v4923, 7
        %v4925 = vsub.s32 %v4922, %v4924
        %v4926 = vrot.slane %v4919, %v4925
        %v4928 = vsub.f32 %v4771, %v4926
        %v4929 = vmul.f32 %v4682, %v4878
        %v4930 = vmul.f32 %v4684, %v4882
        %v4931 = vmul.f32 %v4764, %v4886
        %v4932 = vmul.f32 %v4766, %v4890
        %v4934 = vlaneseq
        %v4935 = vshrl.u32 %v4934, 7
        %v4936 = vsub.s32 0, %v4935
        %v4937 = vrot.slane %v4928, %v4936
        %v4938 = vlaneseq
        %v4939 = vshrl.u32 %v4938, 7
        %v4940 = vsub.s32 1, %v4939
        %v4941 = vrot.slane %v4928, %v4940
        %v4942 = vlaneseq
        %v4943 = vshrl.u32 %v4942, 7
        %v4944 = vsub.s32 2, %v4943
        %v4945 = vrot.slane %v4928, %v4944
        %v4946 = vlaneseq
        %v4947 = vshrl.u32 %v4946, 7
        %v4948 = vsub.s32 3, %v4947
        %v4949 = vrot.slane %v4928, %v4948
        %v4954 = vadd.f32 %v4929, %v4937
        %v4955 = vadd.f32 %v4930, %v4941
        %v4956 = vadd.f32 %v4931, %v4945
        %v4957 = vadd.f32 %v4932, %v4949
        %v4958 = vxor.u32 %v4954, 2147483648
        %v4959 = vxor.u32 %v4955, 2147483648
        %v4960 = vxor.u32 %v4956, 2147483648
        %v4961 = vxor.u32 %v4957, 2147483648
        %v4962 = vmul.f32 %v4958, 1.442695
        %v4963 = vpow.pop %v4962
        %v4964 = vmul.f32 %v4959, 1.442695
        %v4965 = vpow.pop %v4964
        %v4966 = vmul.f32 %v4960, 1.442695
        %v4967 = vpow.pop %v4966
        %v4968 = vmul.f32 %v4961, 1.442695
        %v4969 = vpow.pop %v4968
        %v4970 = vadd.f32 %v4963, 1.0
        %v4971 = vadd.f32 %v4965, 1.0
        %v4972 = vadd.f32 %v4967, 1.0
        %v4973 = vadd.f32 %v4969, 1.0
        %v4974 = vrcp.pop %v4970
        %v4975 = vmul.f32 1.0, %v4974
        %v4976 = vrcp.pop %v4971
        %v4977 = vmul.f32 1.0, %v4976
        %v4978 = vrcp.pop %v4972
        %v4979 = vmul.f32 1.0, %v4978
        %v4980 = vrcp.pop %v4973
        %v4981 = vmul.f32 1.0, %v4980
        %v4982 = vld [vmem:[#allocation11] sm:$0xff]
        %v4983 = vld [vmem:[#allocation11 + $0x8] sm:$0xff]
        %v4984 = vld [vmem:[#allocation11 + $0x10] sm:$0xff]
        %v4985 = vld [vmem:[#allocation11 + $0x18] sm:$0xff]
        %v4986 = vld [vmem:[#allocation11 + $0x20] sm:$0xff]
        %v4987 = vld [vmem:[#allocation11 + $0x28] sm:$0xff]
        %v4988 = vld [vmem:[#allocation11 + $0x30] sm:$0xff]
        %v4989 = vld [vmem:[#allocation11 + $0x38] sm:$0xff]
        %v4990 = vld [vmem:[#allocation11 + $0x40] sm:$0xff]
        %v4991 = vld [vmem:[#allocation11 + $0x48] sm:$0xff]
        %v4992 = vld [vmem:[#allocation11 + $0x50] sm:$0xff]
        %v4993 = vld [vmem:[#allocation11 + $0x58] sm:$0xff]
        %v4994 = vld [vmem:[#allocation11 + $0x60] sm:$0xff]
        %v4995 = vld [vmem:[#allocation11 + $0x68] sm:$0xff]
        %v4996 = vld [vmem:[#allocation11 + $0x70] sm:$0xff]
        %v4997 = vld [vmem:[#allocation11 + $0x78] sm:$0xff]
        %v4998 = vld [vmem:[#allocation11 + $0x80] sm:$0xff]
        %v4999 = vld [vmem:[#allocation11 + $0x88] sm:$0xff]
        %v5000 = vld [vmem:[#allocation11 + $0x90] sm:$0xff]
        %v5001 = vld [vmem:[#allocation11 + $0x98] sm:$0xff]
        %v5002 = vld [vmem:[#allocation11 + $0xa0] sm:$0xff]
        %v5003 = vld [vmem:[#allocation11 + $0xa8] sm:$0xff]
        %v5004 = vld [vmem:[#allocation11 + $0xb0] sm:$0xff]
        %v5005 = vld [vmem:[#allocation11 + $0xb8] sm:$0xff]
        %v5006 = vld [vmem:[#allocation11 + $0xc0] sm:$0xff]
        %v5007 = vld [vmem:[#allocation11 + $0xc8] sm:$0xff]
        %v5008 = vld [vmem:[#allocation11 + $0xd0] sm:$0xff]
        %v5009 = vld [vmem:[#allocation11 + $0xd8] sm:$0xff]
        %v5010 = vld [vmem:[#allocation11 + $0xe0] sm:$0xff]
        %v5011 = vld [vmem:[#allocation11 + $0xe8] sm:$0xff]
        %v5012 = vld [vmem:[#allocation11 + $0xf0] sm:$0xff]
        %v5013 = vld [vmem:[#allocation11 + $0xf8] sm:$0xff]
        %v5014 = vld [vmem:[#allocation11 + $0x100] sm:$0xff]
        %v5015 = vld [vmem:[#allocation11 + $0x108] sm:$0xff]
        %v5016 = vld [vmem:[#allocation11 + $0x110] sm:$0xff]
        %v5017 = vld [vmem:[#allocation11 + $0x118] sm:$0xff]
        %v5018 = vld [vmem:[#allocation11 + $0x120] sm:$0xff]
        %v5019 = vld [vmem:[#allocation11 + $0x128] sm:$0xff]
        %v5020 = vld [vmem:[#allocation11 + $0x130] sm:$0xff]
        %v5021 = vld [vmem:[#allocation11 + $0x138] sm:$0xff]
        %v5022 = vld [vmem:[#allocation11 + $0x140] sm:$0xff]
        %v5023 = vld [vmem:[#allocation11 + $0x148] sm:$0xff]
        %v5024 = vld [vmem:[#allocation11 + $0x150] sm:$0xff]
        %v5025 = vld [vmem:[#allocation11 + $0x158] sm:$0xff]
        %v5026 = vld [vmem:[#allocation11 + $0x160] sm:$0xff]
        %v5027 = vld [vmem:[#allocation11 + $0x168] sm:$0xff]
        %v5028 = vld [vmem:[#allocation11 + $0x170] sm:$0xff]
        %v5029 = vld [vmem:[#allocation11 + $0x178] sm:$0xff]
        %v5030 = vld [vmem:[#allocation11 + $0x180] sm:$0xff]
        %v5031 = vld [vmem:[#allocation11 + $0x188] sm:$0xff]
        %v5032 = vld [vmem:[#allocation11 + $0x190] sm:$0xff]
        %v5033 = vld [vmem:[#allocation11 + $0x198] sm:$0xff]
        %v5034 = vld [vmem:[#allocation11 + $0x1a0] sm:$0xff]
        %v5035 = vld [vmem:[#allocation11 + $0x1a8] sm:$0xff]
        %v5036 = vld [vmem:[#allocation11 + $0x1b0] sm:$0xff]
        %v5037 = vld [vmem:[#allocation11 + $0x1b8] sm:$0xff]
        %v5038 = vld [vmem:[#allocation11 + $0x1c0] sm:$0xff]
        %v5039 = vld [vmem:[#allocation11 + $0x1c8] sm:$0xff]
        %v5040 = vld [vmem:[#allocation11 + $0x1d0] sm:$0xff]
        %v5041 = vld [vmem:[#allocation11 + $0x1d8] sm:$0xff]
        %v5042 = vld [vmem:[#allocation11 + $0x1e0] sm:$0xff]
        %v5043 = vld [vmem:[#allocation11 + $0x1e8] sm:$0xff]
        %v5044 = vld [vmem:[#allocation11 + $0x1f0] sm:$0xff]
        %v5045 = vld [vmem:[#allocation11 + $0x1f8] sm:$0xff]
        %v5046 = vld [vmem:[#allocation11 + $0x200] sm:$0xff]
        %v5047 = vld [vmem:[#allocation11 + $0x208] sm:$0xff]
        %v5048 = vld [vmem:[#allocation11 + $0x210] sm:$0xff]
        %v5049 = vld [vmem:[#allocation11 + $0x218] sm:$0xff]
        %v5050 = vld [vmem:[#allocation11 + $0x220] sm:$0xff]
        %v5051 = vld [vmem:[#allocation11 + $0x228] sm:$0xff]
        %v5052 = vld [vmem:[#allocation11 + $0x230] sm:$0xff]
        %v5053 = vld [vmem:[#allocation11 + $0x238] sm:$0xff]
        %v5054 = vld [vmem:[#allocation11 + $0x240] sm:$0xff]
        %v5055 = vld [vmem:[#allocation11 + $0x248] sm:$0xff]
        %v5056 = vld [vmem:[#allocation11 + $0x250] sm:$0xff]
        %v5057 = vld [vmem:[#allocation11 + $0x258] sm:$0xff]
        %v5058 = vld [vmem:[#allocation11 + $0x260] sm:$0xff]
        %v5059 = vld [vmem:[#allocation11 + $0x268] sm:$0xff]
        %v5060 = vld [vmem:[#allocation11 + $0x270] sm:$0xff]
        %v5061 = vld [vmem:[#allocation11 + $0x278] sm:$0xff]
        %v5062 = vld [vmem:[#allocation11 + $0x280] sm:$0xff]
        %v5063 = vld [vmem:[#allocation11 + $0x288] sm:$0xff]
        %v5064 = vld [vmem:[#allocation11 + $0x290] sm:$0xff]
        %v5065 = vld [vmem:[#allocation11 + $0x298] sm:$0xff]
        %v5066 = vld [vmem:[#allocation11 + $0x2a0] sm:$0xff]
        %v5067 = vld [vmem:[#allocation11 + $0x2a8] sm:$0xff]
        %v5068 = vld [vmem:[#allocation11 + $0x2b0] sm:$0xff]
        %v5069 = vld [vmem:[#allocation11 + $0x2b8] sm:$0xff]
        %v5070 = vld [vmem:[#allocation11 + $0x2c0] sm:$0xff]
        %v5071 = vld [vmem:[#allocation11 + $0x2c8] sm:$0xff]
        %v5072 = vld [vmem:[#allocation11 + $0x2d0] sm:$0xff]
        %v5073 = vld [vmem:[#allocation11 + $0x2d8] sm:$0xff]
        %v5074 = vld [vmem:[#allocation11 + $0x2e0] sm:$0xff]
        %v5075 = vld [vmem:[#allocation11 + $0x2e8] sm:$0xff]
        %v5076 = vld [vmem:[#allocation11 + $0x2f0] sm:$0xff]
        %v5077 = vld [vmem:[#allocation11 + $0x2f8] sm:$0xff]
        %v5078 = vld [vmem:[#allocation11 + $0x300] sm:$0xff]
        %v5079 = vld [vmem:[#allocation11 + $0x308] sm:$0xff]
        %v5080 = vld [vmem:[#allocation11 + $0x310] sm:$0xff]
        %v5081 = vld [vmem:[#allocation11 + $0x318] sm:$0xff]
        %v5082 = vld [vmem:[#allocation11 + $0x320] sm:$0xff]
        %v5083 = vld [vmem:[#allocation11 + $0x328] sm:$0xff]
        %v5084 = vld [vmem:[#allocation11 + $0x330] sm:$0xff]
        %v5085 = vld [vmem:[#allocation11 + $0x338] sm:$0xff]
        %v5086 = vld [vmem:[#allocation11 + $0x340] sm:$0xff]
        %v5087 = vld [vmem:[#allocation11 + $0x348] sm:$0xff]
        %v5088 = vld [vmem:[#allocation11 + $0x350] sm:$0xff]
        %v5089 = vld [vmem:[#allocation11 + $0x358] sm:$0xff]
        %v5090 = vld [vmem:[#allocation11 + $0x360] sm:$0xff]
        %v5091 = vld [vmem:[#allocation11 + $0x368] sm:$0xff]
        %v5092 = vld [vmem:[#allocation11 + $0x370] sm:$0xff]
        %v5093 = vld [vmem:[#allocation11 + $0x378] sm:$0xff]
        %v5094 = vld [vmem:[#allocation11 + $0x380] sm:$0xff]
        %v5095 = vld [vmem:[#allocation11 + $0x388] sm:$0xff]
        %v5096 = vld [vmem:[#allocation11 + $0x390] sm:$0xff]
        %v5097 = vld [vmem:[#allocation11 + $0x398] sm:$0xff]
        %v5098 = vld [vmem:[#allocation11 + $0x3a0] sm:$0xff]
        %v5099 = vld [vmem:[#allocation11 + $0x3a8] sm:$0xff]
        %v5100 = vld [vmem:[#allocation11 + $0x3b0] sm:$0xff]
        %v5101 = vld [vmem:[#allocation11 + $0x3b8] sm:$0xff]
        %v5102 = vld [vmem:[#allocation11 + $0x3c0] sm:$0xff]
        %v5103 = vld [vmem:[#allocation11 + $0x3c8] sm:$0xff]
        %v5104 = vld [vmem:[#allocation11 + $0x3d0] sm:$0xff]
        %v5105 = vld [vmem:[#allocation11 + $0x3d8] sm:$0xff]
        %v5106 = vld [vmem:[#allocation11 + $0x3e0] sm:$0xff]
        %v5107 = vld [vmem:[#allocation11 + $0x3e8] sm:$0xff]
        %v5108 = vld [vmem:[#allocation11 + $0x3f0] sm:$0xff]
        %v5109 = vld [vmem:[#allocation11 + $0x3f8] sm:$0xff]
        %v5110 = vpack.c.bf16 %v4975, %v4975
        %v5111 = vpack.c.bf16 %v4977, %v4977
        %v5112 = vpack.c.bf16 %v4979, %v4979
        %v5113 = vpack.c.bf16 %v4981, %v4981
        %v5114 = vld [vmem:[#allocation3 + $0x3d] sm:$0xf]
        %v5116 = vlaneseq
        %v5117 = vshrl.u32 %v5116, 7
        %v5118 = vsub.s32 0, %v5117
        %v5119 = vrot.slane %v5114, %v5118
        %v5120 = vlaneseq
        %v5121 = vshrl.u32 %v5120, 7
        %v5122 = vsub.s32 1, %v5121
        %v5123 = vrot.slane %v5114, %v5122
        %v5124 = vlaneseq
        %v5125 = vshrl.u32 %v5124, 7
        %v5126 = vsub.s32 2, %v5125
        %v5127 = vrot.slane %v5114, %v5126
        %v5128 = vlaneseq
        %v5129 = vshrl.u32 %v5128, 7
        %v5130 = vsub.s32 3, %v5129
        %v5131 = vrot.slane %v5114, %v5130
        %v5264 = vunpack.c.l.b16 %v4982
        %v5265 = vunpack.c.h.b16 %v4982
        %v5266 = vunpack.c.l.b16 %v4983
        %v5267 = vunpack.c.h.b16 %v4983
        %v5268 = vunpack.c.l.b16 %v4984
        %v5269 = vunpack.c.h.b16 %v4984
        %v5270 = vunpack.c.l.b16 %v4985
        %v5271 = vunpack.c.h.b16 %v4985
        %v5272 = vunpack.c.l.b16 %v4986
        %v5273 = vunpack.c.h.b16 %v4986
        %v5274 = vunpack.c.l.b16 %v4987
        %v5275 = vunpack.c.h.b16 %v4987
        %v5276 = vunpack.c.l.b16 %v4988
        %v5277 = vunpack.c.h.b16 %v4988
        %v5278 = vunpack.c.l.b16 %v4989
        %v5279 = vunpack.c.h.b16 %v4989
        %v5280 = vunpack.c.l.b16 %v4990
        %v5281 = vunpack.c.h.b16 %v4990
        %v5282 = vunpack.c.l.b16 %v4991
        %v5283 = vunpack.c.h.b16 %v4991
        %v5284 = vunpack.c.l.b16 %v4992
        %v5285 = vunpack.c.h.b16 %v4992
        %v5286 = vunpack.c.l.b16 %v4993
        %v5287 = vunpack.c.h.b16 %v4993
        %v5288 = vunpack.c.l.b16 %v4994
        %v5289 = vunpack.c.h.b16 %v4994
        %v5290 = vunpack.c.l.b16 %v4995
        %v5291 = vunpack.c.h.b16 %v4995
        %v5292 = vunpack.c.l.b16 %v4996
        %v5293 = vunpack.c.h.b16 %v4996
        %v5294 = vunpack.c.l.b16 %v4997
        %v5295 = vunpack.c.h.b16 %v4997
        %v5296 = vunpack.c.l.b16 %v4998
        %v5297 = vunpack.c.h.b16 %v4998
        %v5298 = vunpack.c.l.b16 %v4999
        %v5299 = vunpack.c.h.b16 %v4999
        %v5300 = vunpack.c.l.b16 %v5000
        %v5301 = vunpack.c.h.b16 %v5000
        %v5302 = vunpack.c.l.b16 %v5001
        %v5303 = vunpack.c.h.b16 %v5001
        %v5304 = vunpack.c.l.b16 %v5002
        %v5305 = vunpack.c.h.b16 %v5002
        %v5306 = vunpack.c.l.b16 %v5003
        %v5307 = vunpack.c.h.b16 %v5003
        %v5308 = vunpack.c.l.b16 %v5004
        %v5309 = vunpack.c.h.b16 %v5004
        %v5310 = vunpack.c.l.b16 %v5005
        %v5311 = vunpack.c.h.b16 %v5005
        %v5312 = vunpack.c.l.b16 %v5006
        %v5313 = vunpack.c.h.b16 %v5006
        %v5314 = vunpack.c.l.b16 %v5007
        %v5315 = vunpack.c.h.b16 %v5007
        %v5316 = vunpack.c.l.b16 %v5008
        %v5317 = vunpack.c.h.b16 %v5008
        %v5318 = vunpack.c.l.b16 %v5009
        %v5319 = vunpack.c.h.b16 %v5009
        %v5320 = vunpack.c.l.b16 %v5010
        %v5321 = vunpack.c.h.b16 %v5010
        %v5322 = vunpack.c.l.b16 %v5011
        %v5323 = vunpack.c.h.b16 %v5011
        %v5324 = vunpack.c.l.b16 %v5012
        %v5325 = vunpack.c.h.b16 %v5012
        %v5326 = vunpack.c.l.b16 %v5013
        %v5327 = vunpack.c.h.b16 %v5013
        %v5328 = vunpack.c.l.b16 %v5014
        %v5329 = vunpack.c.h.b16 %v5014
        %v5330 = vunpack.c.l.b16 %v5015
        %v5331 = vunpack.c.h.b16 %v5015
        %v5332 = vunpack.c.l.b16 %v5016
        %v5333 = vunpack.c.h.b16 %v5016
        %v5334 = vunpack.c.l.b16 %v5017
        %v5335 = vunpack.c.h.b16 %v5017
        %v5336 = vunpack.c.l.b16 %v5018
        %v5337 = vunpack.c.h.b16 %v5018
        %v5338 = vunpack.c.l.b16 %v5019
        %v5339 = vunpack.c.h.b16 %v5019
        %v5340 = vunpack.c.l.b16 %v5020
        %v5341 = vunpack.c.h.b16 %v5020
        %v5342 = vunpack.c.l.b16 %v5021
        %v5343 = vunpack.c.h.b16 %v5021
        %v5344 = vunpack.c.l.b16 %v5022
        %v5345 = vunpack.c.h.b16 %v5022
        %v5346 = vunpack.c.l.b16 %v5023
        %v5347 = vunpack.c.h.b16 %v5023
        %v5348 = vunpack.c.l.b16 %v5024
        %v5349 = vunpack.c.h.b16 %v5024
        %v5350 = vunpack.c.l.b16 %v5025
        %v5351 = vunpack.c.h.b16 %v5025
        %v5352 = vunpack.c.l.b16 %v5026
        %v5353 = vunpack.c.h.b16 %v5026
        %v5354 = vunpack.c.l.b16 %v5027
        %v5355 = vunpack.c.h.b16 %v5027
        %v5356 = vunpack.c.l.b16 %v5028
        %v5357 = vunpack.c.h.b16 %v5028
        %v5358 = vunpack.c.l.b16 %v5029
        %v5359 = vunpack.c.h.b16 %v5029
        %v5360 = vunpack.c.l.b16 %v5030
        %v5361 = vunpack.c.h.b16 %v5030
        %v5362 = vunpack.c.l.b16 %v5031
        %v5363 = vunpack.c.h.b16 %v5031
        %v5364 = vunpack.c.l.b16 %v5032
        %v5365 = vunpack.c.h.b16 %v5032
        %v5366 = vunpack.c.l.b16 %v5033
        %v5367 = vunpack.c.h.b16 %v5033
        %v5368 = vunpack.c.l.b16 %v5034
        %v5369 = vunpack.c.h.b16 %v5034
        %v5370 = vunpack.c.l.b16 %v5035
        %v5371 = vunpack.c.h.b16 %v5035
        %v5372 = vunpack.c.l.b16 %v5036
        %v5373 = vunpack.c.h.b16 %v5036
        %v5374 = vunpack.c.l.b16 %v5037
        %v5375 = vunpack.c.h.b16 %v5037
        %v5376 = vunpack.c.l.b16 %v5038
        %v5377 = vunpack.c.h.b16 %v5038
        %v5378 = vunpack.c.l.b16 %v5039
        %v5379 = vunpack.c.h.b16 %v5039
        %v5380 = vunpack.c.l.b16 %v5040
        %v5381 = vunpack.c.h.b16 %v5040
        %v5382 = vunpack.c.l.b16 %v5041
        %v5383 = vunpack.c.h.b16 %v5041
        %v5384 = vunpack.c.l.b16 %v5042
        %v5385 = vunpack.c.h.b16 %v5042
        %v5386 = vunpack.c.l.b16 %v5043
        %v5387 = vunpack.c.h.b16 %v5043
        %v5388 = vunpack.c.l.b16 %v5044
        %v5389 = vunpack.c.h.b16 %v5044
        %v5390 = vunpack.c.l.b16 %v5045
        %v5391 = vunpack.c.h.b16 %v5045
        %v5392 = vunpack.c.l.b16 %v5046
        %v5393 = vunpack.c.h.b16 %v5046
        %v5394 = vunpack.c.l.b16 %v5047
        %v5395 = vunpack.c.h.b16 %v5047
        %v5396 = vunpack.c.l.b16 %v5048
        %v5397 = vunpack.c.h.b16 %v5048
        %v5398 = vunpack.c.l.b16 %v5049
        %v5399 = vunpack.c.h.b16 %v5049
        %v5400 = vunpack.c.l.b16 %v5050
        %v5401 = vunpack.c.h.b16 %v5050
        %v5402 = vunpack.c.l.b16 %v5051
        %v5403 = vunpack.c.h.b16 %v5051
        %v5404 = vunpack.c.l.b16 %v5052
        %v5405 = vunpack.c.h.b16 %v5052
        %v5406 = vunpack.c.l.b16 %v5053
        %v5407 = vunpack.c.h.b16 %v5053
        %v5408 = vunpack.c.l.b16 %v5054
        %v5409 = vunpack.c.h.b16 %v5054
        %v5410 = vunpack.c.l.b16 %v5055
        %v5411 = vunpack.c.h.b16 %v5055
        %v5412 = vunpack.c.l.b16 %v5056
        %v5413 = vunpack.c.h.b16 %v5056
        %v5414 = vunpack.c.l.b16 %v5057
        %v5415 = vunpack.c.h.b16 %v5057
        %v5416 = vunpack.c.l.b16 %v5058
        %v5417 = vunpack.c.h.b16 %v5058
        %v5418 = vunpack.c.l.b16 %v5059
        %v5419 = vunpack.c.h.b16 %v5059
        %v5420 = vunpack.c.l.b16 %v5060
        %v5421 = vunpack.c.h.b16 %v5060
        %v5422 = vunpack.c.l.b16 %v5061
        %v5423 = vunpack.c.h.b16 %v5061
        %v5424 = vunpack.c.l.b16 %v5062
        %v5425 = vunpack.c.h.b16 %v5062
        %v5426 = vunpack.c.l.b16 %v5063
        %v5427 = vunpack.c.h.b16 %v5063
        %v5428 = vunpack.c.l.b16 %v5064
        %v5429 = vunpack.c.h.b16 %v5064
        %v5430 = vunpack.c.l.b16 %v5065
        %v5431 = vunpack.c.h.b16 %v5065
        %v5432 = vunpack.c.l.b16 %v5066
        %v5433 = vunpack.c.h.b16 %v5066
        %v5434 = vunpack.c.l.b16 %v5067
        %v5435 = vunpack.c.h.b16 %v5067
        %v5436 = vunpack.c.l.b16 %v5068
        %v5437 = vunpack.c.h.b16 %v5068
        %v5438 = vunpack.c.l.b16 %v5069
        %v5439 = vunpack.c.h.b16 %v5069
        %v5440 = vunpack.c.l.b16 %v5070
        %v5441 = vunpack.c.h.b16 %v5070
        %v5442 = vunpack.c.l.b16 %v5071
        %v5443 = vunpack.c.h.b16 %v5071
        %v5444 = vunpack.c.l.b16 %v5072
        %v5445 = vunpack.c.h.b16 %v5072
        %v5446 = vunpack.c.l.b16 %v5073
        %v5447 = vunpack.c.h.b16 %v5073
        %v5448 = vunpack.c.l.b16 %v5074
        %v5449 = vunpack.c.h.b16 %v5074
        %v5450 = vunpack.c.l.b16 %v5075
        %v5451 = vunpack.c.h.b16 %v5075
        %v5452 = vunpack.c.l.b16 %v5076
        %v5453 = vunpack.c.h.b16 %v5076
        %v5454 = vunpack.c.l.b16 %v5077
        %v5455 = vunpack.c.h.b16 %v5077
        %v5456 = vunpack.c.l.b16 %v5078
        %v5457 = vunpack.c.h.b16 %v5078
        %v5458 = vunpack.c.l.b16 %v5079
        %v5459 = vunpack.c.h.b16 %v5079
        %v5460 = vunpack.c.l.b16 %v5080
        %v5461 = vunpack.c.h.b16 %v5080
        %v5462 = vunpack.c.l.b16 %v5081
        %v5463 = vunpack.c.h.b16 %v5081
        %v5464 = vunpack.c.l.b16 %v5082
        %v5465 = vunpack.c.h.b16 %v5082
        %v5466 = vunpack.c.l.b16 %v5083
        %v5467 = vunpack.c.h.b16 %v5083
        %v5468 = vunpack.c.l.b16 %v5084
        %v5469 = vunpack.c.h.b16 %v5084
        %v5470 = vunpack.c.l.b16 %v5085
        %v5471 = vunpack.c.h.b16 %v5085
        %v5472 = vunpack.c.l.b16 %v5086
        %v5473 = vunpack.c.h.b16 %v5086
        %v5474 = vunpack.c.l.b16 %v5087
        %v5475 = vunpack.c.h.b16 %v5087
        %v5476 = vunpack.c.l.b16 %v5088
        %v5477 = vunpack.c.h.b16 %v5088
        %v5478 = vunpack.c.l.b16 %v5089
        %v5479 = vunpack.c.h.b16 %v5089
        %v5480 = vunpack.c.l.b16 %v5090
        %v5481 = vunpack.c.h.b16 %v5090
        %v5482 = vunpack.c.l.b16 %v5091
        %v5483 = vunpack.c.h.b16 %v5091
        %v5484 = vunpack.c.l.b16 %v5092
        %v5485 = vunpack.c.h.b16 %v5092
        %v5486 = vunpack.c.l.b16 %v5093
        %v5487 = vunpack.c.h.b16 %v5093
        %v5488 = vunpack.c.l.b16 %v5094
        %v5489 = vunpack.c.h.b16 %v5094
        %v5490 = vunpack.c.l.b16 %v5095
        %v5491 = vunpack.c.h.b16 %v5095
        %v5492 = vunpack.c.l.b16 %v5096
        %v5493 = vunpack.c.h.b16 %v5096
        %v5494 = vunpack.c.l.b16 %v5097
        %v5495 = vunpack.c.h.b16 %v5097
        %v5496 = vunpack.c.l.b16 %v5098
        %v5497 = vunpack.c.h.b16 %v5098
        %v5498 = vunpack.c.l.b16 %v5099
        %v5499 = vunpack.c.h.b16 %v5099
        %v5500 = vunpack.c.l.b16 %v5100
        %v5501 = vunpack.c.h.b16 %v5100
        %v5502 = vunpack.c.l.b16 %v5101
        %v5503 = vunpack.c.h.b16 %v5101
        %v5504 = vunpack.c.l.b16 %v5102
        %v5505 = vunpack.c.h.b16 %v5102
        %v5506 = vunpack.c.l.b16 %v5103
        %v5507 = vunpack.c.h.b16 %v5103
        %v5508 = vunpack.c.l.b16 %v5104
        %v5509 = vunpack.c.h.b16 %v5104
        %v5510 = vunpack.c.l.b16 %v5105
        %v5511 = vunpack.c.h.b16 %v5105
        %v5512 = vunpack.c.l.b16 %v5106
        %v5513 = vunpack.c.h.b16 %v5106
        %v5514 = vunpack.c.l.b16 %v5107
        %v5515 = vunpack.c.h.b16 %v5107
        %v5516 = vunpack.c.l.b16 %v5108
        %v5517 = vunpack.c.h.b16 %v5108
        %v5518 = vunpack.c.l.b16 %v5109
        %v5519 = vunpack.c.h.b16 %v5109
        %v5520 = vpack.c.b16 %v5268, %v5264
        %v5521 = vpack.c.b16 %v5269, %v5265
        %v5522 = vpack.c.b16 %v5270, %v5266
        %v5523 = vpack.c.b16 %v5271, %v5267
        %v5524 = vpack.c.b16 %v5276, %v5272
        %v5525 = vpack.c.b16 %v5277, %v5273
        %v5526 = vpack.c.b16 %v5278, %v5274
        %v5527 = vpack.c.b16 %v5279, %v5275
        %v5528 = vpack.c.b16 %v5284, %v5280
        %v5529 = vpack.c.b16 %v5285, %v5281
        %v5530 = vpack.c.b16 %v5286, %v5282
        %v5531 = vpack.c.b16 %v5287, %v5283
        %v5532 = vpack.c.b16 %v5292, %v5288
        %v5533 = vpack.c.b16 %v5293, %v5289
        %v5534 = vpack.c.b16 %v5294, %v5290
        %v5535 = vpack.c.b16 %v5295, %v5291
        %v5536 = vpack.c.b16 %v5300, %v5296
        %v5537 = vpack.c.b16 %v5301, %v5297
        %v5538 = vpack.c.b16 %v5302, %v5298
        %v5539 = vpack.c.b16 %v5303, %v5299
        %v5540 = vpack.c.b16 %v5308, %v5304
        %v5541 = vpack.c.b16 %v5309, %v5305
        %v5542 = vpack.c.b16 %v5310, %v5306
        %v5543 = vpack.c.b16 %v5311, %v5307
        %v5544 = vpack.c.b16 %v5316, %v5312
        %v5545 = vpack.c.b16 %v5317, %v5313
        %v5546 = vpack.c.b16 %v5318, %v5314
        %v5547 = vpack.c.b16 %v5319, %v5315
        %v5548 = vpack.c.b16 %v5324, %v5320
        %v5549 = vpack.c.b16 %v5325, %v5321
        %v5550 = vpack.c.b16 %v5326, %v5322
        %v5551 = vpack.c.b16 %v5327, %v5323
        %v5552 = vpack.c.b16 %v5332, %v5328
        %v5553 = vpack.c.b16 %v5333, %v5329
        %v5554 = vpack.c.b16 %v5334, %v5330
        %v5555 = vpack.c.b16 %v5335, %v5331
        %v5556 = vpack.c.b16 %v5340, %v5336
        %v5557 = vpack.c.b16 %v5341, %v5337
        %v5558 = vpack.c.b16 %v5342, %v5338
        %v5559 = vpack.c.b16 %v5343, %v5339
        %v5560 = vpack.c.b16 %v5348, %v5344
        %v5561 = vpack.c.b16 %v5349, %v5345
        %v5562 = vpack.c.b16 %v5350, %v5346
        %v5563 = vpack.c.b16 %v5351, %v5347
        %v5564 = vpack.c.b16 %v5356, %v5352
        %v5565 = vpack.c.b16 %v5357, %v5353
        %v5566 = vpack.c.b16 %v5358, %v5354
        %v5567 = vpack.c.b16 %v5359, %v5355
        %v5568 = vpack.c.b16 %v5364, %v5360
        %v5569 = vpack.c.b16 %v5365, %v5361
        %v5570 = vpack.c.b16 %v5366, %v5362
        %v5571 = vpack.c.b16 %v5367, %v5363
        %v5572 = vpack.c.b16 %v5372, %v5368
        %v5573 = vpack.c.b16 %v5373, %v5369
        %v5574 = vpack.c.b16 %v5374, %v5370
        %v5575 = vpack.c.b16 %v5375, %v5371
        %v5576 = vpack.c.b16 %v5380, %v5376
        %v5577 = vpack.c.b16 %v5381, %v5377
        %v5578 = vpack.c.b16 %v5382, %v5378
        %v5579 = vpack.c.b16 %v5383, %v5379
        %v5580 = vpack.c.b16 %v5388, %v5384
        %v5581 = vpack.c.b16 %v5389, %v5385
        %v5582 = vpack.c.b16 %v5390, %v5386
        %v5583 = vpack.c.b16 %v5391, %v5387
        %v5584 = vpack.c.b16 %v5396, %v5392
        %v5585 = vpack.c.b16 %v5397, %v5393
        %v5586 = vpack.c.b16 %v5398, %v5394
        %v5587 = vpack.c.b16 %v5399, %v5395
        %v5588 = vpack.c.b16 %v5404, %v5400
        %v5589 = vpack.c.b16 %v5405, %v5401
        %v5590 = vpack.c.b16 %v5406, %v5402
        %v5591 = vpack.c.b16 %v5407, %v5403
        %v5592 = vpack.c.b16 %v5412, %v5408
        %v5593 = vpack.c.b16 %v5413, %v5409
        %v5594 = vpack.c.b16 %v5414, %v5410
        %v5595 = vpack.c.b16 %v5415, %v5411
        %v5596 = vpack.c.b16 %v5420, %v5416
        %v5597 = vpack.c.b16 %v5421, %v5417
        %v5598 = vpack.c.b16 %v5422, %v5418
        %v5599 = vpack.c.b16 %v5423, %v5419
        %v5600 = vpack.c.b16 %v5428, %v5424
        %v5601 = vpack.c.b16 %v5429, %v5425
        %v5602 = vpack.c.b16 %v5430, %v5426
        %v5603 = vpack.c.b16 %v5431, %v5427
        %v5604 = vpack.c.b16 %v5436, %v5432
        %v5605 = vpack.c.b16 %v5437, %v5433
        %v5606 = vpack.c.b16 %v5438, %v5434
        %v5607 = vpack.c.b16 %v5439, %v5435
        %v5608 = vpack.c.b16 %v5444, %v5440
        %v5609 = vpack.c.b16 %v5445, %v5441
        %v5610 = vpack.c.b16 %v5446, %v5442
        %v5611 = vpack.c.b16 %v5447, %v5443
        %v5612 = vpack.c.b16 %v5452, %v5448
        %v5613 = vpack.c.b16 %v5453, %v5449
        %v5614 = vpack.c.b16 %v5454, %v5450
        %v5615 = vpack.c.b16 %v5455, %v5451
        %v5616 = vpack.c.b16 %v5460, %v5456
        %v5617 = vpack.c.b16 %v5461, %v5457
        %v5618 = vpack.c.b16 %v5462, %v5458
        %v5619 = vpack.c.b16 %v5463, %v5459
        %v5620 = vpack.c.b16 %v5468, %v5464
        %v5621 = vpack.c.b16 %v5469, %v5465
        %v5622 = vpack.c.b16 %v5470, %v5466
        %v5623 = vpack.c.b16 %v5471, %v5467
        %v5624 = vpack.c.b16 %v5476, %v5472
        %v5625 = vpack.c.b16 %v5477, %v5473
        %v5626 = vpack.c.b16 %v5478, %v5474
        %v5627 = vpack.c.b16 %v5479, %v5475
        %v5628 = vpack.c.b16 %v5484, %v5480
        %v5629 = vpack.c.b16 %v5485, %v5481
        %v5630 = vpack.c.b16 %v5486, %v5482
        %v5631 = vpack.c.b16 %v5487, %v5483
        %v5632 = vpack.c.b16 %v5492, %v5488
        %v5633 = vpack.c.b16 %v5493, %v5489
        %v5634 = vpack.c.b16 %v5494, %v5490
        %v5635 = vpack.c.b16 %v5495, %v5491
        %v5636 = vpack.c.b16 %v5500, %v5496
        %v5637 = vpack.c.b16 %v5501, %v5497
        %v5638 = vpack.c.b16 %v5502, %v5498
        %v5639 = vpack.c.b16 %v5503, %v5499
        %v5640 = vpack.c.b16 %v5508, %v5504
        %v5641 = vpack.c.b16 %v5509, %v5505
        %v5642 = vpack.c.b16 %v5510, %v5506
        %v5643 = vpack.c.b16 %v5511, %v5507
        %v5644 = vpack.c.b16 %v5516, %v5512
        %v5645 = vpack.c.b16 %v5517, %v5513
        %v5646 = vpack.c.b16 %v5518, %v5514
        %v5647 = vpack.c.b16 %v5519, %v5515
        %5776 = vmatprep.subr.bf16.mxu0 %v5521
        %5777 = vmatpush1.bf16.msra.mxu0 %v5520
        %5778 = vmatprep.subr.bf16.mxu0 %v5525
        %5779 = vmatpush1.bf16.msra.mxu0 %v5524
        %5780 = vmatprep.subr.bf16.mxu0 %v5529
        %5781 = vmatpush1.bf16.msra.mxu0 %v5528
        %5782 = vmatprep.subr.bf16.mxu0 %v5533
        %5783 = vmatpush1.bf16.msra.mxu0 %v5532
        %5784 = vmatprep.subr.bf16.mxu0 %v5537
        %5785 = vmatpush1.bf16.msra.mxu0 %v5536
        %5786 = vmatprep.subr.bf16.mxu0 %v5541
        %5787 = vmatpush1.bf16.msra.mxu0 %v5540
        %5788 = vmatprep.subr.bf16.mxu0 %v5545
        %5789 = vmatpush1.bf16.msra.mxu0 %v5544
        %5790 = vmatprep.subr.bf16.mxu0 %v5549
        %5791 = vmatpush1.bf16.msra.mxu0 %v5548
        %5792 = vmatprep.subr.bf16.mxu0 %v5553
        %5793 = vmatpush1.bf16.msra.mxu0 %v5552
        %5794 = vmatprep.subr.bf16.mxu0 %v5557
        %5795 = vmatpush1.bf16.msra.mxu0 %v5556
        %5796 = vmatprep.subr.bf16.mxu0 %v5561
        %5797 = vmatpush1.bf16.msra.mxu0 %v5560
        %5798 = vmatprep.subr.bf16.mxu0 %v5565
        %5799 = vmatpush1.bf16.msra.mxu0 %v5564
        %5800 = vmatprep.subr.bf16.mxu0 %v5569
        %5801 = vmatpush1.bf16.msra.mxu0 %v5568
        %5802 = vmatprep.subr.bf16.mxu0 %v5573
        %5803 = vmatpush1.bf16.msra.mxu0 %v5572
        %5804 = vmatprep.subr.bf16.mxu0 %v5577
        %5805 = vmatpush1.bf16.msra.mxu0 %v5576
        %5806 = vmatprep.subr.bf16.mxu0 %v5581
        %5807 = vmatpush1.bf16.msra.mxu0 %v5580
        %5808 = vmatprep.mubr.bf16.mxu0 %v5111
        %5809 = vmatmul.mubr.bf16.gmra.mrb[0].mxu0 %v5110
        %v5810 = vpop.f32.mrb[0].mxu0
        %v5811 = vadd.f32 %v5119, %v5810
        %v5812 = vpop.f32.mrb[0].mxu0
        %v5813 = vadd.f32 %v5123, %v5812
        %v5814 = vpop.f32.mrb[0].mxu0
        %v5815 = vpop.f32.mrb[0].mxu0
        %5816 = vdwg.mxu0
        %5817 = vmatprep.subr.bf16.mxu0 %v5585
        %5818 = vmatpush1.bf16.msra.mxu0 %v5584
        %5819 = vmatprep.subr.bf16.mxu0 %v5589
        %5820 = vmatpush1.bf16.msra.mxu0 %v5588
        %5821 = vmatprep.subr.bf16.mxu0 %v5593
        %5822 = vmatpush1.bf16.msra.mxu0 %v5592
        %5823 = vmatprep.subr.bf16.mxu0 %v5597
        %5824 = vmatpush1.bf16.msra.mxu0 %v5596
        %5825 = vmatprep.subr.bf16.mxu0 %v5601
        %5826 = vmatpush1.bf16.msra.mxu0 %v5600
        %5827 = vmatprep.subr.bf16.mxu0 %v5605
        %5828 = vmatpush1.bf16.msra.mxu0 %v5604
        %5829 = vmatprep.subr.bf16.mxu0 %v5609
        %5830 = vmatpush1.bf16.msra.mxu0 %v5608
        %5831 = vmatprep.subr.bf16.mxu0 %v5613
        %5832 = vmatpush1.bf16.msra.mxu0 %v5612
        %5833 = vmatprep.subr.bf16.mxu0 %v5617
        %5834 = vmatpush1.bf16.msra.mxu0 %v5616
        %5835 = vmatprep.subr.bf16.mxu0 %v5621
        %5836 = vmatpush1.bf16.msra.mxu0 %v5620
        %5837 = vmatprep.subr.bf16.mxu0 %v5625
        %5838 = vmatpush1.bf16.msra.mxu0 %v5624
        %5839 = vmatprep.subr.bf16.mxu0 %v5629
        %5840 = vmatpush1.bf16.msra.mxu0 %v5628
        %5841 = vmatprep.subr.bf16.mxu0 %v5633
        %5842 = vmatpush1.bf16.msra.mxu0 %v5632
        %5843 = vmatprep.subr.bf16.mxu0 %v5637
        %5844 = vmatpush1.bf16.msra.mxu0 %v5636
        %5845 = vmatprep.subr.bf16.mxu0 %v5641
        %5846 = vmatpush1.bf16.msra.mxu0 %v5640
        %5847 = vmatprep.subr.bf16.mxu0 %v5645
        %5848 = vmatpush1.bf16.msra.mxu0 %v5644
        %5849 = vmatprep.mubr.bf16.mxu0 %v5113
        %5850 = vmatmul.mubr.bf16.gmra.mrb[0].mxu0 %v5112
        %v5851 = vpop.f32.mrb[0].mxu0
        %v5852 = vadd.f32 %v5811, %v5851
        %v5853 = vpop.f32.mrb[0].mxu0
        %v5854 = vadd.f32 %v5813, %v5853
        %v5855 = vpop.f32.mrb[0].mxu0
        %v5856 = vpop.f32.mrb[0].mxu0
        %5857 = vdwg.mxu0
        %5858 = vmatprep.subr.bf16.mxu0 %v5523
        %5859 = vmatpush1.bf16.msra.mxu0 %v5522
        %5860 = vmatprep.subr.bf16.mxu0 %v5527
        %5861 = vmatpush1.bf16.msra.mxu0 %v5526
        %5862 = vmatprep.subr.bf16.mxu0 %v5531
        %5863 = vmatpush1.bf16.msra.mxu0 %v5530
        %5864 = vmatprep.subr.bf16.mxu0 %v5535
        %5865 = vmatpush1.bf16.msra.mxu0 %v5534
        %5866 = vmatprep.subr.bf16.mxu0 %v5539
        %5867 = vmatpush1.bf16.msra.mxu0 %v5538
        %5868 = vmatprep.subr.bf16.mxu0 %v5543
        %5869 = vmatpush1.bf16.msra.mxu0 %v5542
        %5870 = vmatprep.subr.bf16.mxu0 %v5547
        %5871 = vmatpush1.bf16.msra.mxu0 %v5546
        %5872 = vmatprep.subr.bf16.mxu0 %v5551
        %5873 = vmatpush1.bf16.msra.mxu0 %v5550
        %5874 = vmatprep.subr.bf16.mxu0 %v5555
        %5875 = vmatpush1.bf16.msra.mxu0 %v5554
        %5876 = vmatprep.subr.bf16.mxu0 %v5559
        %5877 = vmatpush1.bf16.msra.mxu0 %v5558
        %5878 = vmatprep.subr.bf16.mxu0 %v5563
        %5879 = vmatpush1.bf16.msra.mxu0 %v5562
        %5880 = vmatprep.subr.bf16.mxu0 %v5567
        %5881 = vmatpush1.bf16.msra.mxu0 %v5566
        %5882 = vmatprep.subr.bf16.mxu0 %v5571
        %5883 = vmatpush1.bf16.msra.mxu0 %v5570
        %5884 = vmatprep.subr.bf16.mxu0 %v5575
        %5885 = vmatpush1.bf16.msra.mxu0 %v5574
        %5886 = vmatprep.subr.bf16.mxu0 %v5579
        %5887 = vmatpush1.bf16.msra.mxu0 %v5578
        %5888 = vmatprep.subr.bf16.mxu0 %v5583
        %5889 = vmatpush1.bf16.msra.mxu0 %v5582
        %5890 = vmatprep.mubr.bf16.mxu0 %v5111
        %5891 = vmatmul.mubr.bf16.gmra.mrb[0].mxu0 %v5110
        %v5892 = vpop.f32.mrb[0].mxu0
        %v5893 = vadd.f32 %v5127, %v5892
        %v5894 = vpop.f32.mrb[0].mxu0
        %v5895 = vadd.f32 %v5131, %v5894
        %v5896 = vpop.f32.mrb[0].mxu0
        %v5897 = vpop.f32.mrb[0].mxu0
        %5898 = vdwg.mxu0
        %5899 = vmatprep.subr.bf16.mxu0 %v5587
        %5900 = vmatpush1.bf16.msra.mxu0 %v5586
        %5901 = vmatprep.subr.bf16.mxu0 %v5591
        %5902 = vmatpush1.bf16.msra.mxu0 %v5590
        %5903 = vmatprep.subr.bf16.mxu0 %v5595
        %5904 = vmatpush1.bf16.msra.mxu0 %v5594
        %5905 = vmatprep.subr.bf16.mxu0 %v5599
        %5906 = vmatpush1.bf16.msra.mxu0 %v5598
        %5907 = vmatprep.subr.bf16.mxu0 %v5603
        %5908 = vmatpush1.bf16.msra.mxu0 %v5602
        %5909 = vmatprep.subr.bf16.mxu0 %v5607
        %5910 = vmatpush1.bf16.msra.mxu0 %v5606
        %5911 = vmatprep.subr.bf16.mxu0 %v5611
        %5912 = vmatpush1.bf16.msra.mxu0 %v5610
        %5913 = vmatprep.subr.bf16.mxu0 %v5615
        %5914 = vmatpush1.bf16.msra.mxu0 %v5614
        %5915 = vmatprep.subr.bf16.mxu0 %v5619
        %5916 = vmatpush1.bf16.msra.mxu0 %v5618
        %5917 = vmatprep.subr.bf16.mxu0 %v5623
        %5918 = vmatpush1.bf16.msra.mxu0 %v5622
        %5919 = vmatprep.subr.bf16.mxu0 %v5627
        %5920 = vmatpush1.bf16.msra.mxu0 %v5626
        %5921 = vmatprep.subr.bf16.mxu0 %v5631
        %5922 = vmatpush1.bf16.msra.mxu0 %v5630
        %5923 = vmatprep.subr.bf16.mxu0 %v5635
        %5924 = vmatpush1.bf16.msra.mxu0 %v5634
        %5925 = vmatprep.subr.bf16.mxu0 %v5639
        %5926 = vmatpush1.bf16.msra.mxu0 %v5638
        %5927 = vmatprep.subr.bf16.mxu0 %v5643
        %5928 = vmatpush1.bf16.msra.mxu0 %v5642
        %5929 = vmatprep.subr.bf16.mxu0 %v5647
        %5930 = vmatpush1.bf16.msra.mxu0 %v5646
        %5931 = vmatprep.mubr.bf16.mxu0 %v5113
        %5932 = vmatmul.mubr.bf16.gmra.mrb[0].mxu0 %v5112
        %v5933 = vpop.f32.mrb[0].mxu0
        %v5934 = vadd.f32 %v5893, %v5933
        %v5935 = vpop.f32.mrb[0].mxu0
        %v5936 = vadd.f32 %v5895, %v5935
        %v5937 = vpop.f32.mrb[0].mxu0
        %v5938 = vpop.f32.mrb[0].mxu0
        %5939 = vdwg.mxu0
        %v5940 = vmax.f32 %v5852, 0.0
        %v5941 = vmax.f32 %v5854, 0.0
        %v5942 = vmax.f32 %v5934, 0.0
        %v5943 = vmax.f32 %v5936, 0.0
        %5944 = vst [vmem:[%s640] sm:$0xff] %v5940
        %5945 = vst [vmem:[%s640 + $0x8] sm:$0xff] %v5941
        %5946 = vst [vmem:[%s640 + $0x10] sm:$0xff] %v5942
        %5947 = vst [vmem:[%s640 + $0x18] sm:$0xff] %v5943
        %vm5948 = vcmask 261120
        %5949 = vst.msk [vmem:[%s644] sm:$0xff] %vm5948, %v2654
        %p5950 = scmp.lt.s32.totalorder %s30, 3
        %s5951 = scalar_select %p5950, %s30, 3
        %s5952 = smul.addr %s5951, 4
        %s5953 = smul.addr %s5952, 8
        %s5954 = scalar_lea.vmem %s13, %s5953
        %p5955 = scmp.lt.s32.totalorder %s30, 3
        %s5956 = scalar_select %p5955, %s30, 3
        %s5957 = smul.addr %s5956, 8
        %s5958 = scalar_lea.vmem %s14, %s5957
        // Predicated region
        $region135: #{forward.1} parent=105 // pred_check
          %p5959 = pneg %p336
        $region136: #{forward.1} parent=105 // pred_check_branch
          %5961 = sbr.rel (%p5959) target = $region138
        $region137: #{forward.1} parent=105 // pred_region
          _
        $region138: #{forward.1} parent=105 // pred_fallthru
          _
        // Predicated region
        $region139: #{forward.1} parent=105 // pred_check
          %p5962 = pneg %p362
        $region140: #{forward.1} parent=105 // pred_check_branch
          %5964 = sbr.rel (%p5962) target = $region142
        $region141: #{forward.1} parent=105 // pred_region
          _
        $region142: #{forward.1} parent=105 // pred_fallthru
          _
      $region106: #{forward.1} parent=5 // pred_fallthru
        _
      %p5965 = scmp.le.s32.totalorder 2, %s25
      // Predicated region
      $region143: #{forward.1} parent=5 // pred_check
        %p5966 = pneg %p5965
      $region144: #{forward.1} parent=5 // pred_check_branch
        %5968 = sbr.rel (%p5966) target = $region146
      $region145: #{forward.1} parent=5 // pred_region
        %s5969 = ssub.s32 %s25, 2
        // Predicated region
        $region147: #{forward.1} parent=145 // pred_check
          %p5970 = pneg %p342
        $region148: #{forward.1} parent=145 // pred_check_branch
          %5972 = sbr.rel (%p5970) target = $region150
        $region149: #{forward.1} parent=145 // pred_region
          %p5973 = scmp.lt.s32.totalorder %s31, 3
          %s5974 = scalar_select %p5973, %s31, 3
          %s5975 = smul.addr %s5974, 4
          %s5976 = smul.addr %s5975, 8
          %s5977 = scalar_lea.vmem %s13, %s5976
        $region150: #{forward.1} parent=145 // pred_fallthru
          _
        // Predicated region
        $region151: #{forward.1} parent=145 // pred_check
          %p5978 = pneg %p368
        $region152: #{forward.1} parent=145 // pred_check_branch
          %5980 = sbr.rel (%p5978) target = $region154
        $region153: #{forward.1} parent=145 // pred_region
          %p5981 = scmp.lt.s32.totalorder %s31, 3
          %s5982 = scalar_select %p5981, %s31, 3
          %s5983 = smul.addr %s5982, 8
          %s5984 = scalar_lea.vmem %s14, %s5983
        $region154: #{forward.1} parent=145 // pred_fallthru
          _
      $region146: #{forward.1} parent=5 // pred_fallthru
        _
    $region6: #{forward.1} parent=1 // loop_footer
      %s29 = sadd.s32 1, %s25
    $region7: #{forward.1} parent=1 // loop_footer_branch
      %24 = sbr.rel target = $region3
    $region8: #{forward.1} parent=1 // loop_exit
      _
    %5985 = vsyncpa [#allocation4], 1
    %s5986 = scalar_lea.sflag [#allocation4], 1
    %5987 = vsyncpa %s5986, 1
    %5988 = vsyncpa [#allocation6], 1
    %5989 = vsyncpa [#allocation9], 1
    %5990 = vsyncpa [#allocation12], 1

</llo_original>
